<compile_context>
chip_gen: v7x
topology: tpu7x:2x2x1
jax: 0.10.0
libtpu: 0.0.40
codegen_flags: <defaults>
</compile_context>

<pallas_src>
import functools
import math

import jax
import jax.numpy as jnp
from jax import lax
from jax.experimental import pallas as pl
from jax.experimental.pallas import tpu as pltpu


def _round_up(x, m):
    return ((x + m - 1) // m) * m


def _tpu_params():
    """Best-effort (wide_mxu, vmem_capacity_bytes) with conservative fallbacks."""
    wide_mxu = False
    vmem_cap = 64 << 20
    try:
        kind = jax.devices()[0].device_kind.lower()
        wide_mxu = ("v6" in kind) or ("v7" in kind) or ("trillium" in kind)
        if ("v4" in kind) or ("v5" in kind) or ("v6" in kind):
            vmem_cap = 128 << 20
        elif "v7" in kind:
            vmem_cap = 64 << 20
    except Exception:
        pass
    try:
        vmem_cap = int(getattr(pltpu.get_tpu_info(), "vmem_capacity_bytes", vmem_cap))
    except Exception:
        pass
    return wide_mxu, vmem_cap


def _pick_row_block(Ho, Wo, Wp, K, TCout, Cin_p, budget_bytes, max_m=2048):
    """Largest divisor TH of Ho with TH*Wo <= max_m whose per-step tiles fit the budget."""
    best = 1
    for th in range(1, Ho + 1):
        if Ho % th:
            continue
        m = th * Wo
        if m > max_m and th > 1:
            continue
        need = (m * K * 2              # im2col scratch (bf16)
                + m * TCout * 4 * 2    # out block (f32), double-buffered
                + m * TCout * 4        # f32 dot accumulator temporary
                + th * Wp * Cin_p * 2 * 3)  # im2col build temporaries (row strip + slices)
        if need <= budget_bytes:
            best = th
    return best


def _conv2d_body(x_ref, w_ref, b_ref, out_ref, col_ref, *, KH, KW, stride, TH):
    # x_ref:   (1, Hp, Wp, Cin_p)  bf16, spatially pre-padded, channel-padded
    # w_ref:   (J, K, TCout)       bf16, resident across the whole grid
    # b_ref:   (1, TCout) f32 or None
    # out_ref: (1, TH, Wo, TCout)  f32
    # col_ref: (TH*Wo, K)          bf16 im2col scratch, persists across grid steps
    _, _, Wo, TCout = out_ref.shape
    Cin = x_ref.shape[3]
    rb = pl.program_id(1)
    j = pl.program_id(2)

    # Build the im2col buffer once per (n, row-block); reuse it for every Cout tile.
    @pl.when(j == 0)
    def _build_col():
        h_len = stride * (TH - 1) + 1
        w_len = stride * (Wo - 1) + 1
        row0 = rb * (TH * stride)
        for kh in range(KH):
            rows = x_ref[0, pl.ds(row0 + kh, h_len), :, :]   # (h_len, Wp, Cin)
            if stride > 1:
                rows = rows[::stride]                        # (TH, Wp, Cin)
            for kw in range(KW):
                patch = rows[:, kw:kw + w_len, :]            # (TH, w_len, Cin)
                if stride > 1:
                    patch = patch[:, ::stride, :]            # (TH, Wo, Cin)
                k = kh * KW + kw
                col_ref[:, k * Cin:(k + 1) * Cin] = (
                    patch.reshape(TH * Wo, Cin).astype(col_ref.dtype))

    # Single deep-K MXU matmul per Cout tile, f32 accumulation.
    acc = jnp.dot(col_ref[...], w_ref[j], preferred_element_type=jnp.float32)
    if b_ref is not None:
        acc = acc + b_ref[...]
    out_ref[0] = acc.reshape(TH, Wo, TCout).astype(out_ref.dtype)


def _conv2d_kernel_nobias(x_ref, w_ref, out_ref, col_ref, *, KH, KW, stride, TH):
    _conv2d_body(x_ref, w_ref, None, out_ref, col_ref, KH=KH, KW=KW, stride=stride, TH=TH)


def _conv2d_kernel_bias(x_ref, w_ref, b_ref, out_ref, col_ref, *, KH, KW, stride, TH):
    _conv2d_body(x_ref, w_ref, b_ref, out_ref, col_ref, KH=KH, KW=KW, stride=stride, TH=TH)


def conv2d_pallas(x_nchw, w_oihw, bias=None, *, stride=1, padding=1):
    """Forward of the PyTorch `Conv` module: y = conv2d(x, w, bias, stride, padding)."""
    N, Cin, H, W = x_nchw.shape
    Cout, _, KH, KW = w_oihw.shape
    Ho = (H + 2 * padding - KH) // stride + 1
    Wo = (W + 2 * padding - KW) // stride + 1

    LANE = 128
    wide_mxu, vmem_cap = _tpu_params()

    Cin_p = _round_up(Cin, LANE)
    # Fill the 256-wide MXU on v6e/v7x; v5e MXUs are 128-wide so TCout=128 is already full.
    TCout = 256 if (wide_mxu and Cout > 128) else 128
    Cout_p = _round_up(Cout, TCout)
    J = Cout_p // TCout
    K = KH * KW * Cin_p

    # NCHW -> NHWC, conv padding + channel padding done once here; bf16 activations.
    x = jnp.transpose(x_nchw, (0, 2, 3, 1)).astype(jnp.bfloat16)
    x = jnp.pad(x, ((0, 0), (padding, padding), (padding, padding), (0, Cin_p - Cin)))
    Hp, Wp = H + 2 * padding, W + 2 * padding

    # OIHW -> HWIO -> (K, Cout_p) -> (J, K, TCout) bf16, kept resident in VMEM.
    w = jnp.transpose(w_oihw, (2, 3, 1, 0)).astype(jnp.float32)
    w = jnp.pad(w, ((0, 0), (0, 0), (0, Cin_p - Cin), (0, Cout_p - Cout)))
    w = w.reshape(K, J, TCout).transpose(1, 0, 2).astype(jnp.bfloat16)

    has_bias = bias is not None
    operands = [x, w]
    in_specs = [
        pl.BlockSpec((1, Hp, Wp, Cin_p), lambda n, rb, j: (n, 0, 0, 0)),  # x (per n)
        pl.BlockSpec((J, K, TCout), lambda n, rb, j: (0, 0, 0)),          # resident weight
    ]
    if has_bias:
        b = jnp.pad(bias.astype(jnp.float32), (0, Cout_p - Cout)).reshape(1, Cout_p)
        operands.append(b)
        in_specs.append(pl.BlockSpec((1, TCout), lambda n, rb, j: (0, j)))

    # Generation-aware VMEM budget and row-block choice (keeps v7x's 64 MiB/TC happy).
    cap = max(min(int(0.9 * vmem_cap), 100 << 20), 32 << 20)
    x_bytes = Hp * Wp * Cin_p * 2 * 2           # bf16, double-buffered
    w_bytes = J * K * TCout * 2 * 2             # bf16, 2 buffers (DMA'd only once)
    budget = max(cap - x_bytes - w_bytes - (8 << 20), 2 << 20)
    TH = _pick_row_block(Ho, Wo, Wp, K, TCout, Cin_p, budget)
    M = TH * Wo

    need = (x_bytes + w_bytes
            + M * TCout * 4 * 2                 # out block (f32), double-buffered
            + M * K * 2                         # im2col scratch (bf16)
            + M * TCout * 4                     # f32 dot accumulator
            + TH * Wp * Cin_p * 2 * 3           # im2col build temporaries
            + (4 << 20))                        # Mosaic internal headroom
    vmem_limit = int(min(max(need, 32 << 20), cap))

    kern = _conv2d_kernel_bias if has_bias else _conv2d_kernel_nobias
    kernel = functools.partial(kern, KH=KH, KW=KW, stride=stride, TH=TH)

    out = pl.pallas_call(
        kernel,
        out_shape=jax.ShapeDtypeStruct((N, Ho, Wo, Cout_p), jnp.float32),
        grid_spec=pltpu.PrefetchScalarGridSpec(
            num_scalar_prefetch=0,
            grid=(N, Ho // TH, J),
            in_specs=in_specs,
            out_specs=pl.BlockSpec((1, TH, Wo, TCout), lambda n, rb, j: (n, rb, 0, j)),
            scratch_shapes=[pltpu.VMEM((M, K), jnp.bfloat16)],   # im2col scratch
        ),
        compiler_params=pltpu.CompilerParams(
            # j must be sequential ("arbitrary"): the im2col scratch built at j == 0 is
            # reused by later Cout tiles.  n / row-block are parallel (v7x megacore).
            dimension_semantics=("parallel", "parallel", "arbitrary"),
            vmem_limit_bytes=vmem_limit),
    )(*operands)

    out = out[:, :, :, :Cout]                   # drop Cout padding
    return jnp.transpose(out, (0, 3, 1, 2))     # back to NCHW


def _conv_ref(x, w, bias, stride, padding, op_dtype):
    y = lax.conv_general_dilated(
        x.astype(op_dtype), w.astype(op_dtype),
        (stride, stride), ((padding, padding), (padding, padding)),
        dimension_numbers=("NCHW", "OIHW", "NCHW"),
        preferred_element_type=jnp.float32)
    if bias is not None:
        y = y + bias.reshape(1, -1, 1, 1).astype(jnp.float32)
    return y


if __name__ == "__main__":
    key = jax.random.PRNGKey(0)
    k1, k2, k3, k4, k5 = jax.random.split(key, 5)

    # Case 1: Conv(in_planes=4, out_planes=8) with module defaults (k=3, s=1, p=1, bias=False).
    N, Cin, Cout, H, W = 2, 4, 8, 16, 16
    x = jax.random.normal(k1, (N, Cin, H, W), jnp.float32)
    w = jax.random.normal(k2, (Cout, Cin, 3, 3), jnp.float32) / math.sqrt(Cin * 9)
    out = jax.block_until_ready(conv2d_pallas(x, w))
    assert out.shape == (N, Cout, H, W), out.shape
    ref_bf16 = _conv_ref(x, w, None, 1, 1, jnp.bfloat16)
    ref_f32 = _conv_ref(x, w, None, 1, 1, jnp.float32)
    assert jnp.allclose(out, ref_bf16, atol=2e-3, rtol=2e-3), \
        f"case1 max abs err vs bf16 ref {float(jnp.max(jnp.abs(out - ref_bf16)))}"
    assert jnp.allclose(out, ref_f32, atol=6e-2, rtol=6e-2), \
        f"case1 max abs err vs f32 ref {float(jnp.max(jnp.abs(out - ref_f32)))}"

    # Case 1b: same shapes with bias=True (exercises the bias operand path).
    bias = jax.random.normal(k5, (Cout,), jnp.float32)
    out_b = jax.block_until_ready(conv2d_pallas(x, w, bias=bias))
    ref_b = _conv_ref(x, w, bias, 1, 1, jnp.bfloat16)
    assert jnp.allclose(out_b, ref_b, atol=2e-3, rtol=2e-3), \
        f"case1b max abs err vs bf16 ref {float(jnp.max(jnp.abs(out_b - ref_b)))}"

    # Case 2: larger spatial / channel case exercising row-blocking, multiple Cout tiles
    # and channel padding (still small enough to run quickly).
    N2, Cin2, Cout2, H2, W2 = 1, 16, 320, 48, 48
    x2 = jax.random.normal(k3, (N2, Cin2, H2, W2), jnp.float32)
    w2 = jax.random.normal(k4, (Cout2, Cin2, 3, 3), jnp.float32) / math.sqrt(Cin2 * 9)
    out2 = jax.block_until_ready(conv2d_pallas(x2, w2))
    assert out2.shape == (N2, Cout2, H2, W2), out2.shape
    ref2 = _conv_ref(x2, w2, None, 1, 1, jnp.bfloat16)
    assert jnp.allclose(out2, ref2, atol=3e-3, rtol=3e-3), \
        f"case2 max abs err vs bf16 ref {float(jnp.max(jnp.abs(out2 - ref2)))}"

    print("KERNEL_OK")
</pallas_src>

<mosaic_0001>
module attributes {stable_mosaic.version = 11 : i64} {
  func.func @_conv2d_kernel_nobias(%arg0: i32, %arg1: i32, %arg2: i32, %arg3: memref<1x18x18x128xbf16, #tpu.memory_space<vmem>>, %arg4: memref<1x1152x128xbf16, #tpu.memory_space<vmem>>, %arg5: memref<1x16x16x128xf32, #tpu.memory_space<vmem>>, %arg6: memref<256x1152xbf16, #tpu.memory_space<vmem>>) attributes {dimension_semantics = [#tpu.dimension_semantics<parallel>, #tpu.dimension_semantics<parallel>, #tpu.dimension_semantics<arbitrary>], iteration_bounds = array<i64: 2, 1, 1>, scalar_prefetch = 0 : i64, scratch_operands = 1 : i64, tpu.core_type = #tpu.core_type<tc>, window_params = [{transform_indices = @transform_0, window_bounds = array<i64: 1, 18, 18, 128>}, {pipeline_mode = #tpu.pipeline_mode<synchronous>, transform_indices = @transform_1, window_bounds = array<i64: 1, 1152, 128>}, {transform_indices = @transform_2, window_bounds = array<i64: 1, 16, 16, 128>}]} {
    %c0_i32 = arith.constant 0 : i32
    %0 = arith.cmpi eq, %arg2, %c0_i32 : i32
    %1 = arith.extui %0 : i1 to i32
    %c0_i32_0 = arith.constant 0 : i32
    %2 = arith.cmpi ne, %1, %c0_i32_0 : i32
    scf.if %2 {
      %c16_i32 = arith.constant 16 : i32
      %12 = arith.muli %arg1, %c16_i32 : i32
      %c0_i32_8 = arith.constant 0 : i32
      %13 = arith.addi %12, %c0_i32_8 : i32
      %c0_9 = arith.constant 0 : index
      %14 = arith.index_cast %13 : i32 to index
      %c0_10 = arith.constant 0 : index
      %c0_11 = arith.constant 0 : index
      %15 = vector.load %arg3[%c0_9, %14, %c0_10, %c0_11] : memref<1x18x18x128xbf16, #tpu.memory_space<vmem>>, vector<1x16x18x128xbf16>
      %16 = vector.shape_cast %15 : vector<1x16x18x128xbf16> to vector<16x18x128xbf16>
      %17 = vector.extract_strided_slice %16 {offsets = [0, 0, 0], sizes = [16, 16, 128], strides = [1, 1, 1]} : vector<16x18x128xbf16> to vector<16x16x128xbf16>
      %18 = vector.shape_cast %17 : vector<16x16x128xbf16> to vector<256x128xbf16>
      %c0_12 = arith.constant 0 : index
      %c0_13 = arith.constant 0 : index
      %19 = vector.load %arg6[%c0_12, %c0_13] : memref<256x1152xbf16, #tpu.memory_space<vmem>>, vector<256x128xbf16>
      tpu.vector_store %arg6[%c0_12, %c0_13], %18 {strides = array<i32>} : memref<256x1152xbf16, #tpu.memory_space<vmem>>, vector<256x128xbf16>,
      %20 = vector.extract_strided_slice %16 {offsets = [0, 1, 0], sizes = [16, 16, 128], strides = [1, 1, 1]} : vector<16x18x128xbf16> to vector<16x16x128xbf16>
      %21 = vector.shape_cast %20 : vector<16x16x128xbf16> to vector<256x128xbf16>
      %c0_14 = arith.constant 0 : index
      %c128 = arith.constant 128 : index
      %22 = vector.load %arg6[%c0_14, %c128] : memref<256x1152xbf16, #tpu.memory_space<vmem>>, vector<256x128xbf16>
      tpu.vector_store %arg6[%c0_14, %c128], %21 {strides = array<i32>} : memref<256x1152xbf16, #tpu.memory_space<vmem>>, vector<256x128xbf16>,
      %23 = vector.extract_strided_slice %16 {offsets = [0, 2, 0], sizes = [16, 16, 128], strides = [1, 1, 1]} : vector<16x18x128xbf16> to vector<16x16x128xbf16>
      %24 = vector.shape_cast %23 : vector<16x16x128xbf16> to vector<256x128xbf16>
      %c0_15 = arith.constant 0 : index
      %c256 = arith.constant 256 : index
      %25 = vector.load %arg6[%c0_15, %c256] : memref<256x1152xbf16, #tpu.memory_space<vmem>>, vector<256x128xbf16>
      tpu.vector_store %arg6[%c0_15, %c256], %24 {strides = array<i32>} : memref<256x1152xbf16, #tpu.memory_space<vmem>>, vector<256x128xbf16>,
      %c1_i32 = arith.constant 1 : i32
      %26 = arith.addi %12, %c1_i32 : i32
      %c0_16 = arith.constant 0 : index
      %27 = arith.index_cast %26 : i32 to index
      %c0_17 = arith.constant 0 : index
      %c0_18 = arith.constant 0 : index
      %28 = vector.load %arg3[%c0_16, %27, %c0_17, %c0_18] : memref<1x18x18x128xbf16, #tpu.memory_space<vmem>>, vector<1x16x18x128xbf16>
      %29 = vector.shape_cast %28 : vector<1x16x18x128xbf16> to vector<16x18x128xbf16>
      %30 = vector.extract_strided_slice %29 {offsets = [0, 0, 0], sizes = [16, 16, 128], strides = [1, 1, 1]} : vector<16x18x128xbf16> to vector<16x16x128xbf16>
      %31 = vector.shape_cast %30 : vector<16x16x128xbf16> to vector<256x128xbf16>
      %c0_19 = arith.constant 0 : index
      %c384 = arith.constant 384 : index
      %32 = vector.load %arg6[%c0_19, %c384] : memref<256x1152xbf16, #tpu.memory_space<vmem>>, vector<256x128xbf16>
      tpu.vector_store %arg6[%c0_19, %c384], %31 {strides = array<i32>} : memref<256x1152xbf16, #tpu.memory_space<vmem>>, vector<256x128xbf16>,
      %33 = vector.extract_strided_slice %29 {offsets = [0, 1, 0], sizes = [16, 16, 128], strides = [1, 1, 1]} : vector<16x18x128xbf16> to vector<16x16x128xbf16>
      %34 = vector.shape_cast %33 : vector<16x16x128xbf16> to vector<256x128xbf16>
      %c0_20 = arith.constant 0 : index
      %c512 = arith.constant 512 : index
      %35 = vector.load %arg6[%c0_20, %c512] : memref<256x1152xbf16, #tpu.memory_space<vmem>>, vector<256x128xbf16>
      tpu.vector_store %arg6[%c0_20, %c512], %34 {strides = array<i32>} : memref<256x1152xbf16, #tpu.memory_space<vmem>>, vector<256x128xbf16>,
      %36 = vector.extract_strided_slice %29 {offsets = [0, 2, 0], sizes = [16, 16, 128], strides = [1, 1, 1]} : vector<16x18x128xbf16> to vector<16x16x128xbf16>
      %37 = vector.shape_cast %36 : vector<16x16x128xbf16> to vector<256x128xbf16>
      %c0_21 = arith.constant 0 : index
      %c640 = arith.constant 640 : index
      %38 = vector.load %arg6[%c0_21, %c640] : memref<256x1152xbf16, #tpu.memory_space<vmem>>, vector<256x128xbf16>
      tpu.vector_store %arg6[%c0_21, %c640], %37 {strides = array<i32>} : memref<256x1152xbf16, #tpu.memory_space<vmem>>, vector<256x128xbf16>,
      %c2_i32 = arith.constant 2 : i32
      %39 = arith.addi %12, %c2_i32 : i32
      %c0_22 = arith.constant 0 : index
      %40 = arith.index_cast %39 : i32 to index
      %c0_23 = arith.constant 0 : index
      %c0_24 = arith.constant 0 : index
      %41 = vector.load %arg3[%c0_22, %40, %c0_23, %c0_24] : memref<1x18x18x128xbf16, #tpu.memory_space<vmem>>, vector<1x16x18x128xbf16>
      %42 = vector.shape_cast %41 : vector<1x16x18x128xbf16> to vector<16x18x128xbf16>
      %43 = vector.extract_strided_slice %42 {offsets = [0, 0, 0], sizes = [16, 16, 128], strides = [1, 1, 1]} : vector<16x18x128xbf16> to vector<16x16x128xbf16>
      %44 = vector.shape_cast %43 : vector<16x16x128xbf16> to vector<256x128xbf16>
      %c0_25 = arith.constant 0 : index
      %c768 = arith.constant 768 : index
      %45 = vector.load %arg6[%c0_25, %c768] : memref<256x1152xbf16, #tpu.memory_space<vmem>>, vector<256x128xbf16>
      tpu.vector_store %arg6[%c0_25, %c768], %44 {strides = array<i32>} : memref<256x1152xbf16, #tpu.memory_space<vmem>>, vector<256x128xbf16>,
      %46 = vector.extract_strided_slice %42 {offsets = [0, 1, 0], sizes = [16, 16, 128], strides = [1, 1, 1]} : vector<16x18x128xbf16> to vector<16x16x128xbf16>
      %47 = vector.shape_cast %46 : vector<16x16x128xbf16> to vector<256x128xbf16>
      %c0_26 = arith.constant 0 : index
      %c896 = arith.constant 896 : index
      %48 = vector.load %arg6[%c0_26, %c896] : memref<256x1152xbf16, #tpu.memory_space<vmem>>, vector<256x128xbf16>
      tpu.vector_store %arg6[%c0_26, %c896], %47 {strides = array<i32>} : memref<256x1152xbf16, #tpu.memory_space<vmem>>, vector<256x128xbf16>,
      %49 = vector.extract_strided_slice %42 {offsets = [0, 2, 0], sizes = [16, 16, 128], strides = [1, 1, 1]} : vector<16x18x128xbf16> to vector<16x16x128xbf16>
      %50 = vector.shape_cast %49 : vector<16x16x128xbf16> to vector<256x128xbf16>
      %c0_27 = arith.constant 0 : index
      %c1024 = arith.constant 1024 : index
      %51 = vector.load %arg6[%c0_27, %c1024] : memref<256x1152xbf16, #tpu.memory_space<vmem>>, vector<256x128xbf16>
      tpu.vector_store %arg6[%c0_27, %c1024], %50 {strides = array<i32>} : memref<256x1152xbf16, #tpu.memory_space<vmem>>, vector<256x128xbf16>,
    } else {
    }
    %c0 = arith.constant 0 : index
    %c0_1 = arith.constant 0 : index
    %3 = vector.load %arg6[%c0, %c0_1] : memref<256x1152xbf16, #tpu.memory_space<vmem>>, vector<256x1152xbf16>
    %4 = arith.index_cast %arg2 : i32 to index
    %c0_2 = arith.constant 0 : index
    %c0_3 = arith.constant 0 : index
    %5 = vector.load %arg4[%4, %c0_2, %c0_3] : memref<1x1152x128xbf16, #tpu.memory_space<vmem>>, vector<1x1152x128xbf16>
    %6 = vector.shape_cast %5 : vector<1x1152x128xbf16> to vector<1152x128xbf16>
    %cst = arith.constant dense<0.000000e+00> : vector<256x128xf32>
    %7 = tpu.matmul %3, %6, %cst {dimension_numbers = #tpu.dot_dimension_numbers<[1], [0], [0], [1], [0, 0, 1, 1], [], []>} : vector<256x1152xbf16>, vector<1152x128xbf16>, vector<256x128xf32> -> vector<256x128xf32>
    %8 = vector.shape_cast %7 : vector<256x128xf32> to vector<16x16x128xf32>
    %c0_4 = arith.constant 0 : index
    %c0_5 = arith.constant 0 : index
    %c0_6 = arith.constant 0 : index
    %c0_7 = arith.constant 0 : index
    %9 = vector.load %arg5[%c0_4, %c0_5, %c0_6, %c0_7] : memref<1x16x16x128xf32, #tpu.memory_space<vmem>>, vector<1x16x16x128xf32>
    %10 = vector.shape_cast %9 : vector<1x16x16x128xf32> to vector<16x16x128xf32>
    %11 = vector.shape_cast %8 : vector<16x16x128xf32> to vector<1x16x16x128xf32>
    tpu.vector_store %arg5[%c0_4, %c0_5, %c0_6, %c0_7], %11 {strides = array<i32>} : memref<1x16x16x128xf32, #tpu.memory_space<vmem>>, vector<1x16x16x128xf32>,
    return
  }
  func.func @transform_0(%arg0: i32, %arg1: i32, %arg2: i32) -> (i32, i32, i32, i32) {
    %c0_i32 = arith.constant 0 : i32
    %c0_i32_0 = arith.constant 0 : i32
    %c0_i32_1 = arith.constant 0 : i32
    %c0_i32_2 = arith.constant 0 : i32
    return %arg0, %c0_i32, %c0_i32_0, %c0_i32_1 : i32, i32, i32, i32
  }
  func.func @transform_1(%arg0: i32, %arg1: i32, %arg2: i32) -> (i32, i32, i32) {
    %c0_i32 = arith.constant 0 : i32
    %c0_i32_0 = arith.constant 0 : i32
    %c0_i32_1 = arith.constant 0 : i32
    %c0_i32_2 = arith.constant 0 : i32
    return %c0_i32, %c0_i32_0, %c0_i32_1 : i32, i32, i32
  }
  func.func @transform_2(%arg0: i32, %arg1: i32, %arg2: i32) -> (i32, i32, i32, i32) {
    %c0_i32 = arith.constant 0 : i32
    %c0_i32_0 = arith.constant 0 : i32
    return %arg0, %arg1, %c0_i32, %arg2 : i32, i32, i32, i32
  }
}

</mosaic_0001>

<llo_original>
// kernel: tpu_custom_call.1
$region0: #{tpu_custom_call.1}
  #allocation0 [shape = 'u32[]', space=smem, size = 0x4, offset = 0x4, fixed_abs, tag = 'smem constant byte address 0x4 - core index']
  #allocation1 [shape = 'u32[144,128]{1,0:T(1,128)}', space=vmem, size = 0x12000, scoped, tag = 'internal scratch']
  #allocation2 [shape = 'bf16[256,1152]{1,0:T(16,128)(2,1)}', space=vmem, size = 0x90000, scoped, tag = 'scratch operand']
  %s0 = inlined_call_operand.vmem [shape: bf16[2,18,18,128], index: 0, kind: input, shape index: {}]
  %s1 = inlined_call_operand.vmem [shape: bf16[1,1152,128], index: 1, kind: input, shape index: {}]
  %s2 = inlined_call_operand.hbm [shape: f32[2,16,16,128], index: 2, kind: output, shape index: {}]
  %s3 = sld [smem:[#allocation0]]
  $region45: #{tpu_custom_call.1} parent=0
    _
  %s5 = ssub.s32 1, %s3
  %s6 = scalar_select 0, %s5, %s3
  $region1: #{tpu_custom_call.1} parent=0
    #allocation3 [shape = 'u8[262144]{0}', space=vmem, size = 0x40000, scoped, tag = 'output window, operand 0']
    #allocation4 [shape = 's32[2]{0}', space=sflag, size = 0x8, scoped, tag = 'scoped memory for tpu_custom_call.1']
    %7 = vsyncpa [#allocation4], 0
    %s8 = scalar_lea.sflag [#allocation4], 1
    %9 = vsyncpa %s8, 0
    loop: start=0, step=1, limit=4
    $region2: #{tpu_custom_call.1} parent=1 // loop_pre_header
      _
    $region3: #{tpu_custom_call.1} parent=1 // loop_header
      %s11 = sphi 0, %s15
      %p12 = scmp.ge.s32.totalorder %s11, 4
      %s18 = sphi 0, %s37
      %s19 = sphi 0, %s33
      %s20 = sphi 0, %s29
      %s21 = sphi 0, %s18
      %s22 = sphi 0, %s19
      %s23 = sphi 0, %s20
      %s24 = sphi 0, %s21
      %s25 = sphi 0, %s22
      %s26 = sphi 0, %s23
      %s40 = sphi 0, %s42
      %s43 = sphi 0, %s40
      %s44 = sphi 0, %s43
      %s60 = sphi 0, %s44
      %s64 = sphi 0, %s64
      %s66 = sphi 0, %s64
      %s67 = sphi 0, %s66
      %s81 = sphi 0, %s67
      %s91 = sphi 0, %s93
      %s94 = sphi 0, %s91
      %s95 = sphi 0, %s94
      %s111 = sphi 0, %s95
    $region4: #{tpu_custom_call.1} parent=1 // loop_header_branch
      %14 = sbr.rel (%p12) target = $region8
    $region5: #{tpu_custom_call.1} parent=1 // loop_body
      %s16 = ssub.s32 %s11, 1
      %s17 = ssub.s32 %s11, 2
      %s27 = sadd.s32 1, %s20
      %p28 = scmp.ge.s32.totalorder %s27, 1
      %s29 = scalar_select %p28, 0, %s27
      %s30 = sadd.s32 1, %s19
      %s31 = scalar_select %p28, %s30, %s19
      %p32 = scmp.ge.s32.totalorder %s31, 1
      %s33 = scalar_select %p32, 0, %s31
      %s34 = sadd.s32 1, %s18
      %s35 = scalar_select %p32, %s34, %s18
      %p36 = scmp.ge.s32.totalorder %s35, 2
      %s37 = scalar_select %p36, 0, %s35
      %s38 = ssub.s32 %s18, %s37
      %p39 = scmp.eq.s32.totalorder %s38, 0
      %s41 = sadd.s32 %s40, 1
      %s42 = scalar_select %p39, %s40, %s41
      %p45 = pneg %p39
      %p46 = scmp.eq.s32.totalorder %s11, 1
      %p47 = por %p45, %p46
      %p48 = scmp.ne.s32.totalorder %s40, %s43
      %p49 = scmp.eq.s32.totalorder %s11, 0
      %p50 = por %p48, %p49
      %p51 = scmp.ne.s32.totalorder %s40, %s43
      %p52 = scmp.eq.s32.totalorder %s16, 1
      %p53 = por %p51, %p52
      %p54 = scmp.ne.s32.totalorder %s43, %s44
      %p55 = scmp.eq.s32.totalorder %s16, 0
      %p56 = por %p54, %p55
      %p57 = scmp.ne.s32.totalorder %s43, %s44
      %p58 = scmp.eq.s32.totalorder %s17, 1
      %p59 = por %p57, %p58
      %p61 = scmp.ne.s32.totalorder %s44, %s60
      %p62 = scmp.eq.s32.totalorder %s17, 0
      %p63 = por %p61, %p62
      %s65 = sadd.s32 %s64, 1
      %p68 = scmp.eq.s32.totalorder %s11, 1
      %p69 = scmp.ne.s32.totalorder %s64, %s66
      %p70 = scmp.eq.s32.totalorder %s11, 0
      %p71 = por %p69, %p70
      %p72 = scmp.ne.s32.totalorder %s64, %s66
      %p73 = scmp.eq.s32.totalorder %s16, 1
      %p74 = por %p72, %p73
      %p75 = scmp.ne.s32.totalorder %s66, %s67
      %p76 = scmp.eq.s32.totalorder %s16, 0
      %p77 = por %p75, %p76
      %p78 = scmp.ne.s32.totalorder %s66, %s67
      %p79 = scmp.eq.s32.totalorder %s17, 1
      %p80 = por %p78, %p79
      %p82 = scmp.ne.s32.totalorder %s67, %s81
      %p83 = scmp.eq.s32.totalorder %s17, 0
      %p84 = por %p82, %p83
      %s85 = ssub.s32 %s18, %s37
      %s86 = ssub.s32 %s19, %s33
      %s87 = sor.u32 %s85, %s86
      %s88 = ssub.s32 %s20, %s29
      %s89 = sor.u32 %s87, %s88
      %p90 = scmp.eq.s32.totalorder %s89, 0
      %s92 = sadd.s32 %s91, 1
      %s93 = scalar_select %p90, %s91, %s92
      %p96 = pneg %p90
      %p97 = scmp.eq.s32.totalorder %s11, 1
      %p98 = por %p96, %p97
      %p99 = scmp.ne.s32.totalorder %s91, %s94
      %p100 = scmp.eq.s32.totalorder %s11, 0
      %p101 = por %p99, %p100
      %p102 = scmp.ne.s32.totalorder %s91, %s94
      %p103 = scmp.eq.s32.totalorder %s16, 1
      %p104 = por %p102, %p103
      %p105 = scmp.ne.s32.totalorder %s94, %s95
      %p106 = scmp.eq.s32.totalorder %s16, 0
      %p107 = por %p105, %p106
      %p108 = scmp.ne.s32.totalorder %s94, %s95
      %p109 = scmp.eq.s32.totalorder %s17, 1
      %p110 = por %p108, %p109
      %p112 = scmp.ne.s32.totalorder %s95, %s111
      %p113 = scmp.eq.s32.totalorder %s17, 0
      %p114 = por %p112, %p113
      %p115 = scmp.le.s32.totalorder 1, %s11
      %p116 = scmp.lt.s32.totalorder %s11, 3
      %p117 = pnand %p115, %p116
      %p118 = pneg %p117
      // Predicated region
      $region9: #{tpu_custom_call.1} parent=5 // pred_check
        _
      $region10: #{tpu_custom_call.1} parent=5 // pred_check_branch
        %120 = sbr.rel (%p117) target = $region12
      $region11: #{tpu_custom_call.1} parent=5 // pred_region
        %s121 = ssub.s32 %s11, 1
        // Predicated region
        $region13: #{tpu_custom_call.1} parent=11 // pred_check
          %p122 = pneg %p77
        $region14: #{tpu_custom_call.1} parent=11 // pred_check_branch
          %124 = sbr.rel (%p122) target = $region16
        $region15: #{tpu_custom_call.1} parent=11 // pred_region
          _
        $region16: #{tpu_custom_call.1} parent=11 // pred_fallthru
          _
      $region12: #{tpu_custom_call.1} parent=5 // pred_fallthru
        _
      %p125 = scmp.lt.s32.totalorder %s11, 2
      // Predicated region
      $region17: #{tpu_custom_call.1} parent=5 // pred_check
        %p126 = pneg %p125
      $region18: #{tpu_custom_call.1} parent=5 // pred_check_branch
        %128 = sbr.rel (%p126) target = $region20
      $region19: #{tpu_custom_call.1} parent=5 // pred_region
        // Predicated region
        $region21: #{tpu_custom_call.1} parent=19 // pred_check
          %p129 = pneg %p50
        $region22: #{tpu_custom_call.1} parent=19 // pred_check_branch
          %131 = sbr.rel (%p129) target = $region24
        $region23: #{tpu_custom_call.1} parent=19 // pred_region
          %p132 = scmp.lt.s32.totalorder %s18, 1
          %s133 = scalar_select %p132, %s18, 1
          %s134 = smul.addr %s133, 54
          %s135 = smul.addr %s134, 4
          %s136 = scalar_lea.vmem %s0, %s135
        $region24: #{tpu_custom_call.1} parent=19 // pred_fallthru
          _
      $region20: #{tpu_custom_call.1} parent=5 // pred_fallthru
        _
      %p137 = scmp.le.s32.totalorder 1, %s11
      %p138 = scmp.lt.s32.totalorder %s11, 3
      %p139 = pnand %p137, %p138
      %p140 = pneg %p139
      // Predicated region
      $region25: #{tpu_custom_call.1} parent=5 // pred_check
        _
      $region26: #{tpu_custom_call.1} parent=5 // pred_check_branch
        %142 = sbr.rel (%p139) target = $region28
      $region27: #{tpu_custom_call.1} parent=5 // pred_region
        %s143 = ssub.s32 %s11, 1
        %p144 = scmp.lt.s32.totalorder %s21, 1
        %s145 = scalar_select %p144, %s21, 1
        %s146 = smul.addr %s145, 54
        %s147 = smul.addr %s146, 4
        %s148 = scalar_lea.vmem %s0, %s147
        %p149 = pneg %p56
        %p150 = pneg %p53
        %p151 = pneg %p77
        %p152 = pneg %p74
        %p153 = pneg %p107
        %p154 = pneg %p104
        %s155 = sand.u32 %s94, 1
        %s156 = scalar_lea.sflag [#allocation4], %s155
        %s157 = sand.u32 %s94, 1
        %s158 = smul.addr %s157, 256
        %s159 = scalar_lea.vmem [#allocation3], %s158
        %p160 = scmp.lt.s32.totalorder %s21, 1
        %s161 = scalar_select %p160, %s21, 1
        %s162 = smul.addr %s161, 54
        %s163 = smul.addr %s162, 4
        %s164 = scalar_lea.vmem %s0, %s163
        %s165 = smul.u32 16, %s22
        %p167 = scmp.eq.s32.totalorder %s23, 0
        // Predicated region
        $region29: #{tpu_custom_call.1} parent=27 // pred_check
          %p168 = pneg %p167
        $region30: #{tpu_custom_call.1} parent=27 // pred_check_branch
          %170 = sbr.rel (%p168) target = $region32
        $region31: #{tpu_custom_call.1} parent=27 // pred_region
          %s171 = smul.u32 %s22, 16
          %s172 = smul.u32 %s171, 3
          %s173 = smul.addr %s172, 4
          %s174 = scalar_lea.vmem %s164, %s173
          %v175 = vld [vmem:[%s174] sm:$0xf]
          %v176 = vld [vmem:[%s174 + $0x4] sm:$0xf]
          %v177 = vld [vmem:[%s174 + $0x8] sm:$0x1]
          %v178 = vld [vmem:[%s174 + $0xc] sm:$0xf]
          %v179 = vld [vmem:[%s174 + $0x10] sm:$0xf]
          %v180 = vld [vmem:[%s174 + $0x14] sm:$0x1]
          %v181 = vld [vmem:[%s174 + $0x18] sm:$0xf]
          %v182 = vld [vmem:[%s174 + $0x1c] sm:$0xf]
          %v183 = vld [vmem:[%s174 + $0x20] sm:$0x1]
          %v184 = vld [vmem:[%s174 + $0x24] sm:$0xf]
          %v185 = vld [vmem:[%s174 + $0x28] sm:$0xf]
          %v186 = vld [vmem:[%s174 + $0x2c] sm:$0x1]
          %v187 = vld [vmem:[%s174 + $0x30] sm:$0xf]
          %v188 = vld [vmem:[%s174 + $0x34] sm:$0xf]
          %v189 = vld [vmem:[%s174 + $0x38] sm:$0x1]
          %v190 = vld [vmem:[%s174 + $0x3c] sm:$0xf]
          %v191 = vld [vmem:[%s174 + $0x40] sm:$0xf]
          %v192 = vld [vmem:[%s174 + $0x44] sm:$0x1]
          %v193 = vld [vmem:[%s174 + $0x48] sm:$0xf]
          %v194 = vld [vmem:[%s174 + $0x4c] sm:$0xf]
          %v195 = vld [vmem:[%s174 + $0x50] sm:$0x1]
          %v196 = vld [vmem:[%s174 + $0x54] sm:$0xf]
          %v197 = vld [vmem:[%s174 + $0x58] sm:$0xf]
          %v198 = vld [vmem:[%s174 + $0x5c] sm:$0x1]
          %v199 = vld [vmem:[%s174 + $0x60] sm:$0xf]
          %v200 = vld [vmem:[%s174 + $0x64] sm:$0xf]
          %v201 = vld [vmem:[%s174 + $0x68] sm:$0x1]
          %v202 = vld [vmem:[%s174 + $0x6c] sm:$0xf]
          %v203 = vld [vmem:[%s174 + $0x70] sm:$0xf]
          %v204 = vld [vmem:[%s174 + $0x74] sm:$0x1]
          %v205 = vld [vmem:[%s174 + $0x78] sm:$0xf]
          %v206 = vld [vmem:[%s174 + $0x7c] sm:$0xf]
          %v207 = vld [vmem:[%s174 + $0x80] sm:$0x1]
          %v208 = vld [vmem:[%s174 + $0x84] sm:$0xf]
          %v209 = vld [vmem:[%s174 + $0x88] sm:$0xf]
          %v210 = vld [vmem:[%s174 + $0x8c] sm:$0x1]
          %v211 = vld [vmem:[%s174 + $0x90] sm:$0xf]
          %v212 = vld [vmem:[%s174 + $0x94] sm:$0xf]
          %v213 = vld [vmem:[%s174 + $0x98] sm:$0x1]
          %v214 = vld [vmem:[%s174 + $0x9c] sm:$0xf]
          %v215 = vld [vmem:[%s174 + $0xa0] sm:$0xf]
          %v216 = vld [vmem:[%s174 + $0xa4] sm:$0x1]
          %v217 = vld [vmem:[%s174 + $0xa8] sm:$0xf]
          %v218 = vld [vmem:[%s174 + $0xac] sm:$0xf]
          %v219 = vld [vmem:[%s174 + $0xb0] sm:$0x1]
          %v220 = vld [vmem:[%s174 + $0xb4] sm:$0xf]
          %v221 = vld [vmem:[%s174 + $0xb8] sm:$0xf]
          %v222 = vld [vmem:[%s174 + $0xbc] sm:$0x1]
          %v255 = vunpack.c.l.b16 %v175
          %v256 = vunpack.c.l.b16 %v176
          %v257 = vunpack.c.l.b16 %v178
          %v258 = vunpack.c.l.b16 %v179
          %v259 = vunpack.c.l.b16 %v181
          %v260 = vunpack.c.l.b16 %v182
          %v261 = vunpack.c.l.b16 %v184
          %v262 = vunpack.c.l.b16 %v185
          %v263 = vunpack.c.l.b16 %v187
          %v264 = vunpack.c.l.b16 %v188
          %v265 = vunpack.c.l.b16 %v190
          %v266 = vunpack.c.l.b16 %v191
          %v267 = vunpack.c.l.b16 %v193
          %v268 = vunpack.c.l.b16 %v194
          %v269 = vunpack.c.l.b16 %v196
          %v270 = vunpack.c.l.b16 %v197
          %v271 = vunpack.c.l.b16 %v199
          %v272 = vunpack.c.l.b16 %v200
          %v273 = vunpack.c.l.b16 %v202
          %v274 = vunpack.c.l.b16 %v203
          %v275 = vunpack.c.l.b16 %v205
          %v276 = vunpack.c.l.b16 %v206
          %v277 = vunpack.c.l.b16 %v208
          %v278 = vunpack.c.l.b16 %v209
          %v279 = vunpack.c.l.b16 %v211
          %v280 = vunpack.c.l.b16 %v212
          %v281 = vunpack.c.l.b16 %v214
          %v282 = vunpack.c.l.b16 %v215
          %v283 = vunpack.c.l.b16 %v217
          %v284 = vunpack.c.l.b16 %v218
          %v285 = vunpack.c.l.b16 %v220
          %v286 = vunpack.c.l.b16 %v221
          %v287 = vpack.c.b16 %v256, %v255
          %v288 = vpack.c.b16 %v258, %v257
          %v289 = vpack.c.b16 %v260, %v259
          %v290 = vpack.c.b16 %v262, %v261
          %v291 = vpack.c.b16 %v264, %v263
          %v292 = vpack.c.b16 %v266, %v265
          %v293 = vpack.c.b16 %v268, %v267
          %v294 = vpack.c.b16 %v270, %v269
          %v295 = vpack.c.b16 %v272, %v271
          %v296 = vpack.c.b16 %v274, %v273
          %v297 = vpack.c.b16 %v276, %v275
          %v298 = vpack.c.b16 %v278, %v277
          %v299 = vpack.c.b16 %v280, %v279
          %v300 = vpack.c.b16 %v282, %v281
          %v301 = vpack.c.b16 %v284, %v283
          %v302 = vpack.c.b16 %v286, %v285
          %319 = vst [vmem:[#allocation2] sm:$0xff] %v287
          %320 = vst [vmem:[#allocation2 + $0x48] sm:$0xff] %v288
          %321 = vst [vmem:[#allocation2 + $0x90] sm:$0xff] %v289
          %322 = vst [vmem:[#allocation2 + $0xd8] sm:$0xff] %v290
          %323 = vst [vmem:[#allocation2 + $0x120] sm:$0xff] %v291
          %324 = vst [vmem:[#allocation2 + $0x168] sm:$0xff] %v292
          %325 = vst [vmem:[#allocation2 + $0x1b0] sm:$0xff] %v293
          %326 = vst [vmem:[#allocation2 + $0x1f8] sm:$0xff] %v294
          %327 = vst [vmem:[#allocation2 + $0x240] sm:$0xff] %v295
          %328 = vst [vmem:[#allocation2 + $0x288] sm:$0xff] %v296
          %329 = vst [vmem:[#allocation2 + $0x2d0] sm:$0xff] %v297
          %330 = vst [vmem:[#allocation2 + $0x318] sm:$0xff] %v298
          %331 = vst [vmem:[#allocation2 + $0x360] sm:$0xff] %v299
          %332 = vst [vmem:[#allocation2 + $0x3a8] sm:$0xff] %v300
          %333 = vst [vmem:[#allocation2 + $0x3f0] sm:$0xff] %v301
          %334 = vst [vmem:[#allocation2 + $0x438] sm:$0xff] %v302
          %vm335 = vsmask.f32 3328
          %vm336 = vsmask.f32 7440
          %vm337 = vmor %vm335, %vm336
          %v339 = vshrl.u32 %v175, 16
          %v341 = vrot.slane %v339, 4
          %v342 = vshll.u32 %v175, 16
          %v344 = vrot.slane %v342, 5
          %v345 = vor.u32 %v341, %v344
          %v346 = vrot.slane %v345, 4
          %v348 = vshll.u32 %v176, 16
          %v350 = vrot.slane %v348, 5
          %v351 = vsel %vm337, %v346, %v350
          %v352 = vshrl.u32 %v176, 16
          %v354 = vrot.slane %v352, 4
          %v355 = vor.u32 %v354, %v350
          %v356 = vrot.slane %v355, 4
          %v358 = vshll.u32 %v177, 16
          %v360 = vrot.slane %v358, 5
          %v361 = vsel %vm337, %v356, %v360
          %v363 = vshrl.u32 %v178, 16
          %v365 = vrot.slane %v363, 4
          %v366 = vshll.u32 %v178, 16
          %v368 = vrot.slane %v366, 5
          %v369 = vor.u32 %v365, %v368
          %v370 = vrot.slane %v369, 4
          %v372 = vshll.u32 %v179, 16
          %v374 = vrot.slane %v372, 5
          %v375 = vsel %vm337, %v370, %v374
          %v376 = vshrl.u32 %v179, 16
          %v378 = vrot.slane %v376, 4
          %v379 = vor.u32 %v378, %v374
          %v380 = vrot.slane %v379, 4
          %v382 = vshll.u32 %v180, 16
          %v384 = vrot.slane %v382, 5
          %v385 = vsel %vm337, %v380, %v384
          %v387 = vshrl.u32 %v181, 16
          %v389 = vrot.slane %v387, 4
          %v390 = vshll.u32 %v181, 16
          %v392 = vrot.slane %v390, 5
          %v393 = vor.u32 %v389, %v392
          %v394 = vrot.slane %v393, 4
          %v396 = vshll.u32 %v182, 16
          %v398 = vrot.slane %v396, 5
          %v399 = vsel %vm337, %v394, %v398
          %v400 = vshrl.u32 %v182, 16
          %v402 = vrot.slane %v400, 4
          %v403 = vor.u32 %v402, %v398
          %v404 = vrot.slane %v403, 4
          %v406 = vshll.u32 %v183, 16
          %v408 = vrot.slane %v406, 5
          %v409 = vsel %vm337, %v404, %v408
          %v411 = vshrl.u32 %v184, 16
          %v413 = vrot.slane %v411, 4
          %v414 = vshll.u32 %v184, 16
          %v416 = vrot.slane %v414, 5
          %v417 = vor.u32 %v413, %v416
          %v418 = vrot.slane %v417, 4
          %v420 = vshll.u32 %v185, 16
          %v422 = vrot.slane %v420, 5
          %v423 = vsel %vm337, %v418, %v422
          %v424 = vshrl.u32 %v185, 16
          %v426 = vrot.slane %v424, 4
          %v427 = vor.u32 %v426, %v422
          %v428 = vrot.slane %v427, 4
          %v430 = vshll.u32 %v186, 16
          %v432 = vrot.slane %v430, 5
          %v433 = vsel %vm337, %v428, %v432
          %v435 = vshrl.u32 %v187, 16
          %v437 = vrot.slane %v435, 4
          %v438 = vshll.u32 %v187, 16
          %v440 = vrot.slane %v438, 5
          %v441 = vor.u32 %v437, %v440
          %v442 = vrot.slane %v441, 4
          %v444 = vshll.u32 %v188, 16
          %v446 = vrot.slane %v444, 5
          %v447 = vsel %vm337, %v442, %v446
          %v448 = vshrl.u32 %v188, 16
          %v450 = vrot.slane %v448, 4
          %v451 = vor.u32 %v450, %v446
          %v452 = vrot.slane %v451, 4
          %v454 = vshll.u32 %v189, 16
          %v456 = vrot.slane %v454, 5
          %v457 = vsel %vm337, %v452, %v456
          %v459 = vshrl.u32 %v190, 16
          %v461 = vrot.slane %v459, 4
          %v462 = vshll.u32 %v190, 16
          %v464 = vrot.slane %v462, 5
          %v465 = vor.u32 %v461, %v464
          %v466 = vrot.slane %v465, 4
          %v468 = vshll.u32 %v191, 16
          %v470 = vrot.slane %v468, 5
          %v471 = vsel %vm337, %v466, %v470
          %v472 = vshrl.u32 %v191, 16
          %v474 = vrot.slane %v472, 4
          %v475 = vor.u32 %v474, %v470
          %v476 = vrot.slane %v475, 4
          %v478 = vshll.u32 %v192, 16
          %v480 = vrot.slane %v478, 5
          %v481 = vsel %vm337, %v476, %v480
          %v483 = vshrl.u32 %v193, 16
          %v485 = vrot.slane %v483, 4
          %v486 = vshll.u32 %v193, 16
          %v488 = vrot.slane %v486, 5
          %v489 = vor.u32 %v485, %v488
          %v490 = vrot.slane %v489, 4
          %v492 = vshll.u32 %v194, 16
          %v494 = vrot.slane %v492, 5
          %v495 = vsel %vm337, %v490, %v494
          %v496 = vshrl.u32 %v194, 16
          %v498 = vrot.slane %v496, 4
          %v499 = vor.u32 %v498, %v494
          %v500 = vrot.slane %v499, 4
          %v502 = vshll.u32 %v195, 16
          %v504 = vrot.slane %v502, 5
          %v505 = vsel %vm337, %v500, %v504
          %v507 = vshrl.u32 %v196, 16
          %v509 = vrot.slane %v507, 4
          %v510 = vshll.u32 %v196, 16
          %v512 = vrot.slane %v510, 5
          %v513 = vor.u32 %v509, %v512
          %v514 = vrot.slane %v513, 4
          %v516 = vshll.u32 %v197, 16
          %v518 = vrot.slane %v516, 5
          %v519 = vsel %vm337, %v514, %v518
          %v520 = vshrl.u32 %v197, 16
          %v522 = vrot.slane %v520, 4
          %v523 = vor.u32 %v522, %v518
          %v524 = vrot.slane %v523, 4
          %v526 = vshll.u32 %v198, 16
          %v528 = vrot.slane %v526, 5
          %v529 = vsel %vm337, %v524, %v528
          %v531 = vshrl.u32 %v199, 16
          %v533 = vrot.slane %v531, 4
          %v534 = vshll.u32 %v199, 16
          %v536 = vrot.slane %v534, 5
          %v537 = vor.u32 %v533, %v536
          %v538 = vrot.slane %v537, 4
          %v540 = vshll.u32 %v200, 16
          %v542 = vrot.slane %v540, 5
          %v543 = vsel %vm337, %v538, %v542
          %v544 = vshrl.u32 %v200, 16
          %v546 = vrot.slane %v544, 4
          %v547 = vor.u32 %v546, %v542
          %v548 = vrot.slane %v547, 4
          %v550 = vshll.u32 %v201, 16
          %v552 = vrot.slane %v550, 5
          %v553 = vsel %vm337, %v548, %v552
          %v555 = vshrl.u32 %v202, 16
          %v557 = vrot.slane %v555, 4
          %v558 = vshll.u32 %v202, 16
          %v560 = vrot.slane %v558, 5
          %v561 = vor.u32 %v557, %v560
          %v562 = vrot.slane %v561, 4
          %v564 = vshll.u32 %v203, 16
          %v566 = vrot.slane %v564, 5
          %v567 = vsel %vm337, %v562, %v566
          %v568 = vshrl.u32 %v203, 16
          %v570 = vrot.slane %v568, 4
          %v571 = vor.u32 %v570, %v566
          %v572 = vrot.slane %v571, 4
          %v574 = vshll.u32 %v204, 16
          %v576 = vrot.slane %v574, 5
          %v577 = vsel %vm337, %v572, %v576
          %v579 = vshrl.u32 %v205, 16
          %v581 = vrot.slane %v579, 4
          %v582 = vshll.u32 %v205, 16
          %v584 = vrot.slane %v582, 5
          %v585 = vor.u32 %v581, %v584
          %v586 = vrot.slane %v585, 4
          %v588 = vshll.u32 %v206, 16
          %v590 = vrot.slane %v588, 5
          %v591 = vsel %vm337, %v586, %v590
          %v592 = vshrl.u32 %v206, 16
          %v594 = vrot.slane %v592, 4
          %v595 = vor.u32 %v594, %v590
          %v596 = vrot.slane %v595, 4
          %v598 = vshll.u32 %v207, 16
          %v600 = vrot.slane %v598, 5
          %v601 = vsel %vm337, %v596, %v600
          %v603 = vshrl.u32 %v208, 16
          %v605 = vrot.slane %v603, 4
          %v606 = vshll.u32 %v208, 16
          %v608 = vrot.slane %v606, 5
          %v609 = vor.u32 %v605, %v608
          %v610 = vrot.slane %v609, 4
          %v612 = vshll.u32 %v209, 16
          %v614 = vrot.slane %v612, 5
          %v615 = vsel %vm337, %v610, %v614
          %v616 = vshrl.u32 %v209, 16
          %v618 = vrot.slane %v616, 4
          %v619 = vor.u32 %v618, %v614
          %v620 = vrot.slane %v619, 4
          %v622 = vshll.u32 %v210, 16
          %v624 = vrot.slane %v622, 5
          %v625 = vsel %vm337, %v620, %v624
          %v627 = vshrl.u32 %v211, 16
          %v629 = vrot.slane %v627, 4
          %v630 = vshll.u32 %v211, 16
          %v632 = vrot.slane %v630, 5
          %v633 = vor.u32 %v629, %v632
          %v634 = vrot.slane %v633, 4
          %v636 = vshll.u32 %v212, 16
          %v638 = vrot.slane %v636, 5
          %v639 = vsel %vm337, %v634, %v638
          %v640 = vshrl.u32 %v212, 16
          %v642 = vrot.slane %v640, 4
          %v643 = vor.u32 %v642, %v638
          %v644 = vrot.slane %v643, 4
          %v646 = vshll.u32 %v213, 16
          %v648 = vrot.slane %v646, 5
          %v649 = vsel %vm337, %v644, %v648
          %v651 = vshrl.u32 %v214, 16
          %v653 = vrot.slane %v651, 4
          %v654 = vshll.u32 %v214, 16
          %v656 = vrot.slane %v654, 5
          %v657 = vor.u32 %v653, %v656
          %v658 = vrot.slane %v657, 4
          %v660 = vshll.u32 %v215, 16
          %v662 = vrot.slane %v660, 5
          %v663 = vsel %vm337, %v658, %v662
          %v664 = vshrl.u32 %v215, 16
          %v666 = vrot.slane %v664, 4
          %v667 = vor.u32 %v666, %v662
          %v668 = vrot.slane %v667, 4
          %v670 = vshll.u32 %v216, 16
          %v672 = vrot.slane %v670, 5
          %v673 = vsel %vm337, %v668, %v672
          %v675 = vshrl.u32 %v217, 16
          %v677 = vrot.slane %v675, 4
          %v678 = vshll.u32 %v217, 16
          %v680 = vrot.slane %v678, 5
          %v681 = vor.u32 %v677, %v680
          %v682 = vrot.slane %v681, 4
          %v684 = vshll.u32 %v218, 16
          %v686 = vrot.slane %v684, 5
          %v687 = vsel %vm337, %v682, %v686
          %v688 = vshrl.u32 %v218, 16
          %v690 = vrot.slane %v688, 4
          %v691 = vor.u32 %v690, %v686
          %v692 = vrot.slane %v691, 4
          %v694 = vshll.u32 %v219, 16
          %v696 = vrot.slane %v694, 5
          %v697 = vsel %vm337, %v692, %v696
          %v699 = vshrl.u32 %v220, 16
          %v701 = vrot.slane %v699, 4
          %v702 = vshll.u32 %v220, 16
          %v704 = vrot.slane %v702, 5
          %v705 = vor.u32 %v701, %v704
          %v706 = vrot.slane %v705, 4
          %v708 = vshll.u32 %v221, 16
          %v710 = vrot.slane %v708, 5
          %v711 = vsel %vm337, %v706, %v710
          %v712 = vshrl.u32 %v221, 16
          %v714 = vrot.slane %v712, 4
          %v715 = vor.u32 %v714, %v710
          %v716 = vrot.slane %v715, 4
          %v718 = vshll.u32 %v222, 16
          %v720 = vrot.slane %v718, 5
          %v721 = vsel %vm337, %v716, %v720
          %v722 = vunpack.c.l.b16 %v351
          %v723 = vunpack.c.l.b16 %v361
          %v724 = vunpack.c.l.b16 %v375
          %v725 = vunpack.c.l.b16 %v385
          %v726 = vunpack.c.l.b16 %v399
          %v727 = vunpack.c.l.b16 %v409
          %v728 = vunpack.c.l.b16 %v423
          %v729 = vunpack.c.l.b16 %v433
          %v730 = vunpack.c.l.b16 %v447
          %v731 = vunpack.c.l.b16 %v457
          %v732 = vunpack.c.l.b16 %v471
          %v733 = vunpack.c.l.b16 %v481
          %v734 = vunpack.c.l.b16 %v495
          %v735 = vunpack.c.l.b16 %v505
          %v736 = vunpack.c.l.b16 %v519
          %v737 = vunpack.c.l.b16 %v529
          %v738 = vunpack.c.l.b16 %v543
          %v739 = vunpack.c.l.b16 %v553
          %v740 = vunpack.c.l.b16 %v567
          %v741 = vunpack.c.l.b16 %v577
          %v742 = vunpack.c.l.b16 %v591
          %v743 = vunpack.c.l.b16 %v601
          %v744 = vunpack.c.l.b16 %v615
          %v745 = vunpack.c.l.b16 %v625
          %v746 = vunpack.c.l.b16 %v639
          %v747 = vunpack.c.l.b16 %v649
          %v748 = vunpack.c.l.b16 %v663
          %v749 = vunpack.c.l.b16 %v673
          %v750 = vunpack.c.l.b16 %v687
          %v751 = vunpack.c.l.b16 %v697
          %v752 = vunpack.c.l.b16 %v711
          %v753 = vunpack.c.l.b16 %v721
          %v754 = vpack.c.b16 %v723, %v722
          %v755 = vpack.c.b16 %v725, %v724
          %v756 = vpack.c.b16 %v727, %v726
          %v757 = vpack.c.b16 %v729, %v728
          %v758 = vpack.c.b16 %v731, %v730
          %v759 = vpack.c.b16 %v733, %v732
          %v760 = vpack.c.b16 %v735, %v734
          %v761 = vpack.c.b16 %v737, %v736
          %v762 = vpack.c.b16 %v739, %v738
          %v763 = vpack.c.b16 %v741, %v740
          %v764 = vpack.c.b16 %v743, %v742
          %v765 = vpack.c.b16 %v745, %v744
          %v766 = vpack.c.b16 %v747, %v746
          %v767 = vpack.c.b16 %v749, %v748
          %v768 = vpack.c.b16 %v751, %v750
          %v769 = vpack.c.b16 %v753, %v752
          %786 = vst [vmem:[#allocation2 + $0x8] sm:$0xff] %v754
          %787 = vst [vmem:[#allocation2 + $0x50] sm:$0xff] %v755
          %788 = vst [vmem:[#allocation2 + $0x98] sm:$0xff] %v756
          %789 = vst [vmem:[#allocation2 + $0xe0] sm:$0xff] %v757
          %790 = vst [vmem:[#allocation2 + $0x128] sm:$0xff] %v758
          %791 = vst [vmem:[#allocation2 + $0x170] sm:$0xff] %v759
          %792 = vst [vmem:[#allocation2 + $0x1b8] sm:$0xff] %v760
          %793 = vst [vmem:[#allocation2 + $0x200] sm:$0xff] %v761
          %794 = vst [vmem:[#allocation2 + $0x248] sm:$0xff] %v762
          %795 = vst [vmem:[#allocation2 + $0x290] sm:$0xff] %v763
          %796 = vst [vmem:[#allocation2 + $0x2d8] sm:$0xff] %v764
          %797 = vst [vmem:[#allocation2 + $0x320] sm:$0xff] %v765
          %798 = vst [vmem:[#allocation2 + $0x368] sm:$0xff] %v766
          %799 = vst [vmem:[#allocation2 + $0x3b0] sm:$0xff] %v767
          %800 = vst [vmem:[#allocation2 + $0x3f8] sm:$0xff] %v768
          %801 = vst [vmem:[#allocation2 + $0x440] sm:$0xff] %v769
          %vm818 = vcmask 1042432
          %vm819 = vcmask 1046532
          %vm820 = vmor %vm818, %vm819
          %v821 = vrot.slane %v175, 5
          %v822 = vrot.slane %v821, 4
          %v823 = vrot.slane %v176, 5
          %v824 = vsel %vm820, %v822, %v823
          %v825 = vrot.slane %v823, 4
          %v826 = vrot.slane %v177, 5
          %v827 = vsel %vm820, %v825, %v826
          %v828 = vrot.slane %v178, 5
          %v829 = vrot.slane %v828, 4
          %v830 = vrot.slane %v179, 5
          %v831 = vsel %vm820, %v829, %v830
          %v832 = vrot.slane %v830, 4
          %v833 = vrot.slane %v180, 5
          %v834 = vsel %vm820, %v832, %v833
          %v835 = vrot.slane %v181, 5
          %v836 = vrot.slane %v835, 4
          %v837 = vrot.slane %v182, 5
          %v838 = vsel %vm820, %v836, %v837
          %v839 = vrot.slane %v837, 4
          %v840 = vrot.slane %v183, 5
          %v841 = vsel %vm820, %v839, %v840
          %v842 = vrot.slane %v184, 5
          %v843 = vrot.slane %v842, 4
          %v844 = vrot.slane %v185, 5
          %v845 = vsel %vm820, %v843, %v844
          %v846 = vrot.slane %v844, 4
          %v847 = vrot.slane %v186, 5
          %v848 = vsel %vm820, %v846, %v847
          %v849 = vrot.slane %v187, 5
          %v850 = vrot.slane %v849, 4
          %v851 = vrot.slane %v188, 5
          %v852 = vsel %vm820, %v850, %v851
          %v853 = vrot.slane %v851, 4
          %v854 = vrot.slane %v189, 5
          %v855 = vsel %vm820, %v853, %v854
          %v856 = vrot.slane %v190, 5
          %v857 = vrot.slane %v856, 4
          %v858 = vrot.slane %v191, 5
          %v859 = vsel %vm820, %v857, %v858
          %v860 = vrot.slane %v858, 4
          %v861 = vrot.slane %v192, 5
          %v862 = vsel %vm820, %v860, %v861
          %v863 = vrot.slane %v193, 5
          %v864 = vrot.slane %v863, 4
          %v865 = vrot.slane %v194, 5
          %v866 = vsel %vm820, %v864, %v865
          %v867 = vrot.slane %v865, 4
          %v868 = vrot.slane %v195, 5
          %v869 = vsel %vm820, %v867, %v868
          %v870 = vrot.slane %v196, 5
          %v871 = vrot.slane %v870, 4
          %v872 = vrot.slane %v197, 5
          %v873 = vsel %vm820, %v871, %v872
          %v874 = vrot.slane %v872, 4
          %v875 = vrot.slane %v198, 5
          %v876 = vsel %vm820, %v874, %v875
          %v877 = vrot.slane %v199, 5
          %v878 = vrot.slane %v877, 4
          %v879 = vrot.slane %v200, 5
          %v880 = vsel %vm820, %v878, %v879
          %v881 = vrot.slane %v879, 4
          %v882 = vrot.slane %v201, 5
          %v883 = vsel %vm820, %v881, %v882
          %v884 = vrot.slane %v202, 5
          %v885 = vrot.slane %v884, 4
          %v886 = vrot.slane %v203, 5
          %v887 = vsel %vm820, %v885, %v886
          %v888 = vrot.slane %v886, 4
          %v889 = vrot.slane %v204, 5
          %v890 = vsel %vm820, %v888, %v889
          %v891 = vrot.slane %v205, 5
          %v892 = vrot.slane %v891, 4
          %v893 = vrot.slane %v206, 5
          %v894 = vsel %vm820, %v892, %v893
          %v895 = vrot.slane %v893, 4
          %v896 = vrot.slane %v207, 5
          %v897 = vsel %vm820, %v895, %v896
          %v898 = vrot.slane %v208, 5
          %v899 = vrot.slane %v898, 4
          %v900 = vrot.slane %v209, 5
          %v901 = vsel %vm820, %v899, %v900
          %v902 = vrot.slane %v900, 4
          %v903 = vrot.slane %v210, 5
          %v904 = vsel %vm820, %v902, %v903
          %v905 = vrot.slane %v211, 5
          %v906 = vrot.slane %v905, 4
          %v907 = vrot.slane %v212, 5
          %v908 = vsel %vm820, %v906, %v907
          %v909 = vrot.slane %v907, 4
          %v910 = vrot.slane %v213, 5
          %v911 = vsel %vm820, %v909, %v910
          %v912 = vrot.slane %v214, 5
          %v913 = vrot.slane %v912, 4
          %v914 = vrot.slane %v215, 5
          %v915 = vsel %vm820, %v913, %v914
          %v916 = vrot.slane %v914, 4
          %v917 = vrot.slane %v216, 5
          %v918 = vsel %vm820, %v916, %v917
          %v919 = vrot.slane %v217, 5
          %v920 = vrot.slane %v919, 4
          %v921 = vrot.slane %v218, 5
          %v922 = vsel %vm820, %v920, %v921
          %v923 = vrot.slane %v921, 4
          %v924 = vrot.slane %v219, 5
          %v925 = vsel %vm820, %v923, %v924
          %v926 = vrot.slane %v220, 5
          %v927 = vrot.slane %v926, 4
          %v928 = vrot.slane %v221, 5
          %v929 = vsel %vm820, %v927, %v928
          %v930 = vrot.slane %v928, 4
          %v931 = vrot.slane %v222, 5
          %v932 = vsel %vm820, %v930, %v931
          %v933 = vunpack.c.l.b16 %v824
          %v934 = vunpack.c.l.b16 %v827
          %v935 = vunpack.c.l.b16 %v831
          %v936 = vunpack.c.l.b16 %v834
          %v937 = vunpack.c.l.b16 %v838
          %v938 = vunpack.c.l.b16 %v841
          %v939 = vunpack.c.l.b16 %v845
          %v940 = vunpack.c.l.b16 %v848
          %v941 = vunpack.c.l.b16 %v852
          %v942 = vunpack.c.l.b16 %v855
          %v943 = vunpack.c.l.b16 %v859
          %v944 = vunpack.c.l.b16 %v862
          %v945 = vunpack.c.l.b16 %v866
          %v946 = vunpack.c.l.b16 %v869
          %v947 = vunpack.c.l.b16 %v873
          %v948 = vunpack.c.l.b16 %v876
          %v949 = vunpack.c.l.b16 %v880
          %v950 = vunpack.c.l.b16 %v883
          %v951 = vunpack.c.l.b16 %v887
          %v952 = vunpack.c.l.b16 %v890
          %v953 = vunpack.c.l.b16 %v894
          %v954 = vunpack.c.l.b16 %v897
          %v955 = vunpack.c.l.b16 %v901
          %v956 = vunpack.c.l.b16 %v904
          %v957 = vunpack.c.l.b16 %v908
          %v958 = vunpack.c.l.b16 %v911
          %v959 = vunpack.c.l.b16 %v915
          %v960 = vunpack.c.l.b16 %v918
          %v961 = vunpack.c.l.b16 %v922
          %v962 = vunpack.c.l.b16 %v925
          %v963 = vunpack.c.l.b16 %v929
          %v964 = vunpack.c.l.b16 %v932
          %v965 = vpack.c.b16 %v934, %v933
          %v966 = vpack.c.b16 %v936, %v935
          %v967 = vpack.c.b16 %v938, %v937
          %v968 = vpack.c.b16 %v940, %v939
          %v969 = vpack.c.b16 %v942, %v941
          %v970 = vpack.c.b16 %v944, %v943
          %v971 = vpack.c.b16 %v946, %v945
          %v972 = vpack.c.b16 %v948, %v947
          %v973 = vpack.c.b16 %v950, %v949
          %v974 = vpack.c.b16 %v952, %v951
          %v975 = vpack.c.b16 %v954, %v953
          %v976 = vpack.c.b16 %v956, %v955
          %v977 = vpack.c.b16 %v958, %v957
          %v978 = vpack.c.b16 %v960, %v959
          %v979 = vpack.c.b16 %v962, %v961
          %v980 = vpack.c.b16 %v964, %v963
          %997 = vst [vmem:[#allocation2 + $0x10] sm:$0xff] %v965
          %998 = vst [vmem:[#allocation2 + $0x58] sm:$0xff] %v966
          %999 = vst [vmem:[#allocation2 + $0xa0] sm:$0xff] %v967
          %1000 = vst [vmem:[#allocation2 + $0xe8] sm:$0xff] %v968
          %1001 = vst [vmem:[#allocation2 + $0x130] sm:$0xff] %v969
          %1002 = vst [vmem:[#allocation2 + $0x178] sm:$0xff] %v970
          %1003 = vst [vmem:[#allocation2 + $0x1c0] sm:$0xff] %v971
          %1004 = vst [vmem:[#allocation2 + $0x208] sm:$0xff] %v972
          %1005 = vst [vmem:[#allocation2 + $0x250] sm:$0xff] %v973
          %1006 = vst [vmem:[#allocation2 + $0x298] sm:$0xff] %v974
          %1007 = vst [vmem:[#allocation2 + $0x2e0] sm:$0xff] %v975
          %1008 = vst [vmem:[#allocation2 + $0x328] sm:$0xff] %v976
          %1009 = vst [vmem:[#allocation2 + $0x370] sm:$0xff] %v977
          %1010 = vst [vmem:[#allocation2 + $0x3b8] sm:$0xff] %v978
          %1011 = vst [vmem:[#allocation2 + $0x400] sm:$0xff] %v979
          %1012 = vst [vmem:[#allocation2 + $0x448] sm:$0xff] %v980
          %s1013 = sadd.s32 %s171, 1
          %s1014 = smul.u32 %s1013, 3
          %s1015 = smul.addr %s1014, 4
          %s1016 = scalar_lea.vmem %s164, %s1015
          %v1017 = vld [vmem:[%s1016] sm:$0xf]
          %v1018 = vld [vmem:[%s1016 + $0x4] sm:$0xf]
          %v1019 = vld [vmem:[%s1016 + $0x8] sm:$0x1]
          %v1020 = vld [vmem:[%s1016 + $0xc] sm:$0xf]
          %v1021 = vld [vmem:[%s1016 + $0x10] sm:$0xf]
          %v1022 = vld [vmem:[%s1016 + $0x14] sm:$0x1]
          %v1023 = vld [vmem:[%s1016 + $0x18] sm:$0xf]
          %v1024 = vld [vmem:[%s1016 + $0x1c] sm:$0xf]
          %v1025 = vld [vmem:[%s1016 + $0x20] sm:$0x1]
          %v1026 = vld [vmem:[%s1016 + $0x24] sm:$0xf]
          %v1027 = vld [vmem:[%s1016 + $0x28] sm:$0xf]
          %v1028 = vld [vmem:[%s1016 + $0x2c] sm:$0x1]
          %v1029 = vld [vmem:[%s1016 + $0x30] sm:$0xf]
          %v1030 = vld [vmem:[%s1016 + $0x34] sm:$0xf]
          %v1031 = vld [vmem:[%s1016 + $0x38] sm:$0x1]
          %v1032 = vld [vmem:[%s1016 + $0x3c] sm:$0xf]
          %v1033 = vld [vmem:[%s1016 + $0x40] sm:$0xf]
          %v1034 = vld [vmem:[%s1016 + $0x44] sm:$0x1]
          %v1035 = vld [vmem:[%s1016 + $0x48] sm:$0xf]
          %v1036 = vld [vmem:[%s1016 + $0x4c] sm:$0xf]
          %v1037 = vld [vmem:[%s1016 + $0x50] sm:$0x1]
          %v1038 = vld [vmem:[%s1016 + $0x54] sm:$0xf]
          %v1039 = vld [vmem:[%s1016 + $0x58] sm:$0xf]
          %v1040 = vld [vmem:[%s1016 + $0x5c] sm:$0x1]
          %v1041 = vld [vmem:[%s1016 + $0x60] sm:$0xf]
          %v1042 = vld [vmem:[%s1016 + $0x64] sm:$0xf]
          %v1043 = vld [vmem:[%s1016 + $0x68] sm:$0x1]
          %v1044 = vld [vmem:[%s1016 + $0x6c] sm:$0xf]
          %v1045 = vld [vmem:[%s1016 + $0x70] sm:$0xf]
          %v1046 = vld [vmem:[%s1016 + $0x74] sm:$0x1]
          %v1047 = vld [vmem:[%s1016 + $0x78] sm:$0xf]
          %v1048 = vld [vmem:[%s1016 + $0x7c] sm:$0xf]
          %v1049 = vld [vmem:[%s1016 + $0x80] sm:$0x1]
          %v1050 = vld [vmem:[%s1016 + $0x84] sm:$0xf]
          %v1051 = vld [vmem:[%s1016 + $0x88] sm:$0xf]
          %v1052 = vld [vmem:[%s1016 + $0x8c] sm:$0x1]
          %v1053 = vld [vmem:[%s1016 + $0x90] sm:$0xf]
          %v1054 = vld [vmem:[%s1016 + $0x94] sm:$0xf]
          %v1055 = vld [vmem:[%s1016 + $0x98] sm:$0x1]
          %v1056 = vld [vmem:[%s1016 + $0x9c] sm:$0xf]
          %v1057 = vld [vmem:[%s1016 + $0xa0] sm:$0xf]
          %v1058 = vld [vmem:[%s1016 + $0xa4] sm:$0x1]
          %v1059 = vld [vmem:[%s1016 + $0xa8] sm:$0xf]
          %v1060 = vld [vmem:[%s1016 + $0xac] sm:$0xf]
          %v1061 = vld [vmem:[%s1016 + $0xb0] sm:$0x1]
          %v1062 = vld [vmem:[%s1016 + $0xb4] sm:$0xf]
          %v1063 = vld [vmem:[%s1016 + $0xb8] sm:$0xf]
          %v1064 = vld [vmem:[%s1016 + $0xbc] sm:$0x1]
          %v1097 = vunpack.c.l.b16 %v1017
          %v1098 = vunpack.c.l.b16 %v1018
          %v1099 = vunpack.c.l.b16 %v1020
          %v1100 = vunpack.c.l.b16 %v1021
          %v1101 = vunpack.c.l.b16 %v1023
          %v1102 = vunpack.c.l.b16 %v1024
          %v1103 = vunpack.c.l.b16 %v1026
          %v1104 = vunpack.c.l.b16 %v1027
          %v1105 = vunpack.c.l.b16 %v1029
          %v1106 = vunpack.c.l.b16 %v1030
          %v1107 = vunpack.c.l.b16 %v1032
          %v1108 = vunpack.c.l.b16 %v1033
          %v1109 = vunpack.c.l.b16 %v1035
          %v1110 = vunpack.c.l.b16 %v1036
          %v1111 = vunpack.c.l.b16 %v1038
          %v1112 = vunpack.c.l.b16 %v1039
          %v1113 = vunpack.c.l.b16 %v1041
          %v1114 = vunpack.c.l.b16 %v1042
          %v1115 = vunpack.c.l.b16 %v1044
          %v1116 = vunpack.c.l.b16 %v1045
          %v1117 = vunpack.c.l.b16 %v1047
          %v1118 = vunpack.c.l.b16 %v1048
          %v1119 = vunpack.c.l.b16 %v1050
          %v1120 = vunpack.c.l.b16 %v1051
          %v1121 = vunpack.c.l.b16 %v1053
          %v1122 = vunpack.c.l.b16 %v1054
          %v1123 = vunpack.c.l.b16 %v1056
          %v1124 = vunpack.c.l.b16 %v1057
          %v1125 = vunpack.c.l.b16 %v1059
          %v1126 = vunpack.c.l.b16 %v1060
          %v1127 = vunpack.c.l.b16 %v1062
          %v1128 = vunpack.c.l.b16 %v1063
          %v1129 = vpack.c.b16 %v1098, %v1097
          %v1130 = vpack.c.b16 %v1100, %v1099
          %v1131 = vpack.c.b16 %v1102, %v1101
          %v1132 = vpack.c.b16 %v1104, %v1103
          %v1133 = vpack.c.b16 %v1106, %v1105
          %v1134 = vpack.c.b16 %v1108, %v1107
          %v1135 = vpack.c.b16 %v1110, %v1109
          %v1136 = vpack.c.b16 %v1112, %v1111
          %v1137 = vpack.c.b16 %v1114, %v1113
          %v1138 = vpack.c.b16 %v1116, %v1115
          %v1139 = vpack.c.b16 %v1118, %v1117
          %v1140 = vpack.c.b16 %v1120, %v1119
          %v1141 = vpack.c.b16 %v1122, %v1121
          %v1142 = vpack.c.b16 %v1124, %v1123
          %v1143 = vpack.c.b16 %v1126, %v1125
          %v1144 = vpack.c.b16 %v1128, %v1127
          %1161 = vst [vmem:[#allocation2 + $0x18] sm:$0xff] %v1129
          %1162 = vst [vmem:[#allocation2 + $0x60] sm:$0xff] %v1130
          %1163 = vst [vmem:[#allocation2 + $0xa8] sm:$0xff] %v1131
          %1164 = vst [vmem:[#allocation2 + $0xf0] sm:$0xff] %v1132
          %1165 = vst [vmem:[#allocation2 + $0x138] sm:$0xff] %v1133
          %1166 = vst [vmem:[#allocation2 + $0x180] sm:$0xff] %v1134
          %1167 = vst [vmem:[#allocation2 + $0x1c8] sm:$0xff] %v1135
          %1168 = vst [vmem:[#allocation2 + $0x210] sm:$0xff] %v1136
          %1169 = vst [vmem:[#allocation2 + $0x258] sm:$0xff] %v1137
          %1170 = vst [vmem:[#allocation2 + $0x2a0] sm:$0xff] %v1138
          %1171 = vst [vmem:[#allocation2 + $0x2e8] sm:$0xff] %v1139
          %1172 = vst [vmem:[#allocation2 + $0x330] sm:$0xff] %v1140
          %1173 = vst [vmem:[#allocation2 + $0x378] sm:$0xff] %v1141
          %1174 = vst [vmem:[#allocation2 + $0x3c0] sm:$0xff] %v1142
          %1175 = vst [vmem:[#allocation2 + $0x408] sm:$0xff] %v1143
          %1176 = vst [vmem:[#allocation2 + $0x450] sm:$0xff] %v1144
          %v1178 = vshrl.u32 %v1017, 16
          %v1180 = vrot.slane %v1178, 4
          %v1181 = vshll.u32 %v1017, 16
          %v1183 = vrot.slane %v1181, 5
          %v1184 = vor.u32 %v1180, %v1183
          %v1185 = vrot.slane %v1184, 4
          %v1187 = vshll.u32 %v1018, 16
          %v1189 = vrot.slane %v1187, 5
          %v1190 = vsel %vm337, %v1185, %v1189
          %v1191 = vshrl.u32 %v1018, 16
          %v1193 = vrot.slane %v1191, 4
          %v1194 = vor.u32 %v1193, %v1189
          %v1195 = vrot.slane %v1194, 4
          %v1197 = vshll.u32 %v1019, 16
          %v1199 = vrot.slane %v1197, 5
          %v1200 = vsel %vm337, %v1195, %v1199
          %v1202 = vshrl.u32 %v1020, 16
          %v1204 = vrot.slane %v1202, 4
          %v1205 = vshll.u32 %v1020, 16
          %v1207 = vrot.slane %v1205, 5
          %v1208 = vor.u32 %v1204, %v1207
          %v1209 = vrot.slane %v1208, 4
          %v1211 = vshll.u32 %v1021, 16
          %v1213 = vrot.slane %v1211, 5
          %v1214 = vsel %vm337, %v1209, %v1213
          %v1215 = vshrl.u32 %v1021, 16
          %v1217 = vrot.slane %v1215, 4
          %v1218 = vor.u32 %v1217, %v1213
          %v1219 = vrot.slane %v1218, 4
          %v1221 = vshll.u32 %v1022, 16
          %v1223 = vrot.slane %v1221, 5
          %v1224 = vsel %vm337, %v1219, %v1223
          %v1226 = vshrl.u32 %v1023, 16
          %v1228 = vrot.slane %v1226, 4
          %v1229 = vshll.u32 %v1023, 16
          %v1231 = vrot.slane %v1229, 5
          %v1232 = vor.u32 %v1228, %v1231
          %v1233 = vrot.slane %v1232, 4
          %v1235 = vshll.u32 %v1024, 16
          %v1237 = vrot.slane %v1235, 5
          %v1238 = vsel %vm337, %v1233, %v1237
          %v1239 = vshrl.u32 %v1024, 16
          %v1241 = vrot.slane %v1239, 4
          %v1242 = vor.u32 %v1241, %v1237
          %v1243 = vrot.slane %v1242, 4
          %v1245 = vshll.u32 %v1025, 16
          %v1247 = vrot.slane %v1245, 5
          %v1248 = vsel %vm337, %v1243, %v1247
          %v1250 = vshrl.u32 %v1026, 16
          %v1252 = vrot.slane %v1250, 4
          %v1253 = vshll.u32 %v1026, 16
          %v1255 = vrot.slane %v1253, 5
          %v1256 = vor.u32 %v1252, %v1255
          %v1257 = vrot.slane %v1256, 4
          %v1259 = vshll.u32 %v1027, 16
          %v1261 = vrot.slane %v1259, 5
          %v1262 = vsel %vm337, %v1257, %v1261
          %v1263 = vshrl.u32 %v1027, 16
          %v1265 = vrot.slane %v1263, 4
          %v1266 = vor.u32 %v1265, %v1261
          %v1267 = vrot.slane %v1266, 4
          %v1269 = vshll.u32 %v1028, 16
          %v1271 = vrot.slane %v1269, 5
          %v1272 = vsel %vm337, %v1267, %v1271
          %v1274 = vshrl.u32 %v1029, 16
          %v1276 = vrot.slane %v1274, 4
          %v1277 = vshll.u32 %v1029, 16
          %v1279 = vrot.slane %v1277, 5
          %v1280 = vor.u32 %v1276, %v1279
          %v1281 = vrot.slane %v1280, 4
          %v1283 = vshll.u32 %v1030, 16
          %v1285 = vrot.slane %v1283, 5
          %v1286 = vsel %vm337, %v1281, %v1285
          %v1287 = vshrl.u32 %v1030, 16
          %v1289 = vrot.slane %v1287, 4
          %v1290 = vor.u32 %v1289, %v1285
          %v1291 = vrot.slane %v1290, 4
          %v1293 = vshll.u32 %v1031, 16
          %v1295 = vrot.slane %v1293, 5
          %v1296 = vsel %vm337, %v1291, %v1295
          %v1298 = vshrl.u32 %v1032, 16
          %v1300 = vrot.slane %v1298, 4
          %v1301 = vshll.u32 %v1032, 16
          %v1303 = vrot.slane %v1301, 5
          %v1304 = vor.u32 %v1300, %v1303
          %v1305 = vrot.slane %v1304, 4
          %v1307 = vshll.u32 %v1033, 16
          %v1309 = vrot.slane %v1307, 5
          %v1310 = vsel %vm337, %v1305, %v1309
          %v1311 = vshrl.u32 %v1033, 16
          %v1313 = vrot.slane %v1311, 4
          %v1314 = vor.u32 %v1313, %v1309
          %v1315 = vrot.slane %v1314, 4
          %v1317 = vshll.u32 %v1034, 16
          %v1319 = vrot.slane %v1317, 5
          %v1320 = vsel %vm337, %v1315, %v1319
          %v1322 = vshrl.u32 %v1035, 16
          %v1324 = vrot.slane %v1322, 4
          %v1325 = vshll.u32 %v1035, 16
          %v1327 = vrot.slane %v1325, 5
          %v1328 = vor.u32 %v1324, %v1327
          %v1329 = vrot.slane %v1328, 4
          %v1331 = vshll.u32 %v1036, 16
          %v1333 = vrot.slane %v1331, 5
          %v1334 = vsel %vm337, %v1329, %v1333
          %v1335 = vshrl.u32 %v1036, 16
          %v1337 = vrot.slane %v1335, 4
          %v1338 = vor.u32 %v1337, %v1333
          %v1339 = vrot.slane %v1338, 4
          %v1341 = vshll.u32 %v1037, 16
          %v1343 = vrot.slane %v1341, 5
          %v1344 = vsel %vm337, %v1339, %v1343
          %v1346 = vshrl.u32 %v1038, 16
          %v1348 = vrot.slane %v1346, 4
          %v1349 = vshll.u32 %v1038, 16
          %v1351 = vrot.slane %v1349, 5
          %v1352 = vor.u32 %v1348, %v1351
          %v1353 = vrot.slane %v1352, 4
          %v1355 = vshll.u32 %v1039, 16
          %v1357 = vrot.slane %v1355, 5
          %v1358 = vsel %vm337, %v1353, %v1357
          %v1359 = vshrl.u32 %v1039, 16
          %v1361 = vrot.slane %v1359, 4
          %v1362 = vor.u32 %v1361, %v1357
          %v1363 = vrot.slane %v1362, 4
          %v1365 = vshll.u32 %v1040, 16
          %v1367 = vrot.slane %v1365, 5
          %v1368 = vsel %vm337, %v1363, %v1367
          %v1370 = vshrl.u32 %v1041, 16
          %v1372 = vrot.slane %v1370, 4
          %v1373 = vshll.u32 %v1041, 16
          %v1375 = vrot.slane %v1373, 5
          %v1376 = vor.u32 %v1372, %v1375
          %v1377 = vrot.slane %v1376, 4
          %v1379 = vshll.u32 %v1042, 16
          %v1381 = vrot.slane %v1379, 5
          %v1382 = vsel %vm337, %v1377, %v1381
          %v1383 = vshrl.u32 %v1042, 16
          %v1385 = vrot.slane %v1383, 4
          %v1386 = vor.u32 %v1385, %v1381
          %v1387 = vrot.slane %v1386, 4
          %v1389 = vshll.u32 %v1043, 16
          %v1391 = vrot.slane %v1389, 5
          %v1392 = vsel %vm337, %v1387, %v1391
          %v1394 = vshrl.u32 %v1044, 16
          %v1396 = vrot.slane %v1394, 4
          %v1397 = vshll.u32 %v1044, 16
          %v1399 = vrot.slane %v1397, 5
          %v1400 = vor.u32 %v1396, %v1399
          %v1401 = vrot.slane %v1400, 4
          %v1403 = vshll.u32 %v1045, 16
          %v1405 = vrot.slane %v1403, 5
          %v1406 = vsel %vm337, %v1401, %v1405
          %v1407 = vshrl.u32 %v1045, 16
          %v1409 = vrot.slane %v1407, 4
          %v1410 = vor.u32 %v1409, %v1405
          %v1411 = vrot.slane %v1410, 4
          %v1413 = vshll.u32 %v1046, 16
          %v1415 = vrot.slane %v1413, 5
          %v1416 = vsel %vm337, %v1411, %v1415
          %v1418 = vshrl.u32 %v1047, 16
          %v1420 = vrot.slane %v1418, 4
          %v1421 = vshll.u32 %v1047, 16
          %v1423 = vrot.slane %v1421, 5
          %v1424 = vor.u32 %v1420, %v1423
          %v1425 = vrot.slane %v1424, 4
          %v1427 = vshll.u32 %v1048, 16
          %v1429 = vrot.slane %v1427, 5
          %v1430 = vsel %vm337, %v1425, %v1429
          %v1431 = vshrl.u32 %v1048, 16
          %v1433 = vrot.slane %v1431, 4
          %v1434 = vor.u32 %v1433, %v1429
          %v1435 = vrot.slane %v1434, 4
          %v1437 = vshll.u32 %v1049, 16
          %v1439 = vrot.slane %v1437, 5
          %v1440 = vsel %vm337, %v1435, %v1439
          %v1442 = vshrl.u32 %v1050, 16
          %v1444 = vrot.slane %v1442, 4
          %v1445 = vshll.u32 %v1050, 16
          %v1447 = vrot.slane %v1445, 5
          %v1448 = vor.u32 %v1444, %v1447
          %v1449 = vrot.slane %v1448, 4
          %v1451 = vshll.u32 %v1051, 16
          %v1453 = vrot.slane %v1451, 5
          %v1454 = vsel %vm337, %v1449, %v1453
          %v1455 = vshrl.u32 %v1051, 16
          %v1457 = vrot.slane %v1455, 4
          %v1458 = vor.u32 %v1457, %v1453
          %v1459 = vrot.slane %v1458, 4
          %v1461 = vshll.u32 %v1052, 16
          %v1463 = vrot.slane %v1461, 5
          %v1464 = vsel %vm337, %v1459, %v1463
          %v1466 = vshrl.u32 %v1053, 16
          %v1468 = vrot.slane %v1466, 4
          %v1469 = vshll.u32 %v1053, 16
          %v1471 = vrot.slane %v1469, 5
          %v1472 = vor.u32 %v1468, %v1471
          %v1473 = vrot.slane %v1472, 4
          %v1475 = vshll.u32 %v1054, 16
          %v1477 = vrot.slane %v1475, 5
          %v1478 = vsel %vm337, %v1473, %v1477
          %v1479 = vshrl.u32 %v1054, 16
          %v1481 = vrot.slane %v1479, 4
          %v1482 = vor.u32 %v1481, %v1477
          %v1483 = vrot.slane %v1482, 4
          %v1485 = vshll.u32 %v1055, 16
          %v1487 = vrot.slane %v1485, 5
          %v1488 = vsel %vm337, %v1483, %v1487
          %v1490 = vshrl.u32 %v1056, 16
          %v1492 = vrot.slane %v1490, 4
          %v1493 = vshll.u32 %v1056, 16
          %v1495 = vrot.slane %v1493, 5
          %v1496 = vor.u32 %v1492, %v1495
          %v1497 = vrot.slane %v1496, 4
          %v1499 = vshll.u32 %v1057, 16
          %v1501 = vrot.slane %v1499, 5
          %v1502 = vsel %vm337, %v1497, %v1501
          %v1503 = vshrl.u32 %v1057, 16
          %v1505 = vrot.slane %v1503, 4
          %v1506 = vor.u32 %v1505, %v1501
          %v1507 = vrot.slane %v1506, 4
          %v1509 = vshll.u32 %v1058, 16
          %v1511 = vrot.slane %v1509, 5
          %v1512 = vsel %vm337, %v1507, %v1511
          %v1514 = vshrl.u32 %v1059, 16
          %v1516 = vrot.slane %v1514, 4
          %v1517 = vshll.u32 %v1059, 16
          %v1519 = vrot.slane %v1517, 5
          %v1520 = vor.u32 %v1516, %v1519
          %v1521 = vrot.slane %v1520, 4
          %v1523 = vshll.u32 %v1060, 16
          %v1525 = vrot.slane %v1523, 5
          %v1526 = vsel %vm337, %v1521, %v1525
          %v1527 = vshrl.u32 %v1060, 16
          %v1529 = vrot.slane %v1527, 4
          %v1530 = vor.u32 %v1529, %v1525
          %v1531 = vrot.slane %v1530, 4
          %v1533 = vshll.u32 %v1061, 16
          %v1535 = vrot.slane %v1533, 5
          %v1536 = vsel %vm337, %v1531, %v1535
          %v1538 = vshrl.u32 %v1062, 16
          %v1540 = vrot.slane %v1538, 4
          %v1541 = vshll.u32 %v1062, 16
          %v1543 = vrot.slane %v1541, 5
          %v1544 = vor.u32 %v1540, %v1543
          %v1545 = vrot.slane %v1544, 4
          %v1547 = vshll.u32 %v1063, 16
          %v1549 = vrot.slane %v1547, 5
          %v1550 = vsel %vm337, %v1545, %v1549
          %v1551 = vshrl.u32 %v1063, 16
          %v1553 = vrot.slane %v1551, 4
          %v1554 = vor.u32 %v1553, %v1549
          %v1555 = vrot.slane %v1554, 4
          %v1557 = vshll.u32 %v1064, 16
          %v1559 = vrot.slane %v1557, 5
          %v1560 = vsel %vm337, %v1555, %v1559
          %v1561 = vunpack.c.l.b16 %v1190
          %v1562 = vunpack.c.l.b16 %v1200
          %v1563 = vunpack.c.l.b16 %v1214
          %v1564 = vunpack.c.l.b16 %v1224
          %v1565 = vunpack.c.l.b16 %v1238
          %v1566 = vunpack.c.l.b16 %v1248
          %v1567 = vunpack.c.l.b16 %v1262
          %v1568 = vunpack.c.l.b16 %v1272
          %v1569 = vunpack.c.l.b16 %v1286
          %v1570 = vunpack.c.l.b16 %v1296
          %v1571 = vunpack.c.l.b16 %v1310
          %v1572 = vunpack.c.l.b16 %v1320
          %v1573 = vunpack.c.l.b16 %v1334
          %v1574 = vunpack.c.l.b16 %v1344
          %v1575 = vunpack.c.l.b16 %v1358
          %v1576 = vunpack.c.l.b16 %v1368
          %v1577 = vunpack.c.l.b16 %v1382
          %v1578 = vunpack.c.l.b16 %v1392
          %v1579 = vunpack.c.l.b16 %v1406
          %v1580 = vunpack.c.l.b16 %v1416
          %v1581 = vunpack.c.l.b16 %v1430
          %v1582 = vunpack.c.l.b16 %v1440
          %v1583 = vunpack.c.l.b16 %v1454
          %v1584 = vunpack.c.l.b16 %v1464
          %v1585 = vunpack.c.l.b16 %v1478
          %v1586 = vunpack.c.l.b16 %v1488
          %v1587 = vunpack.c.l.b16 %v1502
          %v1588 = vunpack.c.l.b16 %v1512
          %v1589 = vunpack.c.l.b16 %v1526
          %v1590 = vunpack.c.l.b16 %v1536
          %v1591 = vunpack.c.l.b16 %v1550
          %v1592 = vunpack.c.l.b16 %v1560
          %v1593 = vpack.c.b16 %v1562, %v1561
          %v1594 = vpack.c.b16 %v1564, %v1563
          %v1595 = vpack.c.b16 %v1566, %v1565
          %v1596 = vpack.c.b16 %v1568, %v1567
          %v1597 = vpack.c.b16 %v1570, %v1569
          %v1598 = vpack.c.b16 %v1572, %v1571
          %v1599 = vpack.c.b16 %v1574, %v1573
          %v1600 = vpack.c.b16 %v1576, %v1575
          %v1601 = vpack.c.b16 %v1578, %v1577
          %v1602 = vpack.c.b16 %v1580, %v1579
          %v1603 = vpack.c.b16 %v1582, %v1581
          %v1604 = vpack.c.b16 %v1584, %v1583
          %v1605 = vpack.c.b16 %v1586, %v1585
          %v1606 = vpack.c.b16 %v1588, %v1587
          %v1607 = vpack.c.b16 %v1590, %v1589
          %v1608 = vpack.c.b16 %v1592, %v1591
          %1625 = vst [vmem:[#allocation2 + $0x20] sm:$0xff] %v1593
          %1626 = vst [vmem:[#allocation2 + $0x68] sm:$0xff] %v1594
          %1627 = vst [vmem:[#allocation2 + $0xb0] sm:$0xff] %v1595
          %1628 = vst [vmem:[#allocation2 + $0xf8] sm:$0xff] %v1596
          %1629 = vst [vmem:[#allocation2 + $0x140] sm:$0xff] %v1597
          %1630 = vst [vmem:[#allocation2 + $0x188] sm:$0xff] %v1598
          %1631 = vst [vmem:[#allocation2 + $0x1d0] sm:$0xff] %v1599
          %1632 = vst [vmem:[#allocation2 + $0x218] sm:$0xff] %v1600
          %1633 = vst [vmem:[#allocation2 + $0x260] sm:$0xff] %v1601
          %1634 = vst [vmem:[#allocation2 + $0x2a8] sm:$0xff] %v1602
          %1635 = vst [vmem:[#allocation2 + $0x2f0] sm:$0xff] %v1603
          %1636 = vst [vmem:[#allocation2 + $0x338] sm:$0xff] %v1604
          %1637 = vst [vmem:[#allocation2 + $0x380] sm:$0xff] %v1605
          %1638 = vst [vmem:[#allocation2 + $0x3c8] sm:$0xff] %v1606
          %1639 = vst [vmem:[#allocation2 + $0x410] sm:$0xff] %v1607
          %1640 = vst [vmem:[#allocation2 + $0x458] sm:$0xff] %v1608
          %v1657 = vrot.slane %v1017, 5
          %v1658 = vrot.slane %v1657, 4
          %v1659 = vrot.slane %v1018, 5
          %v1660 = vsel %vm820, %v1658, %v1659
          %v1661 = vrot.slane %v1659, 4
          %v1662 = vrot.slane %v1019, 5
          %v1663 = vsel %vm820, %v1661, %v1662
          %v1664 = vrot.slane %v1020, 5
          %v1665 = vrot.slane %v1664, 4
          %v1666 = vrot.slane %v1021, 5
          %v1667 = vsel %vm820, %v1665, %v1666
          %v1668 = vrot.slane %v1666, 4
          %v1669 = vrot.slane %v1022, 5
          %v1670 = vsel %vm820, %v1668, %v1669
          %v1671 = vrot.slane %v1023, 5
          %v1672 = vrot.slane %v1671, 4
          %v1673 = vrot.slane %v1024, 5
          %v1674 = vsel %vm820, %v1672, %v1673
          %v1675 = vrot.slane %v1673, 4
          %v1676 = vrot.slane %v1025, 5
          %v1677 = vsel %vm820, %v1675, %v1676
          %v1678 = vrot.slane %v1026, 5
          %v1679 = vrot.slane %v1678, 4
          %v1680 = vrot.slane %v1027, 5
          %v1681 = vsel %vm820, %v1679, %v1680
          %v1682 = vrot.slane %v1680, 4
          %v1683 = vrot.slane %v1028, 5
          %v1684 = vsel %vm820, %v1682, %v1683
          %v1685 = vrot.slane %v1029, 5
          %v1686 = vrot.slane %v1685, 4
          %v1687 = vrot.slane %v1030, 5
          %v1688 = vsel %vm820, %v1686, %v1687
          %v1689 = vrot.slane %v1687, 4
          %v1690 = vrot.slane %v1031, 5
          %v1691 = vsel %vm820, %v1689, %v1690
          %v1692 = vrot.slane %v1032, 5
          %v1693 = vrot.slane %v1692, 4
          %v1694 = vrot.slane %v1033, 5
          %v1695 = vsel %vm820, %v1693, %v1694
          %v1696 = vrot.slane %v1694, 4
          %v1697 = vrot.slane %v1034, 5
          %v1698 = vsel %vm820, %v1696, %v1697
          %v1699 = vrot.slane %v1035, 5
          %v1700 = vrot.slane %v1699, 4
          %v1701 = vrot.slane %v1036, 5
          %v1702 = vsel %vm820, %v1700, %v1701
          %v1703 = vrot.slane %v1701, 4
          %v1704 = vrot.slane %v1037, 5
          %v1705 = vsel %vm820, %v1703, %v1704
          %v1706 = vrot.slane %v1038, 5
          %v1707 = vrot.slane %v1706, 4
          %v1708 = vrot.slane %v1039, 5
          %v1709 = vsel %vm820, %v1707, %v1708
          %v1710 = vrot.slane %v1708, 4
          %v1711 = vrot.slane %v1040, 5
          %v1712 = vsel %vm820, %v1710, %v1711
          %v1713 = vrot.slane %v1041, 5
          %v1714 = vrot.slane %v1713, 4
          %v1715 = vrot.slane %v1042, 5
          %v1716 = vsel %vm820, %v1714, %v1715
          %v1717 = vrot.slane %v1715, 4
          %v1718 = vrot.slane %v1043, 5
          %v1719 = vsel %vm820, %v1717, %v1718
          %v1720 = vrot.slane %v1044, 5
          %v1721 = vrot.slane %v1720, 4
          %v1722 = vrot.slane %v1045, 5
          %v1723 = vsel %vm820, %v1721, %v1722
          %v1724 = vrot.slane %v1722, 4
          %v1725 = vrot.slane %v1046, 5
          %v1726 = vsel %vm820, %v1724, %v1725
          %v1727 = vrot.slane %v1047, 5
          %v1728 = vrot.slane %v1727, 4
          %v1729 = vrot.slane %v1048, 5
          %v1730 = vsel %vm820, %v1728, %v1729
          %v1731 = vrot.slane %v1729, 4
          %v1732 = vrot.slane %v1049, 5
          %v1733 = vsel %vm820, %v1731, %v1732
          %v1734 = vrot.slane %v1050, 5
          %v1735 = vrot.slane %v1734, 4
          %v1736 = vrot.slane %v1051, 5
          %v1737 = vsel %vm820, %v1735, %v1736
          %v1738 = vrot.slane %v1736, 4
          %v1739 = vrot.slane %v1052, 5
          %v1740 = vsel %vm820, %v1738, %v1739
          %v1741 = vrot.slane %v1053, 5
          %v1742 = vrot.slane %v1741, 4
          %v1743 = vrot.slane %v1054, 5
          %v1744 = vsel %vm820, %v1742, %v1743
          %v1745 = vrot.slane %v1743, 4
          %v1746 = vrot.slane %v1055, 5
          %v1747 = vsel %vm820, %v1745, %v1746
          %v1748 = vrot.slane %v1056, 5
          %v1749 = vrot.slane %v1748, 4
          %v1750 = vrot.slane %v1057, 5
          %v1751 = vsel %vm820, %v1749, %v1750
          %v1752 = vrot.slane %v1750, 4
          %v1753 = vrot.slane %v1058, 5
          %v1754 = vsel %vm820, %v1752, %v1753
          %v1755 = vrot.slane %v1059, 5
          %v1756 = vrot.slane %v1755, 4
          %v1757 = vrot.slane %v1060, 5
          %v1758 = vsel %vm820, %v1756, %v1757
          %v1759 = vrot.slane %v1757, 4
          %v1760 = vrot.slane %v1061, 5
          %v1761 = vsel %vm820, %v1759, %v1760
          %v1762 = vrot.slane %v1062, 5
          %v1763 = vrot.slane %v1762, 4
          %v1764 = vrot.slane %v1063, 5
          %v1765 = vsel %vm820, %v1763, %v1764
          %v1766 = vrot.slane %v1764, 4
          %v1767 = vrot.slane %v1064, 5
          %v1768 = vsel %vm820, %v1766, %v1767
          %v1769 = vunpack.c.l.b16 %v1660
          %v1770 = vunpack.c.l.b16 %v1663
          %v1771 = vunpack.c.l.b16 %v1667
          %v1772 = vunpack.c.l.b16 %v1670
          %v1773 = vunpack.c.l.b16 %v1674
          %v1774 = vunpack.c.l.b16 %v1677
          %v1775 = vunpack.c.l.b16 %v1681
          %v1776 = vunpack.c.l.b16 %v1684
          %v1777 = vunpack.c.l.b16 %v1688
          %v1778 = vunpack.c.l.b16 %v1691
          %v1779 = vunpack.c.l.b16 %v1695
          %v1780 = vunpack.c.l.b16 %v1698
          %v1781 = vunpack.c.l.b16 %v1702
          %v1782 = vunpack.c.l.b16 %v1705
          %v1783 = vunpack.c.l.b16 %v1709
          %v1784 = vunpack.c.l.b16 %v1712
          %v1785 = vunpack.c.l.b16 %v1716
          %v1786 = vunpack.c.l.b16 %v1719
          %v1787 = vunpack.c.l.b16 %v1723
          %v1788 = vunpack.c.l.b16 %v1726
          %v1789 = vunpack.c.l.b16 %v1730
          %v1790 = vunpack.c.l.b16 %v1733
          %v1791 = vunpack.c.l.b16 %v1737
          %v1792 = vunpack.c.l.b16 %v1740
          %v1793 = vunpack.c.l.b16 %v1744
          %v1794 = vunpack.c.l.b16 %v1747
          %v1795 = vunpack.c.l.b16 %v1751
          %v1796 = vunpack.c.l.b16 %v1754
          %v1797 = vunpack.c.l.b16 %v1758
          %v1798 = vunpack.c.l.b16 %v1761
          %v1799 = vunpack.c.l.b16 %v1765
          %v1800 = vunpack.c.l.b16 %v1768
          %v1801 = vpack.c.b16 %v1770, %v1769
          %v1802 = vpack.c.b16 %v1772, %v1771
          %v1803 = vpack.c.b16 %v1774, %v1773
          %v1804 = vpack.c.b16 %v1776, %v1775
          %v1805 = vpack.c.b16 %v1778, %v1777
          %v1806 = vpack.c.b16 %v1780, %v1779
          %v1807 = vpack.c.b16 %v1782, %v1781
          %v1808 = vpack.c.b16 %v1784, %v1783
          %v1809 = vpack.c.b16 %v1786, %v1785
          %v1810 = vpack.c.b16 %v1788, %v1787
          %v1811 = vpack.c.b16 %v1790, %v1789
          %v1812 = vpack.c.b16 %v1792, %v1791
          %v1813 = vpack.c.b16 %v1794, %v1793
          %v1814 = vpack.c.b16 %v1796, %v1795
          %v1815 = vpack.c.b16 %v1798, %v1797
          %v1816 = vpack.c.b16 %v1800, %v1799
          %1833 = vst [vmem:[#allocation2 + $0x28] sm:$0xff] %v1801
          %1834 = vst [vmem:[#allocation2 + $0x70] sm:$0xff] %v1802
          %1835 = vst [vmem:[#allocation2 + $0xb8] sm:$0xff] %v1803
          %1836 = vst [vmem:[#allocation2 + $0x100] sm:$0xff] %v1804
          %1837 = vst [vmem:[#allocation2 + $0x148] sm:$0xff] %v1805
          %1838 = vst [vmem:[#allocation2 + $0x190] sm:$0xff] %v1806
          %1839 = vst [vmem:[#allocation2 + $0x1d8] sm:$0xff] %v1807
          %1840 = vst [vmem:[#allocation2 + $0x220] sm:$0xff] %v1808
          %1841 = vst [vmem:[#allocation2 + $0x268] sm:$0xff] %v1809
          %1842 = vst [vmem:[#allocation2 + $0x2b0] sm:$0xff] %v1810
          %1843 = vst [vmem:[#allocation2 + $0x2f8] sm:$0xff] %v1811
          %1844 = vst [vmem:[#allocation2 + $0x340] sm:$0xff] %v1812
          %1845 = vst [vmem:[#allocation2 + $0x388] sm:$0xff] %v1813
          %1846 = vst [vmem:[#allocation2 + $0x3d0] sm:$0xff] %v1814
          %1847 = vst [vmem:[#allocation2 + $0x418] sm:$0xff] %v1815
          %1848 = vst [vmem:[#allocation2 + $0x460] sm:$0xff] %v1816
          %s1849 = sadd.s32 %s171, 2
          %s1850 = smul.u32 %s1849, 3
          %s1851 = smul.addr %s1850, 4
          %s1852 = scalar_lea.vmem %s164, %s1851
          %v1853 = vld [vmem:[%s1852] sm:$0xf]
          %v1854 = vld [vmem:[%s1852 + $0x4] sm:$0xf]
          %v1855 = vld [vmem:[%s1852 + $0x8] sm:$0x1]
          %v1856 = vld [vmem:[%s1852 + $0xc] sm:$0xf]
          %v1857 = vld [vmem:[%s1852 + $0x10] sm:$0xf]
          %v1858 = vld [vmem:[%s1852 + $0x14] sm:$0x1]
          %v1859 = vld [vmem:[%s1852 + $0x18] sm:$0xf]
          %v1860 = vld [vmem:[%s1852 + $0x1c] sm:$0xf]
          %v1861 = vld [vmem:[%s1852 + $0x20] sm:$0x1]
          %v1862 = vld [vmem:[%s1852 + $0x24] sm:$0xf]
          %v1863 = vld [vmem:[%s1852 + $0x28] sm:$0xf]
          %v1864 = vld [vmem:[%s1852 + $0x2c] sm:$0x1]
          %v1865 = vld [vmem:[%s1852 + $0x30] sm:$0xf]
          %v1866 = vld [vmem:[%s1852 + $0x34] sm:$0xf]
          %v1867 = vld [vmem:[%s1852 + $0x38] sm:$0x1]
          %v1868 = vld [vmem:[%s1852 + $0x3c] sm:$0xf]
          %v1869 = vld [vmem:[%s1852 + $0x40] sm:$0xf]
          %v1870 = vld [vmem:[%s1852 + $0x44] sm:$0x1]
          %v1871 = vld [vmem:[%s1852 + $0x48] sm:$0xf]
          %v1872 = vld [vmem:[%s1852 + $0x4c] sm:$0xf]
          %v1873 = vld [vmem:[%s1852 + $0x50] sm:$0x1]
          %v1874 = vld [vmem:[%s1852 + $0x54] sm:$0xf]
          %v1875 = vld [vmem:[%s1852 + $0x58] sm:$0xf]
          %v1876 = vld [vmem:[%s1852 + $0x5c] sm:$0x1]
          %v1877 = vld [vmem:[%s1852 + $0x60] sm:$0xf]
          %v1878 = vld [vmem:[%s1852 + $0x64] sm:$0xf]
          %v1879 = vld [vmem:[%s1852 + $0x68] sm:$0x1]
          %v1880 = vld [vmem:[%s1852 + $0x6c] sm:$0xf]
          %v1881 = vld [vmem:[%s1852 + $0x70] sm:$0xf]
          %v1882 = vld [vmem:[%s1852 + $0x74] sm:$0x1]
          %v1883 = vld [vmem:[%s1852 + $0x78] sm:$0xf]
          %v1884 = vld [vmem:[%s1852 + $0x7c] sm:$0xf]
          %v1885 = vld [vmem:[%s1852 + $0x80] sm:$0x1]
          %v1886 = vld [vmem:[%s1852 + $0x84] sm:$0xf]
          %v1887 = vld [vmem:[%s1852 + $0x88] sm:$0xf]
          %v1888 = vld [vmem:[%s1852 + $0x8c] sm:$0x1]
          %v1889 = vld [vmem:[%s1852 + $0x90] sm:$0xf]
          %v1890 = vld [vmem:[%s1852 + $0x94] sm:$0xf]
          %v1891 = vld [vmem:[%s1852 + $0x98] sm:$0x1]
          %v1892 = vld [vmem:[%s1852 + $0x9c] sm:$0xf]
          %v1893 = vld [vmem:[%s1852 + $0xa0] sm:$0xf]
          %v1894 = vld [vmem:[%s1852 + $0xa4] sm:$0x1]
          %v1895 = vld [vmem:[%s1852 + $0xa8] sm:$0xf]
          %v1896 = vld [vmem:[%s1852 + $0xac] sm:$0xf]
          %v1897 = vld [vmem:[%s1852 + $0xb0] sm:$0x1]
          %v1898 = vld [vmem:[%s1852 + $0xb4] sm:$0xf]
          %v1899 = vld [vmem:[%s1852 + $0xb8] sm:$0xf]
          %v1900 = vld [vmem:[%s1852 + $0xbc] sm:$0x1]
          %v1933 = vunpack.c.l.b16 %v1853
          %v1934 = vunpack.c.l.b16 %v1854
          %v1935 = vunpack.c.l.b16 %v1856
          %v1936 = vunpack.c.l.b16 %v1857
          %v1937 = vunpack.c.l.b16 %v1859
          %v1938 = vunpack.c.l.b16 %v1860
          %v1939 = vunpack.c.l.b16 %v1862
          %v1940 = vunpack.c.l.b16 %v1863
          %v1941 = vunpack.c.l.b16 %v1865
          %v1942 = vunpack.c.l.b16 %v1866
          %v1943 = vunpack.c.l.b16 %v1868
          %v1944 = vunpack.c.l.b16 %v1869
          %v1945 = vunpack.c.l.b16 %v1871
          %v1946 = vunpack.c.l.b16 %v1872
          %v1947 = vunpack.c.l.b16 %v1874
          %v1948 = vunpack.c.l.b16 %v1875
          %v1949 = vunpack.c.l.b16 %v1877
          %v1950 = vunpack.c.l.b16 %v1878
          %v1951 = vunpack.c.l.b16 %v1880
          %v1952 = vunpack.c.l.b16 %v1881
          %v1953 = vunpack.c.l.b16 %v1883
          %v1954 = vunpack.c.l.b16 %v1884
          %v1955 = vunpack.c.l.b16 %v1886
          %v1956 = vunpack.c.l.b16 %v1887
          %v1957 = vunpack.c.l.b16 %v1889
          %v1958 = vunpack.c.l.b16 %v1890
          %v1959 = vunpack.c.l.b16 %v1892
          %v1960 = vunpack.c.l.b16 %v1893
          %v1961 = vunpack.c.l.b16 %v1895
          %v1962 = vunpack.c.l.b16 %v1896
          %v1963 = vunpack.c.l.b16 %v1898
          %v1964 = vunpack.c.l.b16 %v1899
          %v1965 = vpack.c.b16 %v1934, %v1933
          %v1966 = vpack.c.b16 %v1936, %v1935
          %v1967 = vpack.c.b16 %v1938, %v1937
          %v1968 = vpack.c.b16 %v1940, %v1939
          %v1969 = vpack.c.b16 %v1942, %v1941
          %v1970 = vpack.c.b16 %v1944, %v1943
          %v1971 = vpack.c.b16 %v1946, %v1945
          %v1972 = vpack.c.b16 %v1948, %v1947
          %v1973 = vpack.c.b16 %v1950, %v1949
          %v1974 = vpack.c.b16 %v1952, %v1951
          %v1975 = vpack.c.b16 %v1954, %v1953
          %v1976 = vpack.c.b16 %v1956, %v1955
          %v1977 = vpack.c.b16 %v1958, %v1957
          %v1978 = vpack.c.b16 %v1960, %v1959
          %v1979 = vpack.c.b16 %v1962, %v1961
          %v1980 = vpack.c.b16 %v1964, %v1963
          %1997 = vst [vmem:[#allocation2 + $0x30] sm:$0xff] %v1965
          %1998 = vst [vmem:[#allocation2 + $0x78] sm:$0xff] %v1966
          %1999 = vst [vmem:[#allocation2 + $0xc0] sm:$0xff] %v1967
          %2000 = vst [vmem:[#allocation2 + $0x108] sm:$0xff] %v1968
          %2001 = vst [vmem:[#allocation2 + $0x150] sm:$0xff] %v1969
          %2002 = vst [vmem:[#allocation2 + $0x198] sm:$0xff] %v1970
          %2003 = vst [vmem:[#allocation2 + $0x1e0] sm:$0xff] %v1971
          %2004 = vst [vmem:[#allocation2 + $0x228] sm:$0xff] %v1972
          %2005 = vst [vmem:[#allocation2 + $0x270] sm:$0xff] %v1973
          %2006 = vst [vmem:[#allocation2 + $0x2b8] sm:$0xff] %v1974
          %2007 = vst [vmem:[#allocation2 + $0x300] sm:$0xff] %v1975
          %2008 = vst [vmem:[#allocation2 + $0x348] sm:$0xff] %v1976
          %2009 = vst [vmem:[#allocation2 + $0x390] sm:$0xff] %v1977
          %2010 = vst [vmem:[#allocation2 + $0x3d8] sm:$0xff] %v1978
          %2011 = vst [vmem:[#allocation2 + $0x420] sm:$0xff] %v1979
          %2012 = vst [vmem:[#allocation2 + $0x468] sm:$0xff] %v1980
          %v2014 = vshrl.u32 %v1853, 16
          %v2016 = vrot.slane %v2014, 4
          %v2017 = vshll.u32 %v1853, 16
          %v2019 = vrot.slane %v2017, 5
          %v2020 = vor.u32 %v2016, %v2019
          %v2021 = vrot.slane %v2020, 4
          %v2023 = vshll.u32 %v1854, 16
          %v2025 = vrot.slane %v2023, 5
          %v2026 = vsel %vm337, %v2021, %v2025
          %v2027 = vshrl.u32 %v1854, 16
          %v2029 = vrot.slane %v2027, 4
          %v2030 = vor.u32 %v2029, %v2025
          %v2031 = vrot.slane %v2030, 4
          %v2033 = vshll.u32 %v1855, 16
          %v2035 = vrot.slane %v2033, 5
          %v2036 = vsel %vm337, %v2031, %v2035
          %v2038 = vshrl.u32 %v1856, 16
          %v2040 = vrot.slane %v2038, 4
          %v2041 = vshll.u32 %v1856, 16
          %v2043 = vrot.slane %v2041, 5
          %v2044 = vor.u32 %v2040, %v2043
          %v2045 = vrot.slane %v2044, 4
          %v2047 = vshll.u32 %v1857, 16
          %v2049 = vrot.slane %v2047, 5
          %v2050 = vsel %vm337, %v2045, %v2049
          %v2051 = vshrl.u32 %v1857, 16
          %v2053 = vrot.slane %v2051, 4
          %v2054 = vor.u32 %v2053, %v2049
          %v2055 = vrot.slane %v2054, 4
          %v2057 = vshll.u32 %v1858, 16
          %v2059 = vrot.slane %v2057, 5
          %v2060 = vsel %vm337, %v2055, %v2059
          %v2062 = vshrl.u32 %v1859, 16
          %v2064 = vrot.slane %v2062, 4
          %v2065 = vshll.u32 %v1859, 16
          %v2067 = vrot.slane %v2065, 5
          %v2068 = vor.u32 %v2064, %v2067
          %v2069 = vrot.slane %v2068, 4
          %v2071 = vshll.u32 %v1860, 16
          %v2073 = vrot.slane %v2071, 5
          %v2074 = vsel %vm337, %v2069, %v2073
          %v2075 = vshrl.u32 %v1860, 16
          %v2077 = vrot.slane %v2075, 4
          %v2078 = vor.u32 %v2077, %v2073
          %v2079 = vrot.slane %v2078, 4
          %v2081 = vshll.u32 %v1861, 16
          %v2083 = vrot.slane %v2081, 5
          %v2084 = vsel %vm337, %v2079, %v2083
          %v2086 = vshrl.u32 %v1862, 16
          %v2088 = vrot.slane %v2086, 4
          %v2089 = vshll.u32 %v1862, 16
          %v2091 = vrot.slane %v2089, 5
          %v2092 = vor.u32 %v2088, %v2091
          %v2093 = vrot.slane %v2092, 4
          %v2095 = vshll.u32 %v1863, 16
          %v2097 = vrot.slane %v2095, 5
          %v2098 = vsel %vm337, %v2093, %v2097
          %v2099 = vshrl.u32 %v1863, 16
          %v2101 = vrot.slane %v2099, 4
          %v2102 = vor.u32 %v2101, %v2097
          %v2103 = vrot.slane %v2102, 4
          %v2105 = vshll.u32 %v1864, 16
          %v2107 = vrot.slane %v2105, 5
          %v2108 = vsel %vm337, %v2103, %v2107
          %v2110 = vshrl.u32 %v1865, 16
          %v2112 = vrot.slane %v2110, 4
          %v2113 = vshll.u32 %v1865, 16
          %v2115 = vrot.slane %v2113, 5
          %v2116 = vor.u32 %v2112, %v2115
          %v2117 = vrot.slane %v2116, 4
          %v2119 = vshll.u32 %v1866, 16
          %v2121 = vrot.slane %v2119, 5
          %v2122 = vsel %vm337, %v2117, %v2121
          %v2123 = vshrl.u32 %v1866, 16
          %v2125 = vrot.slane %v2123, 4
          %v2126 = vor.u32 %v2125, %v2121
          %v2127 = vrot.slane %v2126, 4
          %v2129 = vshll.u32 %v1867, 16
          %v2131 = vrot.slane %v2129, 5
          %v2132 = vsel %vm337, %v2127, %v2131
          %v2134 = vshrl.u32 %v1868, 16
          %v2136 = vrot.slane %v2134, 4
          %v2137 = vshll.u32 %v1868, 16
          %v2139 = vrot.slane %v2137, 5
          %v2140 = vor.u32 %v2136, %v2139
          %v2141 = vrot.slane %v2140, 4
          %v2143 = vshll.u32 %v1869, 16
          %v2145 = vrot.slane %v2143, 5
          %v2146 = vsel %vm337, %v2141, %v2145
          %v2147 = vshrl.u32 %v1869, 16
          %v2149 = vrot.slane %v2147, 4
          %v2150 = vor.u32 %v2149, %v2145
          %v2151 = vrot.slane %v2150, 4
          %v2153 = vshll.u32 %v1870, 16
          %v2155 = vrot.slane %v2153, 5
          %v2156 = vsel %vm337, %v2151, %v2155
          %v2158 = vshrl.u32 %v1871, 16
          %v2160 = vrot.slane %v2158, 4
          %v2161 = vshll.u32 %v1871, 16
          %v2163 = vrot.slane %v2161, 5
          %v2164 = vor.u32 %v2160, %v2163
          %v2165 = vrot.slane %v2164, 4
          %v2167 = vshll.u32 %v1872, 16
          %v2169 = vrot.slane %v2167, 5
          %v2170 = vsel %vm337, %v2165, %v2169
          %v2171 = vshrl.u32 %v1872, 16
          %v2173 = vrot.slane %v2171, 4
          %v2174 = vor.u32 %v2173, %v2169
          %v2175 = vrot.slane %v2174, 4
          %v2177 = vshll.u32 %v1873, 16
          %v2179 = vrot.slane %v2177, 5
          %v2180 = vsel %vm337, %v2175, %v2179
          %v2182 = vshrl.u32 %v1874, 16
          %v2184 = vrot.slane %v2182, 4
          %v2185 = vshll.u32 %v1874, 16
          %v2187 = vrot.slane %v2185, 5
          %v2188 = vor.u32 %v2184, %v2187
          %v2189 = vrot.slane %v2188, 4
          %v2191 = vshll.u32 %v1875, 16
          %v2193 = vrot.slane %v2191, 5
          %v2194 = vsel %vm337, %v2189, %v2193
          %v2195 = vshrl.u32 %v1875, 16
          %v2197 = vrot.slane %v2195, 4
          %v2198 = vor.u32 %v2197, %v2193
          %v2199 = vrot.slane %v2198, 4
          %v2201 = vshll.u32 %v1876, 16
          %v2203 = vrot.slane %v2201, 5
          %v2204 = vsel %vm337, %v2199, %v2203
          %v2206 = vshrl.u32 %v1877, 16
          %v2208 = vrot.slane %v2206, 4
          %v2209 = vshll.u32 %v1877, 16
          %v2211 = vrot.slane %v2209, 5
          %v2212 = vor.u32 %v2208, %v2211
          %v2213 = vrot.slane %v2212, 4
          %v2215 = vshll.u32 %v1878, 16
          %v2217 = vrot.slane %v2215, 5
          %v2218 = vsel %vm337, %v2213, %v2217
          %v2219 = vshrl.u32 %v1878, 16
          %v2221 = vrot.slane %v2219, 4
          %v2222 = vor.u32 %v2221, %v2217
          %v2223 = vrot.slane %v2222, 4
          %v2225 = vshll.u32 %v1879, 16
          %v2227 = vrot.slane %v2225, 5
          %v2228 = vsel %vm337, %v2223, %v2227
          %v2230 = vshrl.u32 %v1880, 16
          %v2232 = vrot.slane %v2230, 4
          %v2233 = vshll.u32 %v1880, 16
          %v2235 = vrot.slane %v2233, 5
          %v2236 = vor.u32 %v2232, %v2235
          %v2237 = vrot.slane %v2236, 4
          %v2239 = vshll.u32 %v1881, 16
          %v2241 = vrot.slane %v2239, 5
          %v2242 = vsel %vm337, %v2237, %v2241
          %v2243 = vshrl.u32 %v1881, 16
          %v2245 = vrot.slane %v2243, 4
          %v2246 = vor.u32 %v2245, %v2241
          %v2247 = vrot.slane %v2246, 4
          %v2249 = vshll.u32 %v1882, 16
          %v2251 = vrot.slane %v2249, 5
          %v2252 = vsel %vm337, %v2247, %v2251
          %v2254 = vshrl.u32 %v1883, 16
          %v2256 = vrot.slane %v2254, 4
          %v2257 = vshll.u32 %v1883, 16
          %v2259 = vrot.slane %v2257, 5
          %v2260 = vor.u32 %v2256, %v2259
          %v2261 = vrot.slane %v2260, 4
          %v2263 = vshll.u32 %v1884, 16
          %v2265 = vrot.slane %v2263, 5
          %v2266 = vsel %vm337, %v2261, %v2265
          %v2267 = vshrl.u32 %v1884, 16
          %v2269 = vrot.slane %v2267, 4
          %v2270 = vor.u32 %v2269, %v2265
          %v2271 = vrot.slane %v2270, 4
          %v2273 = vshll.u32 %v1885, 16
          %v2275 = vrot.slane %v2273, 5
          %v2276 = vsel %vm337, %v2271, %v2275
          %v2278 = vshrl.u32 %v1886, 16
          %v2280 = vrot.slane %v2278, 4
          %v2281 = vshll.u32 %v1886, 16
          %v2283 = vrot.slane %v2281, 5
          %v2284 = vor.u32 %v2280, %v2283
          %v2285 = vrot.slane %v2284, 4
          %v2287 = vshll.u32 %v1887, 16
          %v2289 = vrot.slane %v2287, 5
          %v2290 = vsel %vm337, %v2285, %v2289
          %v2291 = vshrl.u32 %v1887, 16
          %v2293 = vrot.slane %v2291, 4
          %v2294 = vor.u32 %v2293, %v2289
          %v2295 = vrot.slane %v2294, 4
          %v2297 = vshll.u32 %v1888, 16
          %v2299 = vrot.slane %v2297, 5
          %v2300 = vsel %vm337, %v2295, %v2299
          %v2302 = vshrl.u32 %v1889, 16
          %v2304 = vrot.slane %v2302, 4
          %v2305 = vshll.u32 %v1889, 16
          %v2307 = vrot.slane %v2305, 5
          %v2308 = vor.u32 %v2304, %v2307
          %v2309 = vrot.slane %v2308, 4
          %v2311 = vshll.u32 %v1890, 16
          %v2313 = vrot.slane %v2311, 5
          %v2314 = vsel %vm337, %v2309, %v2313
          %v2315 = vshrl.u32 %v1890, 16
          %v2317 = vrot.slane %v2315, 4
          %v2318 = vor.u32 %v2317, %v2313
          %v2319 = vrot.slane %v2318, 4
          %v2321 = vshll.u32 %v1891, 16
          %v2323 = vrot.slane %v2321, 5
          %v2324 = vsel %vm337, %v2319, %v2323
          %v2326 = vshrl.u32 %v1892, 16
          %v2328 = vrot.slane %v2326, 4
          %v2329 = vshll.u32 %v1892, 16
          %v2331 = vrot.slane %v2329, 5
          %v2332 = vor.u32 %v2328, %v2331
          %v2333 = vrot.slane %v2332, 4
          %v2335 = vshll.u32 %v1893, 16
          %v2337 = vrot.slane %v2335, 5
          %v2338 = vsel %vm337, %v2333, %v2337
          %v2339 = vshrl.u32 %v1893, 16
          %v2341 = vrot.slane %v2339, 4
          %v2342 = vor.u32 %v2341, %v2337
          %v2343 = vrot.slane %v2342, 4
          %v2345 = vshll.u32 %v1894, 16
          %v2347 = vrot.slane %v2345, 5
          %v2348 = vsel %vm337, %v2343, %v2347
          %v2350 = vshrl.u32 %v1895, 16
          %v2352 = vrot.slane %v2350, 4
          %v2353 = vshll.u32 %v1895, 16
          %v2355 = vrot.slane %v2353, 5
          %v2356 = vor.u32 %v2352, %v2355
          %v2357 = vrot.slane %v2356, 4
          %v2359 = vshll.u32 %v1896, 16
          %v2361 = vrot.slane %v2359, 5
          %v2362 = vsel %vm337, %v2357, %v2361
          %v2363 = vshrl.u32 %v1896, 16
          %v2365 = vrot.slane %v2363, 4
          %v2366 = vor.u32 %v2365, %v2361
          %v2367 = vrot.slane %v2366, 4
          %v2369 = vshll.u32 %v1897, 16
          %v2371 = vrot.slane %v2369, 5
          %v2372 = vsel %vm337, %v2367, %v2371
          %v2374 = vshrl.u32 %v1898, 16
          %v2376 = vrot.slane %v2374, 4
          %v2377 = vshll.u32 %v1898, 16
          %v2379 = vrot.slane %v2377, 5
          %v2380 = vor.u32 %v2376, %v2379
          %v2381 = vrot.slane %v2380, 4
          %v2383 = vshll.u32 %v1899, 16
          %v2385 = vrot.slane %v2383, 5
          %v2386 = vsel %vm337, %v2381, %v2385
          %v2387 = vshrl.u32 %v1899, 16
          %v2389 = vrot.slane %v2387, 4
          %v2390 = vor.u32 %v2389, %v2385
          %v2391 = vrot.slane %v2390, 4
          %v2393 = vshll.u32 %v1900, 16
          %v2395 = vrot.slane %v2393, 5
          %v2396 = vsel %vm337, %v2391, %v2395
          %v2397 = vunpack.c.l.b16 %v2026
          %v2398 = vunpack.c.l.b16 %v2036
          %v2399 = vunpack.c.l.b16 %v2050
          %v2400 = vunpack.c.l.b16 %v2060
          %v2401 = vunpack.c.l.b16 %v2074
          %v2402 = vunpack.c.l.b16 %v2084
          %v2403 = vunpack.c.l.b16 %v2098
          %v2404 = vunpack.c.l.b16 %v2108
          %v2405 = vunpack.c.l.b16 %v2122
          %v2406 = vunpack.c.l.b16 %v2132
          %v2407 = vunpack.c.l.b16 %v2146
          %v2408 = vunpack.c.l.b16 %v2156
          %v2409 = vunpack.c.l.b16 %v2170
          %v2410 = vunpack.c.l.b16 %v2180
          %v2411 = vunpack.c.l.b16 %v2194
          %v2412 = vunpack.c.l.b16 %v2204
          %v2413 = vunpack.c.l.b16 %v2218
          %v2414 = vunpack.c.l.b16 %v2228
          %v2415 = vunpack.c.l.b16 %v2242
          %v2416 = vunpack.c.l.b16 %v2252
          %v2417 = vunpack.c.l.b16 %v2266
          %v2418 = vunpack.c.l.b16 %v2276
          %v2419 = vunpack.c.l.b16 %v2290
          %v2420 = vunpack.c.l.b16 %v2300
          %v2421 = vunpack.c.l.b16 %v2314
          %v2422 = vunpack.c.l.b16 %v2324
          %v2423 = vunpack.c.l.b16 %v2338
          %v2424 = vunpack.c.l.b16 %v2348
          %v2425 = vunpack.c.l.b16 %v2362
          %v2426 = vunpack.c.l.b16 %v2372
          %v2427 = vunpack.c.l.b16 %v2386
          %v2428 = vunpack.c.l.b16 %v2396
          %v2429 = vpack.c.b16 %v2398, %v2397
          %v2430 = vpack.c.b16 %v2400, %v2399
          %v2431 = vpack.c.b16 %v2402, %v2401
          %v2432 = vpack.c.b16 %v2404, %v2403
          %v2433 = vpack.c.b16 %v2406, %v2405
          %v2434 = vpack.c.b16 %v2408, %v2407
          %v2435 = vpack.c.b16 %v2410, %v2409
          %v2436 = vpack.c.b16 %v2412, %v2411
          %v2437 = vpack.c.b16 %v2414, %v2413
          %v2438 = vpack.c.b16 %v2416, %v2415
          %v2439 = vpack.c.b16 %v2418, %v2417
          %v2440 = vpack.c.b16 %v2420, %v2419
          %v2441 = vpack.c.b16 %v2422, %v2421
          %v2442 = vpack.c.b16 %v2424, %v2423
          %v2443 = vpack.c.b16 %v2426, %v2425
          %v2444 = vpack.c.b16 %v2428, %v2427
          %2461 = vst [vmem:[#allocation2 + $0x38] sm:$0xff] %v2429
          %2462 = vst [vmem:[#allocation2 + $0x80] sm:$0xff] %v2430
          %2463 = vst [vmem:[#allocation2 + $0xc8] sm:$0xff] %v2431
          %2464 = vst [vmem:[#allocation2 + $0x110] sm:$0xff] %v2432
          %2465 = vst [vmem:[#allocation2 + $0x158] sm:$0xff] %v2433
          %2466 = vst [vmem:[#allocation2 + $0x1a0] sm:$0xff] %v2434
          %2467 = vst [vmem:[#allocation2 + $0x1e8] sm:$0xff] %v2435
          %2468 = vst [vmem:[#allocation2 + $0x230] sm:$0xff] %v2436
          %2469 = vst [vmem:[#allocation2 + $0x278] sm:$0xff] %v2437
          %2470 = vst [vmem:[#allocation2 + $0x2c0] sm:$0xff] %v2438
          %2471 = vst [vmem:[#allocation2 + $0x308] sm:$0xff] %v2439
          %2472 = vst [vmem:[#allocation2 + $0x350] sm:$0xff] %v2440
          %2473 = vst [vmem:[#allocation2 + $0x398] sm:$0xff] %v2441
          %2474 = vst [vmem:[#allocation2 + $0x3e0] sm:$0xff] %v2442
          %2475 = vst [vmem:[#allocation2 + $0x428] sm:$0xff] %v2443
          %2476 = vst [vmem:[#allocation2 + $0x470] sm:$0xff] %v2444
          %v2493 = vrot.slane %v1853, 5
          %v2494 = vrot.slane %v2493, 4
          %v2495 = vrot.slane %v1854, 5
          %v2496 = vsel %vm820, %v2494, %v2495
          %v2497 = vrot.slane %v2495, 4
          %v2498 = vrot.slane %v1855, 5
          %v2499 = vsel %vm820, %v2497, %v2498
          %v2500 = vrot.slane %v1856, 5
          %v2501 = vrot.slane %v2500, 4
          %v2502 = vrot.slane %v1857, 5
          %v2503 = vsel %vm820, %v2501, %v2502
          %v2504 = vrot.slane %v2502, 4
          %v2505 = vrot.slane %v1858, 5
          %v2506 = vsel %vm820, %v2504, %v2505
          %v2507 = vrot.slane %v1859, 5
          %v2508 = vrot.slane %v2507, 4
          %v2509 = vrot.slane %v1860, 5
          %v2510 = vsel %vm820, %v2508, %v2509
          %v2511 = vrot.slane %v2509, 4
          %v2512 = vrot.slane %v1861, 5
          %v2513 = vsel %vm820, %v2511, %v2512
          %v2514 = vrot.slane %v1862, 5
          %v2515 = vrot.slane %v2514, 4
          %v2516 = vrot.slane %v1863, 5
          %v2517 = vsel %vm820, %v2515, %v2516
          %v2518 = vrot.slane %v2516, 4
          %v2519 = vrot.slane %v1864, 5
          %v2520 = vsel %vm820, %v2518, %v2519
          %v2521 = vrot.slane %v1865, 5
          %v2522 = vrot.slane %v2521, 4
          %v2523 = vrot.slane %v1866, 5
          %v2524 = vsel %vm820, %v2522, %v2523
          %v2525 = vrot.slane %v2523, 4
          %v2526 = vrot.slane %v1867, 5
          %v2527 = vsel %vm820, %v2525, %v2526
          %v2528 = vrot.slane %v1868, 5
          %v2529 = vrot.slane %v2528, 4
          %v2530 = vrot.slane %v1869, 5
          %v2531 = vsel %vm820, %v2529, %v2530
          %v2532 = vrot.slane %v2530, 4
          %v2533 = vrot.slane %v1870, 5
          %v2534 = vsel %vm820, %v2532, %v2533
          %v2535 = vrot.slane %v1871, 5
          %v2536 = vrot.slane %v2535, 4
          %v2537 = vrot.slane %v1872, 5
          %v2538 = vsel %vm820, %v2536, %v2537
          %v2539 = vrot.slane %v2537, 4
          %v2540 = vrot.slane %v1873, 5
          %v2541 = vsel %vm820, %v2539, %v2540
          %v2542 = vrot.slane %v1874, 5
          %v2543 = vrot.slane %v2542, 4
          %v2544 = vrot.slane %v1875, 5
          %v2545 = vsel %vm820, %v2543, %v2544
          %v2546 = vrot.slane %v2544, 4
          %v2547 = vrot.slane %v1876, 5
          %v2548 = vsel %vm820, %v2546, %v2547
          %v2549 = vrot.slane %v1877, 5
          %v2550 = vrot.slane %v2549, 4
          %v2551 = vrot.slane %v1878, 5
          %v2552 = vsel %vm820, %v2550, %v2551
          %v2553 = vrot.slane %v2551, 4
          %v2554 = vrot.slane %v1879, 5
          %v2555 = vsel %vm820, %v2553, %v2554
          %v2556 = vrot.slane %v1880, 5
          %v2557 = vrot.slane %v2556, 4
          %v2558 = vrot.slane %v1881, 5
          %v2559 = vsel %vm820, %v2557, %v2558
          %v2560 = vrot.slane %v2558, 4
          %v2561 = vrot.slane %v1882, 5
          %v2562 = vsel %vm820, %v2560, %v2561
          %v2563 = vrot.slane %v1883, 5
          %v2564 = vrot.slane %v2563, 4
          %v2565 = vrot.slane %v1884, 5
          %v2566 = vsel %vm820, %v2564, %v2565
          %v2567 = vrot.slane %v2565, 4
          %v2568 = vrot.slane %v1885, 5
          %v2569 = vsel %vm820, %v2567, %v2568
          %v2570 = vrot.slane %v1886, 5
          %v2571 = vrot.slane %v2570, 4
          %v2572 = vrot.slane %v1887, 5
          %v2573 = vsel %vm820, %v2571, %v2572
          %v2574 = vrot.slane %v2572, 4
          %v2575 = vrot.slane %v1888, 5
          %v2576 = vsel %vm820, %v2574, %v2575
          %v2577 = vrot.slane %v1889, 5
          %v2578 = vrot.slane %v2577, 4
          %v2579 = vrot.slane %v1890, 5
          %v2580 = vsel %vm820, %v2578, %v2579
          %v2581 = vrot.slane %v2579, 4
          %v2582 = vrot.slane %v1891, 5
          %v2583 = vsel %vm820, %v2581, %v2582
          %v2584 = vrot.slane %v1892, 5
          %v2585 = vrot.slane %v2584, 4
          %v2586 = vrot.slane %v1893, 5
          %v2587 = vsel %vm820, %v2585, %v2586
          %v2588 = vrot.slane %v2586, 4
          %v2589 = vrot.slane %v1894, 5
          %v2590 = vsel %vm820, %v2588, %v2589
          %v2591 = vrot.slane %v1895, 5
          %v2592 = vrot.slane %v2591, 4
          %v2593 = vrot.slane %v1896, 5
          %v2594 = vsel %vm820, %v2592, %v2593
          %v2595 = vrot.slane %v2593, 4
          %v2596 = vrot.slane %v1897, 5
          %v2597 = vsel %vm820, %v2595, %v2596
          %v2598 = vrot.slane %v1898, 5
          %v2599 = vrot.slane %v2598, 4
          %v2600 = vrot.slane %v1899, 5
          %v2601 = vsel %vm820, %v2599, %v2600
          %v2602 = vrot.slane %v2600, 4
          %v2603 = vrot.slane %v1900, 5
          %v2604 = vsel %vm820, %v2602, %v2603
          %v2605 = vunpack.c.l.b16 %v2496
          %v2606 = vunpack.c.l.b16 %v2499
          %v2607 = vunpack.c.l.b16 %v2503
          %v2608 = vunpack.c.l.b16 %v2506
          %v2609 = vunpack.c.l.b16 %v2510
          %v2610 = vunpack.c.l.b16 %v2513
          %v2611 = vunpack.c.l.b16 %v2517
          %v2612 = vunpack.c.l.b16 %v2520
          %v2613 = vunpack.c.l.b16 %v2524
          %v2614 = vunpack.c.l.b16 %v2527
          %v2615 = vunpack.c.l.b16 %v2531
          %v2616 = vunpack.c.l.b16 %v2534
          %v2617 = vunpack.c.l.b16 %v2538
          %v2618 = vunpack.c.l.b16 %v2541
          %v2619 = vunpack.c.l.b16 %v2545
          %v2620 = vunpack.c.l.b16 %v2548
          %v2621 = vunpack.c.l.b16 %v2552
          %v2622 = vunpack.c.l.b16 %v2555
          %v2623 = vunpack.c.l.b16 %v2559
          %v2624 = vunpack.c.l.b16 %v2562
          %v2625 = vunpack.c.l.b16 %v2566
          %v2626 = vunpack.c.l.b16 %v2569
          %v2627 = vunpack.c.l.b16 %v2573
          %v2628 = vunpack.c.l.b16 %v2576
          %v2629 = vunpack.c.l.b16 %v2580
          %v2630 = vunpack.c.l.b16 %v2583
          %v2631 = vunpack.c.l.b16 %v2587
          %v2632 = vunpack.c.l.b16 %v2590
          %v2633 = vunpack.c.l.b16 %v2594
          %v2634 = vunpack.c.l.b16 %v2597
          %v2635 = vunpack.c.l.b16 %v2601
          %v2636 = vunpack.c.l.b16 %v2604
          %v2637 = vpack.c.b16 %v2606, %v2605
          %v2638 = vpack.c.b16 %v2608, %v2607
          %v2639 = vpack.c.b16 %v2610, %v2609
          %v2640 = vpack.c.b16 %v2612, %v2611
          %v2641 = vpack.c.b16 %v2614, %v2613
          %v2642 = vpack.c.b16 %v2616, %v2615
          %v2643 = vpack.c.b16 %v2618, %v2617
          %v2644 = vpack.c.b16 %v2620, %v2619
          %v2645 = vpack.c.b16 %v2622, %v2621
          %v2646 = vpack.c.b16 %v2624, %v2623
          %v2647 = vpack.c.b16 %v2626, %v2625
          %v2648 = vpack.c.b16 %v2628, %v2627
          %v2649 = vpack.c.b16 %v2630, %v2629
          %v2650 = vpack.c.b16 %v2632, %v2631
          %v2651 = vpack.c.b16 %v2634, %v2633
          %v2652 = vpack.c.b16 %v2636, %v2635
          %2669 = vst [vmem:[#allocation2 + $0x40] sm:$0xff] %v2637
          %2670 = vst [vmem:[#allocation2 + $0x88] sm:$0xff] %v2638
          %2671 = vst [vmem:[#allocation2 + $0xd0] sm:$0xff] %v2639
          %2672 = vst [vmem:[#allocation2 + $0x118] sm:$0xff] %v2640
          %2673 = vst [vmem:[#allocation2 + $0x160] sm:$0xff] %v2641
          %2674 = vst [vmem:[#allocation2 + $0x1a8] sm:$0xff] %v2642
          %2675 = vst [vmem:[#allocation2 + $0x1f0] sm:$0xff] %v2643
          %2676 = vst [vmem:[#allocation2 + $0x238] sm:$0xff] %v2644
          %2677 = vst [vmem:[#allocation2 + $0x280] sm:$0xff] %v2645
          %2678 = vst [vmem:[#allocation2 + $0x2c8] sm:$0xff] %v2646
          %2679 = vst [vmem:[#allocation2 + $0x310] sm:$0xff] %v2647
          %2680 = vst [vmem:[#allocation2 + $0x358] sm:$0xff] %v2648
          %2681 = vst [vmem:[#allocation2 + $0x3a0] sm:$0xff] %v2649
          %2682 = vst [vmem:[#allocation2 + $0x3e8] sm:$0xff] %v2650
          %2683 = vst [vmem:[#allocation2 + $0x430] sm:$0xff] %v2651
          %2684 = vst [vmem:[#allocation2 + $0x478] sm:$0xff] %v2652
        $region32: #{tpu_custom_call.1} parent=27 // pred_fallthru
          _
        %v2685 = vld [vmem:[#allocation2] sm:$0xff]
        %v2686 = vld [vmem:[#allocation2 + $0x8] sm:$0xff]
        %v2687 = vld [vmem:[#allocation2 + $0x10] sm:$0xff]
        %v2688 = vld [vmem:[#allocation2 + $0x18] sm:$0xff]
        %v2689 = vld [vmem:[#allocation2 + $0x20] sm:$0xff]
        %v2690 = vld [vmem:[#allocation2 + $0x28] sm:$0xff]
        %v2691 = vld [vmem:[#allocation2 + $0x30] sm:$0xff]
        %v2692 = vld [vmem:[#allocation2 + $0x38] sm:$0xff]
        %v2693 = vld [vmem:[#allocation2 + $0x40] sm:$0xff]
        %v2694 = vld [vmem:[#allocation2 + $0x48] sm:$0xff]
        %v2695 = vld [vmem:[#allocation2 + $0x50] sm:$0xff]
        %v2696 = vld [vmem:[#allocation2 + $0x58] sm:$0xff]
        %v2697 = vld [vmem:[#allocation2 + $0x60] sm:$0xff]
        %v2698 = vld [vmem:[#allocation2 + $0x68] sm:$0xff]
        %v2699 = vld [vmem:[#allocation2 + $0x70] sm:$0xff]
        %v2700 = vld [vmem:[#allocation2 + $0x78] sm:$0xff]
        %v2701 = vld [vmem:[#allocation2 + $0x80] sm:$0xff]
        %v2702 = vld [vmem:[#allocation2 + $0x88] sm:$0xff]
        %v2703 = vld [vmem:[#allocation2 + $0x90] sm:$0xff]
        %v2704 = vld [vmem:[#allocation2 + $0x98] sm:$0xff]
        %v2705 = vld [vmem:[#allocation2 + $0xa0] sm:$0xff]
        %v2706 = vld [vmem:[#allocation2 + $0xa8] sm:$0xff]
        %v2707 = vld [vmem:[#allocation2 + $0xb0] sm:$0xff]
        %v2708 = vld [vmem:[#allocation2 + $0xb8] sm:$0xff]
        %v2709 = vld [vmem:[#allocation2 + $0xc0] sm:$0xff]
        %v2710 = vld [vmem:[#allocation2 + $0xc8] sm:$0xff]
        %v2711 = vld [vmem:[#allocation2 + $0xd0] sm:$0xff]
        %v2712 = vld [vmem:[#allocation2 + $0xd8] sm:$0xff]
        %v2713 = vld [vmem:[#allocation2 + $0xe0] sm:$0xff]
        %v2714 = vld [vmem:[#allocation2 + $0xe8] sm:$0xff]
        %v2715 = vld [vmem:[#allocation2 + $0xf0] sm:$0xff]
        %v2716 = vld [vmem:[#allocation2 + $0xf8] sm:$0xff]
        %v2717 = vld [vmem:[#allocation2 + $0x100] sm:$0xff]
        %v2718 = vld [vmem:[#allocation2 + $0x108] sm:$0xff]
        %v2719 = vld [vmem:[#allocation2 + $0x110] sm:$0xff]
        %v2720 = vld [vmem:[#allocation2 + $0x118] sm:$0xff]
        %v2721 = vld [vmem:[#allocation2 + $0x120] sm:$0xff]
        %v2722 = vld [vmem:[#allocation2 + $0x128] sm:$0xff]
        %v2723 = vld [vmem:[#allocation2 + $0x130] sm:$0xff]
        %v2724 = vld [vmem:[#allocation2 + $0x138] sm:$0xff]
        %v2725 = vld [vmem:[#allocation2 + $0x140] sm:$0xff]
        %v2726 = vld [vmem:[#allocation2 + $0x148] sm:$0xff]
        %v2727 = vld [vmem:[#allocation2 + $0x150] sm:$0xff]
        %v2728 = vld [vmem:[#allocation2 + $0x158] sm:$0xff]
        %v2729 = vld [vmem:[#allocation2 + $0x160] sm:$0xff]
        %v2730 = vld [vmem:[#allocation2 + $0x168] sm:$0xff]
        %v2731 = vld [vmem:[#allocation2 + $0x170] sm:$0xff]
        %v2732 = vld [vmem:[#allocation2 + $0x178] sm:$0xff]
        %v2733 = vld [vmem:[#allocation2 + $0x180] sm:$0xff]
        %v2734 = vld [vmem:[#allocation2 + $0x188] sm:$0xff]
        %v2735 = vld [vmem:[#allocation2 + $0x190] sm:$0xff]
        %v2736 = vld [vmem:[#allocation2 + $0x198] sm:$0xff]
        %v2737 = vld [vmem:[#allocation2 + $0x1a0] sm:$0xff]
        %v2738 = vld [vmem:[#allocation2 + $0x1a8] sm:$0xff]
        %v2739 = vld [vmem:[#allocation2 + $0x1b0] sm:$0xff]
        %v2740 = vld [vmem:[#allocation2 + $0x1b8] sm:$0xff]
        %v2741 = vld [vmem:[#allocation2 + $0x1c0] sm:$0xff]
        %v2742 = vld [vmem:[#allocation2 + $0x1c8] sm:$0xff]
        %v2743 = vld [vmem:[#allocation2 + $0x1d0] sm:$0xff]
        %v2744 = vld [vmem:[#allocation2 + $0x1d8] sm:$0xff]
        %v2745 = vld [vmem:[#allocation2 + $0x1e0] sm:$0xff]
        %v2746 = vld [vmem:[#allocation2 + $0x1e8] sm:$0xff]
        %v2747 = vld [vmem:[#allocation2 + $0x1f0] sm:$0xff]
        %v2748 = vld [vmem:[#allocation2 + $0x1f8] sm:$0xff]
        %v2749 = vld [vmem:[#allocation2 + $0x200] sm:$0xff]
        %v2750 = vld [vmem:[#allocation2 + $0x208] sm:$0xff]
        %v2751 = vld [vmem:[#allocation2 + $0x210] sm:$0xff]
        %v2752 = vld [vmem:[#allocation2 + $0x218] sm:$0xff]
        %v2753 = vld [vmem:[#allocation2 + $0x220] sm:$0xff]
        %v2754 = vld [vmem:[#allocation2 + $0x228] sm:$0xff]
        %v2755 = vld [vmem:[#allocation2 + $0x230] sm:$0xff]
        %v2756 = vld [vmem:[#allocation2 + $0x238] sm:$0xff]
        %v2757 = vld [vmem:[#allocation2 + $0x240] sm:$0xff]
        %v2758 = vld [vmem:[#allocation2 + $0x248] sm:$0xff]
        %v2759 = vld [vmem:[#allocation2 + $0x250] sm:$0xff]
        %v2760 = vld [vmem:[#allocation2 + $0x258] sm:$0xff]
        %v2761 = vld [vmem:[#allocation2 + $0x260] sm:$0xff]
        %v2762 = vld [vmem:[#allocation2 + $0x268] sm:$0xff]
        %v2763 = vld [vmem:[#allocation2 + $0x270] sm:$0xff]
        %v2764 = vld [vmem:[#allocation2 + $0x278] sm:$0xff]
        %v2765 = vld [vmem:[#allocation2 + $0x280] sm:$0xff]
        %v2766 = vld [vmem:[#allocation2 + $0x288] sm:$0xff]
        %v2767 = vld [vmem:[#allocation2 + $0x290] sm:$0xff]
        %v2768 = vld [vmem:[#allocation2 + $0x298] sm:$0xff]
        %v2769 = vld [vmem:[#allocation2 + $0x2a0] sm:$0xff]
        %v2770 = vld [vmem:[#allocation2 + $0x2a8] sm:$0xff]
        %v2771 = vld [vmem:[#allocation2 + $0x2b0] sm:$0xff]
        %v2772 = vld [vmem:[#allocation2 + $0x2b8] sm:$0xff]
        %v2773 = vld [vmem:[#allocation2 + $0x2c0] sm:$0xff]
        %v2774 = vld [vmem:[#allocation2 + $0x2c8] sm:$0xff]
        %v2775 = vld [vmem:[#allocation2 + $0x2d0] sm:$0xff]
        %v2776 = vld [vmem:[#allocation2 + $0x2d8] sm:$0xff]
        %v2777 = vld [vmem:[#allocation2 + $0x2e0] sm:$0xff]
        %v2778 = vld [vmem:[#allocation2 + $0x2e8] sm:$0xff]
        %v2779 = vld [vmem:[#allocation2 + $0x2f0] sm:$0xff]
        %v2780 = vld [vmem:[#allocation2 + $0x2f8] sm:$0xff]
        %v2781 = vld [vmem:[#allocation2 + $0x300] sm:$0xff]
        %v2782 = vld [vmem:[#allocation2 + $0x308] sm:$0xff]
        %v2783 = vld [vmem:[#allocation2 + $0x310] sm:$0xff]
        %v2784 = vld [vmem:[#allocation2 + $0x318] sm:$0xff]
        %v2785 = vld [vmem:[#allocation2 + $0x320] sm:$0xff]
        %v2786 = vld [vmem:[#allocation2 + $0x328] sm:$0xff]
        %v2787 = vld [vmem:[#allocation2 + $0x330] sm:$0xff]
        %v2788 = vld [vmem:[#allocation2 + $0x338] sm:$0xff]
        %v2789 = vld [vmem:[#allocation2 + $0x340] sm:$0xff]
        %v2790 = vld [vmem:[#allocation2 + $0x348] sm:$0xff]
        %v2791 = vld [vmem:[#allocation2 + $0x350] sm:$0xff]
        %v2792 = vld [vmem:[#allocation2 + $0x358] sm:$0xff]
        %v2793 = vld [vmem:[#allocation2 + $0x360] sm:$0xff]
        %v2794 = vld [vmem:[#allocation2 + $0x368] sm:$0xff]
        %v2795 = vld [vmem:[#allocation2 + $0x370] sm:$0xff]
        %v2796 = vld [vmem:[#allocation2 + $0x378] sm:$0xff]
        %v2797 = vld [vmem:[#allocation2 + $0x380] sm:$0xff]
        %v2798 = vld [vmem:[#allocation2 + $0x388] sm:$0xff]
        %v2799 = vld [vmem:[#allocation2 + $0x390] sm:$0xff]
        %v2800 = vld [vmem:[#allocation2 + $0x398] sm:$0xff]
        %v2801 = vld [vmem:[#allocation2 + $0x3a0] sm:$0xff]
        %v2802 = vld [vmem:[#allocation2 + $0x3a8] sm:$0xff]
        %v2803 = vld [vmem:[#allocation2 + $0x3b0] sm:$0xff]
        %v2804 = vld [vmem:[#allocation2 + $0x3b8] sm:$0xff]
        %v2805 = vld [vmem:[#allocation2 + $0x3c0] sm:$0xff]
        %v2806 = vld [vmem:[#allocation2 + $0x3c8] sm:$0xff]
        %v2807 = vld [vmem:[#allocation2 + $0x3d0] sm:$0xff]
        %v2808 = vld [vmem:[#allocation2 + $0x3d8] sm:$0xff]
        %v2809 = vld [vmem:[#allocation2 + $0x3e0] sm:$0xff]
        %v2810 = vld [vmem:[#allocation2 + $0x3e8] sm:$0xff]
        %v2811 = vld [vmem:[#allocation2 + $0x3f0] sm:$0xff]
        %v2812 = vld [vmem:[#allocation2 + $0x3f8] sm:$0xff]
        %v2813 = vld [vmem:[#allocation2 + $0x400] sm:$0xff]
        %v2814 = vld [vmem:[#allocation2 + $0x408] sm:$0xff]
        %v2815 = vld [vmem:[#allocation2 + $0x410] sm:$0xff]
        %v2816 = vld [vmem:[#allocation2 + $0x418] sm:$0xff]
        %v2817 = vld [vmem:[#allocation2 + $0x420] sm:$0xff]
        %v2818 = vld [vmem:[#allocation2 + $0x428] sm:$0xff]
        %v2819 = vld [vmem:[#allocation2 + $0x430] sm:$0xff]
        %v2820 = vld [vmem:[#allocation2 + $0x438] sm:$0xff]
        %v2821 = vld [vmem:[#allocation2 + $0x440] sm:$0xff]
        %v2822 = vld [vmem:[#allocation2 + $0x448] sm:$0xff]
        %v2823 = vld [vmem:[#allocation2 + $0x450] sm:$0xff]
        %v2824 = vld [vmem:[#allocation2 + $0x458] sm:$0xff]
        %v2825 = vld [vmem:[#allocation2 + $0x460] sm:$0xff]
        %v2826 = vld [vmem:[#allocation2 + $0x468] sm:$0xff]
        %v2827 = vld [vmem:[#allocation2 + $0x470] sm:$0xff]
        %v2828 = vld [vmem:[#allocation2 + $0x478] sm:$0xff]
        %s2829 = smul.u32 %s23, 144
        %s2830 = smul.addr %s2829, 4
        %s2831 = scalar_lea.vmem %s1, %s2830
        %v2832 = vld [vmem:[%s2831] sm:$0xf]
        %v2833 = vld [vmem:[%s2831 + $0x4] sm:$0xf]
        %v2834 = vld [vmem:[%s2831 + $0x8] sm:$0xf]
        %v2835 = vld [vmem:[%s2831 + $0xc] sm:$0xf]
        %v2836 = vld [vmem:[%s2831 + $0x10] sm:$0xf]
        %v2837 = vld [vmem:[%s2831 + $0x14] sm:$0xf]
        %v2838 = vld [vmem:[%s2831 + $0x18] sm:$0xf]
        %v2839 = vld [vmem:[%s2831 + $0x1c] sm:$0xf]
        %v2840 = vld [vmem:[%s2831 + $0x20] sm:$0xf]
        %v2841 = vld [vmem:[%s2831 + $0x24] sm:$0xf]
        %v2842 = vld [vmem:[%s2831 + $0x28] sm:$0xf]
        %v2843 = vld [vmem:[%s2831 + $0x2c] sm:$0xf]
        %v2844 = vld [vmem:[%s2831 + $0x30] sm:$0xf]
        %v2845 = vld [vmem:[%s2831 + $0x34] sm:$0xf]
        %v2846 = vld [vmem:[%s2831 + $0x38] sm:$0xf]
        %v2847 = vld [vmem:[%s2831 + $0x3c] sm:$0xf]
        %v2848 = vld [vmem:[%s2831 + $0x40] sm:$0xf]
        %v2849 = vld [vmem:[%s2831 + $0x44] sm:$0xf]
        %v2850 = vld [vmem:[%s2831 + $0x48] sm:$0xf]
        %v2851 = vld [vmem:[%s2831 + $0x4c] sm:$0xf]
        %v2852 = vld [vmem:[%s2831 + $0x50] sm:$0xf]
        %v2853 = vld [vmem:[%s2831 + $0x54] sm:$0xf]
        %v2854 = vld [vmem:[%s2831 + $0x58] sm:$0xf]
        %v2855 = vld [vmem:[%s2831 + $0x5c] sm:$0xf]
        %v2856 = vld [vmem:[%s2831 + $0x60] sm:$0xf]
        %v2857 = vld [vmem:[%s2831 + $0x64] sm:$0xf]
        %v2858 = vld [vmem:[%s2831 + $0x68] sm:$0xf]
        %v2859 = vld [vmem:[%s2831 + $0x6c] sm:$0xf]
        %v2860 = vld [vmem:[%s2831 + $0x70] sm:$0xf]
        %v2861 = vld [vmem:[%s2831 + $0x74] sm:$0xf]
        %v2862 = vld [vmem:[%s2831 + $0x78] sm:$0xf]
        %v2863 = vld [vmem:[%s2831 + $0x7c] sm:$0xf]
        %v2864 = vld [vmem:[%s2831 + $0x80] sm:$0xf]
        %v2865 = vld [vmem:[%s2831 + $0x84] sm:$0xf]
        %v2866 = vld [vmem:[%s2831 + $0x88] sm:$0xf]
        %v2867 = vld [vmem:[%s2831 + $0x8c] sm:$0xf]
        %v2868 = vld [vmem:[%s2831 + $0x90] sm:$0xf]
        %v2869 = vld [vmem:[%s2831 + $0x94] sm:$0xf]
        %v2870 = vld [vmem:[%s2831 + $0x98] sm:$0xf]
        %v2871 = vld [vmem:[%s2831 + $0x9c] sm:$0xf]
        %v2872 = vld [vmem:[%s2831 + $0xa0] sm:$0xf]
        %v2873 = vld [vmem:[%s2831 + $0xa4] sm:$0xf]
        %v2874 = vld [vmem:[%s2831 + $0xa8] sm:$0xf]
        %v2875 = vld [vmem:[%s2831 + $0xac] sm:$0xf]
        %v2876 = vld [vmem:[%s2831 + $0xb0] sm:$0xf]
        %v2877 = vld [vmem:[%s2831 + $0xb4] sm:$0xf]
        %v2878 = vld [vmem:[%s2831 + $0xb8] sm:$0xf]
        %v2879 = vld [vmem:[%s2831 + $0xbc] sm:$0xf]
        %v2880 = vld [vmem:[%s2831 + $0xc0] sm:$0xf]
        %v2881 = vld [vmem:[%s2831 + $0xc4] sm:$0xf]
        %v2882 = vld [vmem:[%s2831 + $0xc8] sm:$0xf]
        %v2883 = vld [vmem:[%s2831 + $0xcc] sm:$0xf]
        %v2884 = vld [vmem:[%s2831 + $0xd0] sm:$0xf]
        %v2885 = vld [vmem:[%s2831 + $0xd4] sm:$0xf]
        %v2886 = vld [vmem:[%s2831 + $0xd8] sm:$0xf]
        %v2887 = vld [vmem:[%s2831 + $0xdc] sm:$0xf]
        %v2888 = vld [vmem:[%s2831 + $0xe0] sm:$0xf]
        %v2889 = vld [vmem:[%s2831 + $0xe4] sm:$0xf]
        %v2890 = vld [vmem:[%s2831 + $0xe8] sm:$0xf]
        %v2891 = vld [vmem:[%s2831 + $0xec] sm:$0xf]
        %v2892 = vld [vmem:[%s2831 + $0xf0] sm:$0xf]
        %v2893 = vld [vmem:[%s2831 + $0xf4] sm:$0xf]
        %v2894 = vld [vmem:[%s2831 + $0xf8] sm:$0xf]
        %v2895 = vld [vmem:[%s2831 + $0xfc] sm:$0xf]
        %v2896 = vld [vmem:[%s2831 + $0x100] sm:$0xf]
        %v2897 = vld [vmem:[%s2831 + $0x104] sm:$0xf]
        %v2898 = vld [vmem:[%s2831 + $0x108] sm:$0xf]
        %v2899 = vld [vmem:[%s2831 + $0x10c] sm:$0xf]
        %v2900 = vld [vmem:[%s2831 + $0x110] sm:$0xf]
        %v2901 = vld [vmem:[%s2831 + $0x114] sm:$0xf]
        %v2902 = vld [vmem:[%s2831 + $0x118] sm:$0xf]
        %v2903 = vld [vmem:[%s2831 + $0x11c] sm:$0xf]
        %v2904 = vld [vmem:[%s2831 + $0x120] sm:$0xf]
        %v2905 = vld [vmem:[%s2831 + $0x124] sm:$0xf]
        %v2906 = vld [vmem:[%s2831 + $0x128] sm:$0xf]
        %v2907 = vld [vmem:[%s2831 + $0x12c] sm:$0xf]
        %v2908 = vld [vmem:[%s2831 + $0x130] sm:$0xf]
        %v2909 = vld [vmem:[%s2831 + $0x134] sm:$0xf]
        %v2910 = vld [vmem:[%s2831 + $0x138] sm:$0xf]
        %v2911 = vld [vmem:[%s2831 + $0x13c] sm:$0xf]
        %v2912 = vld [vmem:[%s2831 + $0x140] sm:$0xf]
        %v2913 = vld [vmem:[%s2831 + $0x144] sm:$0xf]
        %v2914 = vld [vmem:[%s2831 + $0x148] sm:$0xf]
        %v2915 = vld [vmem:[%s2831 + $0x14c] sm:$0xf]
        %v2916 = vld [vmem:[%s2831 + $0x150] sm:$0xf]
        %v2917 = vld [vmem:[%s2831 + $0x154] sm:$0xf]
        %v2918 = vld [vmem:[%s2831 + $0x158] sm:$0xf]
        %v2919 = vld [vmem:[%s2831 + $0x15c] sm:$0xf]
        %v2920 = vld [vmem:[%s2831 + $0x160] sm:$0xf]
        %v2921 = vld [vmem:[%s2831 + $0x164] sm:$0xf]
        %v2922 = vld [vmem:[%s2831 + $0x168] sm:$0xf]
        %v2923 = vld [vmem:[%s2831 + $0x16c] sm:$0xf]
        %v2924 = vld [vmem:[%s2831 + $0x170] sm:$0xf]
        %v2925 = vld [vmem:[%s2831 + $0x174] sm:$0xf]
        %v2926 = vld [vmem:[%s2831 + $0x178] sm:$0xf]
        %v2927 = vld [vmem:[%s2831 + $0x17c] sm:$0xf]
        %v2928 = vld [vmem:[%s2831 + $0x180] sm:$0xf]
        %v2929 = vld [vmem:[%s2831 + $0x184] sm:$0xf]
        %v2930 = vld [vmem:[%s2831 + $0x188] sm:$0xf]
        %v2931 = vld [vmem:[%s2831 + $0x18c] sm:$0xf]
        %v2932 = vld [vmem:[%s2831 + $0x190] sm:$0xf]
        %v2933 = vld [vmem:[%s2831 + $0x194] sm:$0xf]
        %v2934 = vld [vmem:[%s2831 + $0x198] sm:$0xf]
        %v2935 = vld [vmem:[%s2831 + $0x19c] sm:$0xf]
        %v2936 = vld [vmem:[%s2831 + $0x1a0] sm:$0xf]
        %v2937 = vld [vmem:[%s2831 + $0x1a4] sm:$0xf]
        %v2938 = vld [vmem:[%s2831 + $0x1a8] sm:$0xf]
        %v2939 = vld [vmem:[%s2831 + $0x1ac] sm:$0xf]
        %v2940 = vld [vmem:[%s2831 + $0x1b0] sm:$0xf]
        %v2941 = vld [vmem:[%s2831 + $0x1b4] sm:$0xf]
        %v2942 = vld [vmem:[%s2831 + $0x1b8] sm:$0xf]
        %v2943 = vld [vmem:[%s2831 + $0x1bc] sm:$0xf]
        %v2944 = vld [vmem:[%s2831 + $0x1c0] sm:$0xf]
        %v2945 = vld [vmem:[%s2831 + $0x1c4] sm:$0xf]
        %v2946 = vld [vmem:[%s2831 + $0x1c8] sm:$0xf]
        %v2947 = vld [vmem:[%s2831 + $0x1cc] sm:$0xf]
        %v2948 = vld [vmem:[%s2831 + $0x1d0] sm:$0xf]
        %v2949 = vld [vmem:[%s2831 + $0x1d4] sm:$0xf]
        %v2950 = vld [vmem:[%s2831 + $0x1d8] sm:$0xf]
        %v2951 = vld [vmem:[%s2831 + $0x1dc] sm:$0xf]
        %v2952 = vld [vmem:[%s2831 + $0x1e0] sm:$0xf]
        %v2953 = vld [vmem:[%s2831 + $0x1e4] sm:$0xf]
        %v2954 = vld [vmem:[%s2831 + $0x1e8] sm:$0xf]
        %v2955 = vld [vmem:[%s2831 + $0x1ec] sm:$0xf]
        %v2956 = vld [vmem:[%s2831 + $0x1f0] sm:$0xf]
        %v2957 = vld [vmem:[%s2831 + $0x1f4] sm:$0xf]
        %v2958 = vld [vmem:[%s2831 + $0x1f8] sm:$0xf]
        %v2959 = vld [vmem:[%s2831 + $0x1fc] sm:$0xf]
        %v2960 = vld [vmem:[%s2831 + $0x200] sm:$0xf]
        %v2961 = vld [vmem:[%s2831 + $0x204] sm:$0xf]
        %v2962 = vld [vmem:[%s2831 + $0x208] sm:$0xf]
        %v2963 = vld [vmem:[%s2831 + $0x20c] sm:$0xf]
        %v2964 = vld [vmem:[%s2831 + $0x210] sm:$0xf]
        %v2965 = vld [vmem:[%s2831 + $0x214] sm:$0xf]
        %v2966 = vld [vmem:[%s2831 + $0x218] sm:$0xf]
        %v2967 = vld [vmem:[%s2831 + $0x21c] sm:$0xf]
        %v2968 = vld [vmem:[%s2831 + $0x220] sm:$0xf]
        %v2969 = vld [vmem:[%s2831 + $0x224] sm:$0xf]
        %v2970 = vld [vmem:[%s2831 + $0x228] sm:$0xf]
        %v2971 = vld [vmem:[%s2831 + $0x22c] sm:$0xf]
        %v2972 = vld [vmem:[%s2831 + $0x230] sm:$0xf]
        %v2973 = vld [vmem:[%s2831 + $0x234] sm:$0xf]
        %v2974 = vld [vmem:[%s2831 + $0x238] sm:$0xf]
        %v2975 = vld [vmem:[%s2831 + $0x23c] sm:$0xf]
        %v3120 = vunpack.c.l.b16 %v2832
        %v3121 = vunpack.c.l.b16 %v2833
        %v3122 = vunpack.c.l.b16 %v2834
        %v3123 = vunpack.c.l.b16 %v2835
        %v3124 = vunpack.c.l.b16 %v2836
        %v3125 = vunpack.c.l.b16 %v2837
        %v3126 = vunpack.c.l.b16 %v2838
        %v3127 = vunpack.c.l.b16 %v2839
        %v3128 = vunpack.c.l.b16 %v2840
        %v3129 = vunpack.c.l.b16 %v2841
        %v3130 = vunpack.c.l.b16 %v2842
        %v3131 = vunpack.c.l.b16 %v2843
        %v3132 = vunpack.c.l.b16 %v2844
        %v3133 = vunpack.c.l.b16 %v2845
        %v3134 = vunpack.c.l.b16 %v2846
        %v3135 = vunpack.c.l.b16 %v2847
        %v3136 = vunpack.c.l.b16 %v2848
        %v3137 = vunpack.c.l.b16 %v2849
        %v3138 = vunpack.c.l.b16 %v2850
        %v3139 = vunpack.c.l.b16 %v2851
        %v3140 = vunpack.c.l.b16 %v2852
        %v3141 = vunpack.c.l.b16 %v2853
        %v3142 = vunpack.c.l.b16 %v2854
        %v3143 = vunpack.c.l.b16 %v2855
        %v3144 = vunpack.c.l.b16 %v2856
        %v3145 = vunpack.c.l.b16 %v2857
        %v3146 = vunpack.c.l.b16 %v2858
        %v3147 = vunpack.c.l.b16 %v2859
        %v3148 = vunpack.c.l.b16 %v2860
        %v3149 = vunpack.c.l.b16 %v2861
        %v3150 = vunpack.c.l.b16 %v2862
        %v3151 = vunpack.c.l.b16 %v2863
        %v3152 = vunpack.c.l.b16 %v2864
        %v3153 = vunpack.c.l.b16 %v2865
        %v3154 = vunpack.c.l.b16 %v2866
        %v3155 = vunpack.c.l.b16 %v2867
        %v3156 = vunpack.c.l.b16 %v2868
        %v3157 = vunpack.c.l.b16 %v2869
        %v3158 = vunpack.c.l.b16 %v2870
        %v3159 = vunpack.c.l.b16 %v2871
        %v3160 = vunpack.c.l.b16 %v2872
        %v3161 = vunpack.c.l.b16 %v2873
        %v3162 = vunpack.c.l.b16 %v2874
        %v3163 = vunpack.c.l.b16 %v2875
        %v3164 = vunpack.c.l.b16 %v2876
        %v3165 = vunpack.c.l.b16 %v2877
        %v3166 = vunpack.c.l.b16 %v2878
        %v3167 = vunpack.c.l.b16 %v2879
        %v3168 = vunpack.c.l.b16 %v2880
        %v3169 = vunpack.c.l.b16 %v2881
        %v3170 = vunpack.c.l.b16 %v2882
        %v3171 = vunpack.c.l.b16 %v2883
        %v3172 = vunpack.c.l.b16 %v2884
        %v3173 = vunpack.c.l.b16 %v2885
        %v3174 = vunpack.c.l.b16 %v2886
        %v3175 = vunpack.c.l.b16 %v2887
        %v3176 = vunpack.c.l.b16 %v2888
        %v3177 = vunpack.c.l.b16 %v2889
        %v3178 = vunpack.c.l.b16 %v2890
        %v3179 = vunpack.c.l.b16 %v2891
        %v3180 = vunpack.c.l.b16 %v2892
        %v3181 = vunpack.c.l.b16 %v2893
        %v3182 = vunpack.c.l.b16 %v2894
        %v3183 = vunpack.c.l.b16 %v2895
        %v3184 = vunpack.c.l.b16 %v2896
        %v3185 = vunpack.c.l.b16 %v2897
        %v3186 = vunpack.c.l.b16 %v2898
        %v3187 = vunpack.c.l.b16 %v2899
        %v3188 = vunpack.c.l.b16 %v2900
        %v3189 = vunpack.c.l.b16 %v2901
        %v3190 = vunpack.c.l.b16 %v2902
        %v3191 = vunpack.c.l.b16 %v2903
        %v3192 = vunpack.c.l.b16 %v2904
        %v3193 = vunpack.c.l.b16 %v2905
        %v3194 = vunpack.c.l.b16 %v2906
        %v3195 = vunpack.c.l.b16 %v2907
        %v3196 = vunpack.c.l.b16 %v2908
        %v3197 = vunpack.c.l.b16 %v2909
        %v3198 = vunpack.c.l.b16 %v2910
        %v3199 = vunpack.c.l.b16 %v2911
        %v3200 = vunpack.c.l.b16 %v2912
        %v3201 = vunpack.c.l.b16 %v2913
        %v3202 = vunpack.c.l.b16 %v2914
        %v3203 = vunpack.c.l.b16 %v2915
        %v3204 = vunpack.c.l.b16 %v2916
        %v3205 = vunpack.c.l.b16 %v2917
        %v3206 = vunpack.c.l.b16 %v2918
        %v3207 = vunpack.c.l.b16 %v2919
        %v3208 = vunpack.c.l.b16 %v2920
        %v3209 = vunpack.c.l.b16 %v2921
        %v3210 = vunpack.c.l.b16 %v2922
        %v3211 = vunpack.c.l.b16 %v2923
        %v3212 = vunpack.c.l.b16 %v2924
        %v3213 = vunpack.c.l.b16 %v2925
        %v3214 = vunpack.c.l.b16 %v2926
        %v3215 = vunpack.c.l.b16 %v2927
        %v3216 = vunpack.c.l.b16 %v2928
        %v3217 = vunpack.c.l.b16 %v2929
        %v3218 = vunpack.c.l.b16 %v2930
        %v3219 = vunpack.c.l.b16 %v2931
        %v3220 = vunpack.c.l.b16 %v2932
        %v3221 = vunpack.c.l.b16 %v2933
        %v3222 = vunpack.c.l.b16 %v2934
        %v3223 = vunpack.c.l.b16 %v2935
        %v3224 = vunpack.c.l.b16 %v2936
        %v3225 = vunpack.c.l.b16 %v2937
        %v3226 = vunpack.c.l.b16 %v2938
        %v3227 = vunpack.c.l.b16 %v2939
        %v3228 = vunpack.c.l.b16 %v2940
        %v3229 = vunpack.c.l.b16 %v2941
        %v3230 = vunpack.c.l.b16 %v2942
        %v3231 = vunpack.c.l.b16 %v2943
        %v3232 = vunpack.c.l.b16 %v2944
        %v3233 = vunpack.c.l.b16 %v2945
        %v3234 = vunpack.c.l.b16 %v2946
        %v3235 = vunpack.c.l.b16 %v2947
        %v3236 = vunpack.c.l.b16 %v2948
        %v3237 = vunpack.c.l.b16 %v2949
        %v3238 = vunpack.c.l.b16 %v2950
        %v3239 = vunpack.c.l.b16 %v2951
        %v3240 = vunpack.c.l.b16 %v2952
        %v3241 = vunpack.c.l.b16 %v2953
        %v3242 = vunpack.c.l.b16 %v2954
        %v3243 = vunpack.c.l.b16 %v2955
        %v3244 = vunpack.c.l.b16 %v2956
        %v3245 = vunpack.c.l.b16 %v2957
        %v3246 = vunpack.c.l.b16 %v2958
        %v3247 = vunpack.c.l.b16 %v2959
        %v3248 = vunpack.c.l.b16 %v2960
        %v3249 = vunpack.c.l.b16 %v2961
        %v3250 = vunpack.c.l.b16 %v2962
        %v3251 = vunpack.c.l.b16 %v2963
        %v3252 = vunpack.c.l.b16 %v2964
        %v3253 = vunpack.c.l.b16 %v2965
        %v3254 = vunpack.c.l.b16 %v2966
        %v3255 = vunpack.c.l.b16 %v2967
        %v3256 = vunpack.c.l.b16 %v2968
        %v3257 = vunpack.c.l.b16 %v2969
        %v3258 = vunpack.c.l.b16 %v2970
        %v3259 = vunpack.c.l.b16 %v2971
        %v3260 = vunpack.c.l.b16 %v2972
        %v3261 = vunpack.c.l.b16 %v2973
        %v3262 = vunpack.c.l.b16 %v2974
        %v3263 = vunpack.c.l.b16 %v2975
        %v3264 = vpack.c.b16 %v3121, %v3120
        %v3265 = vpack.c.b16 %v3123, %v3122
        %v3266 = vpack.c.b16 %v3125, %v3124
        %v3267 = vpack.c.b16 %v3127, %v3126
        %v3268 = vpack.c.b16 %v3129, %v3128
        %v3269 = vpack.c.b16 %v3131, %v3130
        %v3270 = vpack.c.b16 %v3133, %v3132
        %v3271 = vpack.c.b16 %v3135, %v3134
        %v3272 = vpack.c.b16 %v3137, %v3136
        %v3273 = vpack.c.b16 %v3139, %v3138
        %v3274 = vpack.c.b16 %v3141, %v3140
        %v3275 = vpack.c.b16 %v3143, %v3142
        %v3276 = vpack.c.b16 %v3145, %v3144
        %v3277 = vpack.c.b16 %v3147, %v3146
        %v3278 = vpack.c.b16 %v3149, %v3148
        %v3279 = vpack.c.b16 %v3151, %v3150
        %v3280 = vpack.c.b16 %v3153, %v3152
        %v3281 = vpack.c.b16 %v3155, %v3154
        %v3282 = vpack.c.b16 %v3157, %v3156
        %v3283 = vpack.c.b16 %v3159, %v3158
        %v3284 = vpack.c.b16 %v3161, %v3160
        %v3285 = vpack.c.b16 %v3163, %v3162
        %v3286 = vpack.c.b16 %v3165, %v3164
        %v3287 = vpack.c.b16 %v3167, %v3166
        %v3288 = vpack.c.b16 %v3169, %v3168
        %v3289 = vpack.c.b16 %v3171, %v3170
        %v3290 = vpack.c.b16 %v3173, %v3172
        %v3291 = vpack.c.b16 %v3175, %v3174
        %v3292 = vpack.c.b16 %v3177, %v3176
        %v3293 = vpack.c.b16 %v3179, %v3178
        %v3294 = vpack.c.b16 %v3181, %v3180
        %v3295 = vpack.c.b16 %v3183, %v3182
        %v3296 = vpack.c.b16 %v3185, %v3184
        %v3297 = vpack.c.b16 %v3187, %v3186
        %v3298 = vpack.c.b16 %v3189, %v3188
        %v3299 = vpack.c.b16 %v3191, %v3190
        %v3300 = vpack.c.b16 %v3193, %v3192
        %v3301 = vpack.c.b16 %v3195, %v3194
        %v3302 = vpack.c.b16 %v3197, %v3196
        %v3303 = vpack.c.b16 %v3199, %v3198
        %v3304 = vpack.c.b16 %v3201, %v3200
        %v3305 = vpack.c.b16 %v3203, %v3202
        %v3306 = vpack.c.b16 %v3205, %v3204
        %v3307 = vpack.c.b16 %v3207, %v3206
        %v3308 = vpack.c.b16 %v3209, %v3208
        %v3309 = vpack.c.b16 %v3211, %v3210
        %v3310 = vpack.c.b16 %v3213, %v3212
        %v3311 = vpack.c.b16 %v3215, %v3214
        %v3312 = vpack.c.b16 %v3217, %v3216
        %v3313 = vpack.c.b16 %v3219, %v3218
        %v3314 = vpack.c.b16 %v3221, %v3220
        %v3315 = vpack.c.b16 %v3223, %v3222
        %v3316 = vpack.c.b16 %v3225, %v3224
        %v3317 = vpack.c.b16 %v3227, %v3226
        %v3318 = vpack.c.b16 %v3229, %v3228
        %v3319 = vpack.c.b16 %v3231, %v3230
        %v3320 = vpack.c.b16 %v3233, %v3232
        %v3321 = vpack.c.b16 %v3235, %v3234
        %v3322 = vpack.c.b16 %v3237, %v3236
        %v3323 = vpack.c.b16 %v3239, %v3238
        %v3324 = vpack.c.b16 %v3241, %v3240
        %v3325 = vpack.c.b16 %v3243, %v3242
        %v3326 = vpack.c.b16 %v3245, %v3244
        %v3327 = vpack.c.b16 %v3247, %v3246
        %v3328 = vpack.c.b16 %v3249, %v3248
        %v3329 = vpack.c.b16 %v3251, %v3250
        %v3330 = vpack.c.b16 %v3253, %v3252
        %v3331 = vpack.c.b16 %v3255, %v3254
        %v3332 = vpack.c.b16 %v3257, %v3256
        %v3333 = vpack.c.b16 %v3259, %v3258
        %v3334 = vpack.c.b16 %v3261, %v3260
        %v3335 = vpack.c.b16 %v3263, %v3262
        %3408 = vmatprep.subr.bf16.mxu0 0
        %3409 = vmatpush1.bf16.msra.mxu0 %v3264
        %3410 = vmatprep.subr.bf16.mxu0 0
        %3411 = vmatpush1.bf16.msra.mxu0 %v3265
        %3412 = vmatprep.subr.bf16.mxu0 0
        %3413 = vmatpush1.bf16.msra.mxu0 %v3266
        %3414 = vmatprep.subr.bf16.mxu0 0
        %3415 = vmatpush1.bf16.msra.mxu0 %v3267
        %3416 = vmatprep.subr.bf16.mxu0 0
        %3417 = vmatpush1.bf16.msra.mxu0 %v3268
        %3418 = vmatprep.subr.bf16.mxu0 0
        %3419 = vmatpush1.bf16.msra.mxu0 %v3269
        %3420 = vmatprep.subr.bf16.mxu0 0
        %3421 = vmatpush1.bf16.msra.mxu0 %v3270
        %3422 = vmatprep.subr.bf16.mxu0 0
        %3423 = vmatpush1.bf16.msra.mxu0 %v3271
        %3424 = vmatprep.subr.bf16.mxu0 0
        %3425 = vmatpush1.bf16.msra.mxu0 %v3272
        %3426 = vmatprep.subr.bf16.mxu0 0
        %3427 = vmatpush1.bf16.msra.mxu0 %v3273
        %3428 = vmatprep.subr.bf16.mxu0 0
        %3429 = vmatpush1.bf16.msra.mxu0 %v3274
        %3430 = vmatprep.subr.bf16.mxu0 0
        %3431 = vmatpush1.bf16.msra.mxu0 %v3275
        %3432 = vmatprep.subr.bf16.mxu0 0
        %3433 = vmatpush1.bf16.msra.mxu0 %v3276
        %3434 = vmatprep.subr.bf16.mxu0 0
        %3435 = vmatpush1.bf16.msra.mxu0 %v3277
        %3436 = vmatprep.subr.bf16.mxu0 0
        %3437 = vmatpush1.bf16.msra.mxu0 %v3278
        %3438 = vmatprep.subr.bf16.mxu0 0
        %3439 = vmatpush1.bf16.msra.mxu0 %v3279
        %3440 = vmatprep.mubr.bf16.mxu0 %v2686
        %3441 = vmatmul.mubr.bf16.gmra.mrb[0].mxu0 %v2685
        %v3442 = vpop.f32.mrb[0].mxu0
        %v3443 = vadd.f32 0.0, %v3442
        %v3444 = vpop.f32.mrb[0].mxu0
        %v3445 = vpop.f32.mrb[0].mxu0
        %v3446 = vadd.f32 0.0, %v3445
        %v3447 = vpop.f32.mrb[0].mxu0
        %3448 = vmatprep.mubr.bf16.mxu0 %v2695
        %3449 = vmatmul.mubr.bf16.gmra.mrb[0].mxu0 %v2694
        %v3450 = vpop.f32.mrb[0].mxu0
        %v3451 = vadd.f32 0.0, %v3450
        %v3452 = vpop.f32.mrb[0].mxu0
        %v3453 = vpop.f32.mrb[0].mxu0
        %v3454 = vadd.f32 0.0, %v3453
        %v3455 = vpop.f32.mrb[0].mxu0
        %3456 = vmatprep.mubr.bf16.mxu0 %v2704
        %3457 = vmatmul.mubr.bf16.gmra.mrb[0].mxu0 %v2703
        %v3458 = vpop.f32.mrb[0].mxu0
        %v3459 = vadd.f32 0.0, %v3458
        %v3460 = vpop.f32.mrb[0].mxu0
        %v3461 = vpop.f32.mrb[0].mxu0
        %v3462 = vadd.f32 0.0, %v3461
        %v3463 = vpop.f32.mrb[0].mxu0
        %3464 = vmatprep.mubr.bf16.mxu0 %v2713
        %3465 = vmatmul.mubr.bf16.gmra.mrb[0].mxu0 %v2712
        %v3466 = vpop.f32.mrb[0].mxu0
        %v3467 = vadd.f32 0.0, %v3466
        %v3468 = vpop.f32.mrb[0].mxu0
        %v3469 = vpop.f32.mrb[0].mxu0
        %v3470 = vadd.f32 0.0, %v3469
        %v3471 = vpop.f32.mrb[0].mxu0
        %3472 = vmatprep.mubr.bf16.mxu0 %v2722
        %3473 = vmatmul.mubr.bf16.gmra.mrb[0].mxu0 %v2721
        %v3474 = vpop.f32.mrb[0].mxu0
        %v3475 = vadd.f32 0.0, %v3474
        %v3476 = vpop.f32.mrb[0].mxu0
        %v3477 = vpop.f32.mrb[0].mxu0
        %v3478 = vadd.f32 0.0, %v3477
        %v3479 = vpop.f32.mrb[0].mxu0
        %3480 = vmatprep.mubr.bf16.mxu0 %v2731
        %3481 = vmatmul.mubr.bf16.gmra.mrb[0].mxu0 %v2730
        %v3482 = vpop.f32.mrb[0].mxu0
        %v3483 = vadd.f32 0.0, %v3482
        %v3484 = vpop.f32.mrb[0].mxu0
        %v3485 = vpop.f32.mrb[0].mxu0
        %v3486 = vadd.f32 0.0, %v3485
        %v3487 = vpop.f32.mrb[0].mxu0
        %3488 = vmatprep.mubr.bf16.mxu0 %v2740
        %3489 = vmatmul.mubr.bf16.gmra.mrb[0].mxu0 %v2739
        %v3490 = vpop.f32.mrb[0].mxu0
        %v3491 = vadd.f32 0.0, %v3490
        %v3492 = vpop.f32.mrb[0].mxu0
        %v3493 = vpop.f32.mrb[0].mxu0
        %v3494 = vadd.f32 0.0, %v3493
        %v3495 = vpop.f32.mrb[0].mxu0
        %3496 = vmatprep.mubr.bf16.mxu0 %v2749
        %3497 = vmatmul.mubr.bf16.gmra.mrb[0].mxu0 %v2748
        %v3498 = vpop.f32.mrb[0].mxu0
        %v3499 = vadd.f32 0.0, %v3498
        %v3500 = vpop.f32.mrb[0].mxu0
        %v3501 = vpop.f32.mrb[0].mxu0
        %v3502 = vadd.f32 0.0, %v3501
        %v3503 = vpop.f32.mrb[0].mxu0
        %3504 = vmatprep.mubr.bf16.mxu0 %v2758
        %3505 = vmatmul.mubr.bf16.gmra.mrb[0].mxu0 %v2757
        %v3506 = vpop.f32.mrb[0].mxu0
        %v3507 = vadd.f32 0.0, %v3506
        %v3508 = vpop.f32.mrb[0].mxu0
        %v3509 = vpop.f32.mrb[0].mxu0
        %v3510 = vadd.f32 0.0, %v3509
        %v3511 = vpop.f32.mrb[0].mxu0
        %3512 = vmatprep.mubr.bf16.mxu0 %v2767
        %3513 = vmatmul.mubr.bf16.gmra.mrb[0].mxu0 %v2766
        %v3514 = vpop.f32.mrb[0].mxu0
        %v3515 = vadd.f32 0.0, %v3514
        %v3516 = vpop.f32.mrb[0].mxu0
        %v3517 = vpop.f32.mrb[0].mxu0
        %v3518 = vadd.f32 0.0, %v3517
        %v3519 = vpop.f32.mrb[0].mxu0
        %3520 = vmatprep.mubr.bf16.mxu0 %v2776
        %3521 = vmatmul.mubr.bf16.gmra.mrb[0].mxu0 %v2775
        %v3522 = vpop.f32.mrb[0].mxu0
        %v3523 = vadd.f32 0.0, %v3522
        %v3524 = vpop.f32.mrb[0].mxu0
        %v3525 = vpop.f32.mrb[0].mxu0
        %v3526 = vadd.f32 0.0, %v3525
        %v3527 = vpop.f32.mrb[0].mxu0
        %3528 = vmatprep.mubr.bf16.mxu0 %v2785
        %3529 = vmatmul.mubr.bf16.gmra.mrb[0].mxu0 %v2784
        %v3530 = vpop.f32.mrb[0].mxu0
        %v3531 = vadd.f32 0.0, %v3530
        %v3532 = vpop.f32.mrb[0].mxu0
        %v3533 = vpop.f32.mrb[0].mxu0
        %v3534 = vadd.f32 0.0, %v3533
        %v3535 = vpop.f32.mrb[0].mxu0
        %3536 = vmatprep.mubr.bf16.mxu0 %v2794
        %3537 = vmatmul.mubr.bf16.gmra.mrb[0].mxu0 %v2793
        %v3538 = vpop.f32.mrb[0].mxu0
        %v3539 = vadd.f32 0.0, %v3538
        %v3540 = vpop.f32.mrb[0].mxu0
        %v3541 = vpop.f32.mrb[0].mxu0
        %v3542 = vadd.f32 0.0, %v3541
        %v3543 = vpop.f32.mrb[0].mxu0
        %3544 = vmatprep.mubr.bf16.mxu0 %v2803
        %3545 = vmatmul.mubr.bf16.gmra.mrb[0].mxu0 %v2802
        %v3546 = vpop.f32.mrb[0].mxu0
        %v3547 = vadd.f32 0.0, %v3546
        %v3548 = vpop.f32.mrb[0].mxu0
        %v3549 = vpop.f32.mrb[0].mxu0
        %v3550 = vadd.f32 0.0, %v3549
        %v3551 = vpop.f32.mrb[0].mxu0
        %3552 = vmatprep.mubr.bf16.mxu0 %v2812
        %3553 = vmatmul.mubr.bf16.gmra.mrb[0].mxu0 %v2811
        %v3554 = vpop.f32.mrb[0].mxu0
        %v3555 = vadd.f32 0.0, %v3554
        %v3556 = vpop.f32.mrb[0].mxu0
        %v3557 = vpop.f32.mrb[0].mxu0
        %v3558 = vadd.f32 0.0, %v3557
        %v3559 = vpop.f32.mrb[0].mxu0
        %3560 = vmatprep.mubr.bf16.mxu0 %v2821
        %3561 = vmatmul.mubr.bf16.gmra.mrb[0].mxu0 %v2820
        %v3562 = vpop.f32.mrb[0].mxu0
        %v3563 = vadd.f32 0.0, %v3562
        %v3564 = vpop.f32.mrb[0].mxu0
        %v3565 = vpop.f32.mrb[0].mxu0
        %v3566 = vadd.f32 0.0, %v3565
        %v3567 = vpop.f32.mrb[0].mxu0
        %3568 = vdwg.mxu0
        %3569 = vmatprep.subr.bf16.mxu0 0
        %3570 = vmatpush1.bf16.msra.mxu0 %v3280
        %3571 = vmatprep.subr.bf16.mxu0 0
        %3572 = vmatpush1.bf16.msra.mxu0 %v3281
        %3573 = vmatprep.subr.bf16.mxu0 0
        %3574 = vmatpush1.bf16.msra.mxu0 %v3282
        %3575 = vmatprep.subr.bf16.mxu0 0
        %3576 = vmatpush1.bf16.msra.mxu0 %v3283
        %3577 = vmatprep.subr.bf16.mxu0 0
        %3578 = vmatpush1.bf16.msra.mxu0 %v3284
        %3579 = vmatprep.subr.bf16.mxu0 0
        %3580 = vmatpush1.bf16.msra.mxu0 %v3285
        %3581 = vmatprep.subr.bf16.mxu0 0
        %3582 = vmatpush1.bf16.msra.mxu0 %v3286
        %3583 = vmatprep.subr.bf16.mxu0 0
        %3584 = vmatpush1.bf16.msra.mxu0 %v3287
        %3585 = vmatprep.subr.bf16.mxu0 0
        %3586 = vmatpush1.bf16.msra.mxu0 %v3288
        %3587 = vmatprep.subr.bf16.mxu0 0
        %3588 = vmatpush1.bf16.msra.mxu0 %v3289
        %3589 = vmatprep.subr.bf16.mxu0 0
        %3590 = vmatpush1.bf16.msra.mxu0 %v3290
        %3591 = vmatprep.subr.bf16.mxu0 0
        %3592 = vmatpush1.bf16.msra.mxu0 %v3291
        %3593 = vmatprep.subr.bf16.mxu0 0
        %3594 = vmatpush1.bf16.msra.mxu0 %v3292
        %3595 = vmatprep.subr.bf16.mxu0 0
        %3596 = vmatpush1.bf16.msra.mxu0 %v3293
        %3597 = vmatprep.subr.bf16.mxu0 0
        %3598 = vmatpush1.bf16.msra.mxu0 %v3294
        %3599 = vmatprep.subr.bf16.mxu0 0
        %3600 = vmatpush1.bf16.msra.mxu0 %v3295
        %3601 = vmatprep.mubr.bf16.mxu0 %v2688
        %3602 = vmatmul.mubr.bf16.gmra.mrb[0].mxu0 %v2687
        %v3603 = vpop.f32.mrb[0].mxu0
        %v3604 = vadd.f32 %v3443, %v3603
        %v3605 = vpop.f32.mrb[0].mxu0
        %v3606 = vpop.f32.mrb[0].mxu0
        %v3607 = vadd.f32 %v3446, %v3606
        %v3608 = vpop.f32.mrb[0].mxu0
        %3609 = vmatprep.mubr.bf16.mxu0 %v2697
        %3610 = vmatmul.mubr.bf16.gmra.mrb[0].mxu0 %v2696
        %v3611 = vpop.f32.mrb[0].mxu0
        %v3612 = vadd.f32 %v3451, %v3611
        %v3613 = vpop.f32.mrb[0].mxu0
        %v3614 = vpop.f32.mrb[0].mxu0
        %v3615 = vadd.f32 %v3454, %v3614
        %v3616 = vpop.f32.mrb[0].mxu0
        %3617 = vmatprep.mubr.bf16.mxu0 %v2706
        %3618 = vmatmul.mubr.bf16.gmra.mrb[0].mxu0 %v2705
        %v3619 = vpop.f32.mrb[0].mxu0
        %v3620 = vadd.f32 %v3459, %v3619
        %v3621 = vpop.f32.mrb[0].mxu0
        %v3622 = vpop.f32.mrb[0].mxu0
        %v3623 = vadd.f32 %v3462, %v3622
        %v3624 = vpop.f32.mrb[0].mxu0
        %3625 = vmatprep.mubr.bf16.mxu0 %v2715
        %3626 = vmatmul.mubr.bf16.gmra.mrb[0].mxu0 %v2714
        %v3627 = vpop.f32.mrb[0].mxu0
        %v3628 = vadd.f32 %v3467, %v3627
        %v3629 = vpop.f32.mrb[0].mxu0
        %v3630 = vpop.f32.mrb[0].mxu0
        %v3631 = vadd.f32 %v3470, %v3630
        %v3632 = vpop.f32.mrb[0].mxu0
        %3633 = vmatprep.mubr.bf16.mxu0 %v2724
        %3634 = vmatmul.mubr.bf16.gmra.mrb[0].mxu0 %v2723
        %v3635 = vpop.f32.mrb[0].mxu0
        %v3636 = vadd.f32 %v3475, %v3635
        %v3637 = vpop.f32.mrb[0].mxu0
        %v3638 = vpop.f32.mrb[0].mxu0
        %v3639 = vadd.f32 %v3478, %v3638
        %v3640 = vpop.f32.mrb[0].mxu0
        %3641 = vmatprep.mubr.bf16.mxu0 %v2733
        %3642 = vmatmul.mubr.bf16.gmra.mrb[0].mxu0 %v2732
        %v3643 = vpop.f32.mrb[0].mxu0
        %v3644 = vadd.f32 %v3483, %v3643
        %v3645 = vpop.f32.mrb[0].mxu0
        %v3646 = vpop.f32.mrb[0].mxu0
        %v3647 = vadd.f32 %v3486, %v3646
        %v3648 = vpop.f32.mrb[0].mxu0
        %3649 = vmatprep.mubr.bf16.mxu0 %v2742
        %3650 = vmatmul.mubr.bf16.gmra.mrb[0].mxu0 %v2741
        %v3651 = vpop.f32.mrb[0].mxu0
        %v3652 = vadd.f32 %v3491, %v3651
        %v3653 = vpop.f32.mrb[0].mxu0
        %v3654 = vpop.f32.mrb[0].mxu0
        %v3655 = vadd.f32 %v3494, %v3654
        %v3656 = vpop.f32.mrb[0].mxu0
        %3657 = vmatprep.mubr.bf16.mxu0 %v2751
        %3658 = vmatmul.mubr.bf16.gmra.mrb[0].mxu0 %v2750
        %v3659 = vpop.f32.mrb[0].mxu0
        %v3660 = vadd.f32 %v3499, %v3659
        %v3661 = vpop.f32.mrb[0].mxu0
        %v3662 = vpop.f32.mrb[0].mxu0
        %v3663 = vadd.f32 %v3502, %v3662
        %v3664 = vpop.f32.mrb[0].mxu0
        %3665 = vmatprep.mubr.bf16.mxu0 %v2760
        %3666 = vmatmul.mubr.bf16.gmra.mrb[0].mxu0 %v2759
        %v3667 = vpop.f32.mrb[0].mxu0
        %v3668 = vadd.f32 %v3507, %v3667
        %v3669 = vpop.f32.mrb[0].mxu0
        %v3670 = vpop.f32.mrb[0].mxu0
        %v3671 = vadd.f32 %v3510, %v3670
        %v3672 = vpop.f32.mrb[0].mxu0
        %3673 = vmatprep.mubr.bf16.mxu0 %v2769
        %3674 = vmatmul.mubr.bf16.gmra.mrb[0].mxu0 %v2768
        %v3675 = vpop.f32.mrb[0].mxu0
        %v3676 = vadd.f32 %v3515, %v3675
        %v3677 = vpop.f32.mrb[0].mxu0
        %v3678 = vpop.f32.mrb[0].mxu0
        %v3679 = vadd.f32 %v3518, %v3678
        %v3680 = vpop.f32.mrb[0].mxu0
        %3681 = vmatprep.mubr.bf16.mxu0 %v2778
        %3682 = vmatmul.mubr.bf16.gmra.mrb[0].mxu0 %v2777
        %v3683 = vpop.f32.mrb[0].mxu0
        %v3684 = vadd.f32 %v3523, %v3683
        %v3685 = vpop.f32.mrb[0].mxu0
        %v3686 = vpop.f32.mrb[0].mxu0
        %v3687 = vadd.f32 %v3526, %v3686
        %v3688 = vpop.f32.mrb[0].mxu0
        %3689 = vmatprep.mubr.bf16.mxu0 %v2787
        %3690 = vmatmul.mubr.bf16.gmra.mrb[0].mxu0 %v2786
        %v3691 = vpop.f32.mrb[0].mxu0
        %v3692 = vadd.f32 %v3531, %v3691
        %v3693 = vpop.f32.mrb[0].mxu0
        %v3694 = vpop.f32.mrb[0].mxu0
        %v3695 = vadd.f32 %v3534, %v3694
        %v3696 = vpop.f32.mrb[0].mxu0
        %3697 = vmatprep.mubr.bf16.mxu0 %v2796
        %3698 = vmatmul.mubr.bf16.gmra.mrb[0].mxu0 %v2795
        %v3699 = vpop.f32.mrb[0].mxu0
        %v3700 = vadd.f32 %v3539, %v3699
        %v3701 = vpop.f32.mrb[0].mxu0
        %v3702 = vpop.f32.mrb[0].mxu0
        %v3703 = vadd.f32 %v3542, %v3702
        %v3704 = vpop.f32.mrb[0].mxu0
        %3705 = vmatprep.mubr.bf16.mxu0 %v2805
        %3706 = vmatmul.mubr.bf16.gmra.mrb[0].mxu0 %v2804
        %v3707 = vpop.f32.mrb[0].mxu0
        %v3708 = vadd.f32 %v3547, %v3707
        %v3709 = vpop.f32.mrb[0].mxu0
        %v3710 = vpop.f32.mrb[0].mxu0
        %v3711 = vadd.f32 %v3550, %v3710
        %v3712 = vpop.f32.mrb[0].mxu0
        %3713 = vmatprep.mubr.bf16.mxu0 %v2814
        %3714 = vmatmul.mubr.bf16.gmra.mrb[0].mxu0 %v2813
        %v3715 = vpop.f32.mrb[0].mxu0
        %v3716 = vadd.f32 %v3555, %v3715
        %v3717 = vpop.f32.mrb[0].mxu0
        %v3718 = vpop.f32.mrb[0].mxu0
        %v3719 = vadd.f32 %v3558, %v3718
        %v3720 = vpop.f32.mrb[0].mxu0
        %3721 = vmatprep.mubr.bf16.mxu0 %v2823
        %3722 = vmatmul.mubr.bf16.gmra.mrb[0].mxu0 %v2822
        %v3723 = vpop.f32.mrb[0].mxu0
        %v3724 = vadd.f32 %v3563, %v3723
        %v3725 = vpop.f32.mrb[0].mxu0
        %v3726 = vpop.f32.mrb[0].mxu0
        %v3727 = vadd.f32 %v3566, %v3726
        %v3728 = vpop.f32.mrb[0].mxu0
        %3729 = vdwg.mxu0
        %3730 = vmatprep.subr.bf16.mxu0 0
        %3731 = vmatpush1.bf16.msra.mxu0 %v3296
        %3732 = vmatprep.subr.bf16.mxu0 0
        %3733 = vmatpush1.bf16.msra.mxu0 %v3297
        %3734 = vmatprep.subr.bf16.mxu0 0
        %3735 = vmatpush1.bf16.msra.mxu0 %v3298
        %3736 = vmatprep.subr.bf16.mxu0 0
        %3737 = vmatpush1.bf16.msra.mxu0 %v3299
        %3738 = vmatprep.subr.bf16.mxu0 0
        %3739 = vmatpush1.bf16.msra.mxu0 %v3300
        %3740 = vmatprep.subr.bf16.mxu0 0
        %3741 = vmatpush1.bf16.msra.mxu0 %v3301
        %3742 = vmatprep.subr.bf16.mxu0 0
        %3743 = vmatpush1.bf16.msra.mxu0 %v3302
        %3744 = vmatprep.subr.bf16.mxu0 0
        %3745 = vmatpush1.bf16.msra.mxu0 %v3303
        %3746 = vmatprep.subr.bf16.mxu0 0
        %3747 = vmatpush1.bf16.msra.mxu0 %v3304
        %3748 = vmatprep.subr.bf16.mxu0 0
        %3749 = vmatpush1.bf16.msra.mxu0 %v3305
        %3750 = vmatprep.subr.bf16.mxu0 0
        %3751 = vmatpush1.bf16.msra.mxu0 %v3306
        %3752 = vmatprep.subr.bf16.mxu0 0
        %3753 = vmatpush1.bf16.msra.mxu0 %v3307
        %3754 = vmatprep.subr.bf16.mxu0 0
        %3755 = vmatpush1.bf16.msra.mxu0 %v3308
        %3756 = vmatprep.subr.bf16.mxu0 0
        %3757 = vmatpush1.bf16.msra.mxu0 %v3309
        %3758 = vmatprep.subr.bf16.mxu0 0
        %3759 = vmatpush1.bf16.msra.mxu0 %v3310
        %3760 = vmatprep.subr.bf16.mxu0 0
        %3761 = vmatpush1.bf16.msra.mxu0 %v3311
        %3762 = vmatprep.mubr.bf16.mxu0 %v2690
        %3763 = vmatmul.mubr.bf16.gmra.mrb[0].mxu0 %v2689
        %v3764 = vpop.f32.mrb[0].mxu0
        %v3765 = vadd.f32 %v3604, %v3764
        %v3766 = vpop.f32.mrb[0].mxu0
        %v3767 = vpop.f32.mrb[0].mxu0
        %v3768 = vadd.f32 %v3607, %v3767
        %v3769 = vpop.f32.mrb[0].mxu0
        %3770 = vmatprep.mubr.bf16.mxu0 %v2699
        %3771 = vmatmul.mubr.bf16.gmra.mrb[0].mxu0 %v2698
        %v3772 = vpop.f32.mrb[0].mxu0
        %v3773 = vadd.f32 %v3612, %v3772
        %v3774 = vpop.f32.mrb[0].mxu0
        %v3775 = vpop.f32.mrb[0].mxu0
        %v3776 = vadd.f32 %v3615, %v3775
        %v3777 = vpop.f32.mrb[0].mxu0
        %3778 = vmatprep.mubr.bf16.mxu0 %v2708
        %3779 = vmatmul.mubr.bf16.gmra.mrb[0].mxu0 %v2707
        %v3780 = vpop.f32.mrb[0].mxu0
        %v3781 = vadd.f32 %v3620, %v3780
        %v3782 = vpop.f32.mrb[0].mxu0
        %v3783 = vpop.f32.mrb[0].mxu0
        %v3784 = vadd.f32 %v3623, %v3783
        %v3785 = vpop.f32.mrb[0].mxu0
        %3786 = vmatprep.mubr.bf16.mxu0 %v2717
        %3787 = vmatmul.mubr.bf16.gmra.mrb[0].mxu0 %v2716
        %v3788 = vpop.f32.mrb[0].mxu0
        %v3789 = vadd.f32 %v3628, %v3788
        %v3790 = vpop.f32.mrb[0].mxu0
        %v3791 = vpop.f32.mrb[0].mxu0
        %v3792 = vadd.f32 %v3631, %v3791
        %v3793 = vpop.f32.mrb[0].mxu0
        %3794 = vmatprep.mubr.bf16.mxu0 %v2726
        %3795 = vmatmul.mubr.bf16.gmra.mrb[0].mxu0 %v2725
        %v3796 = vpop.f32.mrb[0].mxu0
        %v3797 = vadd.f32 %v3636, %v3796
        %v3798 = vpop.f32.mrb[0].mxu0
        %v3799 = vpop.f32.mrb[0].mxu0
        %v3800 = vadd.f32 %v3639, %v3799
        %v3801 = vpop.f32.mrb[0].mxu0
        %3802 = vmatprep.mubr.bf16.mxu0 %v2735
        %3803 = vmatmul.mubr.bf16.gmra.mrb[0].mxu0 %v2734
        %v3804 = vpop.f32.mrb[0].mxu0
        %v3805 = vadd.f32 %v3644, %v3804
        %v3806 = vpop.f32.mrb[0].mxu0
        %v3807 = vpop.f32.mrb[0].mxu0
        %v3808 = vadd.f32 %v3647, %v3807
        %v3809 = vpop.f32.mrb[0].mxu0
        %3810 = vmatprep.mubr.bf16.mxu0 %v2744
        %3811 = vmatmul.mubr.bf16.gmra.mrb[0].mxu0 %v2743
        %v3812 = vpop.f32.mrb[0].mxu0
        %v3813 = vadd.f32 %v3652, %v3812
        %v3814 = vpop.f32.mrb[0].mxu0
        %v3815 = vpop.f32.mrb[0].mxu0
        %v3816 = vadd.f32 %v3655, %v3815
        %v3817 = vpop.f32.mrb[0].mxu0
        %3818 = vmatprep.mubr.bf16.mxu0 %v2753
        %3819 = vmatmul.mubr.bf16.gmra.mrb[0].mxu0 %v2752
        %v3820 = vpop.f32.mrb[0].mxu0
        %v3821 = vadd.f32 %v3660, %v3820
        %v3822 = vpop.f32.mrb[0].mxu0
        %v3823 = vpop.f32.mrb[0].mxu0
        %v3824 = vadd.f32 %v3663, %v3823
        %v3825 = vpop.f32.mrb[0].mxu0
        %3826 = vmatprep.mubr.bf16.mxu0 %v2762
        %3827 = vmatmul.mubr.bf16.gmra.mrb[0].mxu0 %v2761
        %v3828 = vpop.f32.mrb[0].mxu0
        %v3829 = vadd.f32 %v3668, %v3828
        %v3830 = vpop.f32.mrb[0].mxu0
        %v3831 = vpop.f32.mrb[0].mxu0
        %v3832 = vadd.f32 %v3671, %v3831
        %v3833 = vpop.f32.mrb[0].mxu0
        %3834 = vmatprep.mubr.bf16.mxu0 %v2771
        %3835 = vmatmul.mubr.bf16.gmra.mrb[0].mxu0 %v2770
        %v3836 = vpop.f32.mrb[0].mxu0
        %v3837 = vadd.f32 %v3676, %v3836
        %v3838 = vpop.f32.mrb[0].mxu0
        %v3839 = vpop.f32.mrb[0].mxu0
        %v3840 = vadd.f32 %v3679, %v3839
        %v3841 = vpop.f32.mrb[0].mxu0
        %3842 = vmatprep.mubr.bf16.mxu0 %v2780
        %3843 = vmatmul.mubr.bf16.gmra.mrb[0].mxu0 %v2779
        %v3844 = vpop.f32.mrb[0].mxu0
        %v3845 = vadd.f32 %v3684, %v3844
        %v3846 = vpop.f32.mrb[0].mxu0
        %v3847 = vpop.f32.mrb[0].mxu0
        %v3848 = vadd.f32 %v3687, %v3847
        %v3849 = vpop.f32.mrb[0].mxu0
        %3850 = vmatprep.mubr.bf16.mxu0 %v2789
        %3851 = vmatmul.mubr.bf16.gmra.mrb[0].mxu0 %v2788
        %v3852 = vpop.f32.mrb[0].mxu0
        %v3853 = vadd.f32 %v3692, %v3852
        %v3854 = vpop.f32.mrb[0].mxu0
        %v3855 = vpop.f32.mrb[0].mxu0
        %v3856 = vadd.f32 %v3695, %v3855
        %v3857 = vpop.f32.mrb[0].mxu0
        %3858 = vmatprep.mubr.bf16.mxu0 %v2798
        %3859 = vmatmul.mubr.bf16.gmra.mrb[0].mxu0 %v2797
        %v3860 = vpop.f32.mrb[0].mxu0
        %v3861 = vadd.f32 %v3700, %v3860
        %v3862 = vpop.f32.mrb[0].mxu0
        %v3863 = vpop.f32.mrb[0].mxu0
        %v3864 = vadd.f32 %v3703, %v3863
        %v3865 = vpop.f32.mrb[0].mxu0
        %3866 = vmatprep.mubr.bf16.mxu0 %v2807
        %3867 = vmatmul.mubr.bf16.gmra.mrb[0].mxu0 %v2806
        %v3868 = vpop.f32.mrb[0].mxu0
        %v3869 = vadd.f32 %v3708, %v3868
        %v3870 = vpop.f32.mrb[0].mxu0
        %v3871 = vpop.f32.mrb[0].mxu0
        %v3872 = vadd.f32 %v3711, %v3871
        %v3873 = vpop.f32.mrb[0].mxu0
        %3874 = vmatprep.mubr.bf16.mxu0 %v2816
        %3875 = vmatmul.mubr.bf16.gmra.mrb[0].mxu0 %v2815
        %v3876 = vpop.f32.mrb[0].mxu0
        %v3877 = vadd.f32 %v3716, %v3876
        %v3878 = vpop.f32.mrb[0].mxu0
        %v3879 = vpop.f32.mrb[0].mxu0
        %v3880 = vadd.f32 %v3719, %v3879
        %v3881 = vpop.f32.mrb[0].mxu0
        %3882 = vmatprep.mubr.bf16.mxu0 %v2825
        %3883 = vmatmul.mubr.bf16.gmra.mrb[0].mxu0 %v2824
        %v3884 = vpop.f32.mrb[0].mxu0
        %v3885 = vadd.f32 %v3724, %v3884
        %v3886 = vpop.f32.mrb[0].mxu0
        %v3887 = vpop.f32.mrb[0].mxu0
        %v3888 = vadd.f32 %v3727, %v3887
        %v3889 = vpop.f32.mrb[0].mxu0
        %3890 = vdwg.mxu0
        %3891 = vmatprep.subr.bf16.mxu0 0
        %3892 = vmatpush1.bf16.msra.mxu0 %v3312
        %3893 = vmatprep.subr.bf16.mxu0 0
        %3894 = vmatpush1.bf16.msra.mxu0 %v3313
        %3895 = vmatprep.subr.bf16.mxu0 0
        %3896 = vmatpush1.bf16.msra.mxu0 %v3314
        %3897 = vmatprep.subr.bf16.mxu0 0
        %3898 = vmatpush1.bf16.msra.mxu0 %v3315
        %3899 = vmatprep.subr.bf16.mxu0 0
        %3900 = vmatpush1.bf16.msra.mxu0 %v3316
        %3901 = vmatprep.subr.bf16.mxu0 0
        %3902 = vmatpush1.bf16.msra.mxu0 %v3317
        %3903 = vmatprep.subr.bf16.mxu0 0
        %3904 = vmatpush1.bf16.msra.mxu0 %v3318
        %3905 = vmatprep.subr.bf16.mxu0 0
        %3906 = vmatpush1.bf16.msra.mxu0 %v3319
        %3907 = vmatprep.subr.bf16.mxu0 0
        %3908 = vmatpush1.bf16.msra.mxu0 %v3320
        %3909 = vmatprep.subr.bf16.mxu0 0
        %3910 = vmatpush1.bf16.msra.mxu0 %v3321
        %3911 = vmatprep.subr.bf16.mxu0 0
        %3912 = vmatpush1.bf16.msra.mxu0 %v3322
        %3913 = vmatprep.subr.bf16.mxu0 0
        %3914 = vmatpush1.bf16.msra.mxu0 %v3323
        %3915 = vmatprep.subr.bf16.mxu0 0
        %3916 = vmatpush1.bf16.msra.mxu0 %v3324
        %3917 = vmatprep.subr.bf16.mxu0 0
        %3918 = vmatpush1.bf16.msra.mxu0 %v3325
        %3919 = vmatprep.subr.bf16.mxu0 0
        %3920 = vmatpush1.bf16.msra.mxu0 %v3326
        %3921 = vmatprep.subr.bf16.mxu0 0
        %3922 = vmatpush1.bf16.msra.mxu0 %v3327
        %3923 = vmatprep.mubr.bf16.mxu0 %v2692
        %3924 = vmatmul.mubr.bf16.gmra.mrb[0].mxu0 %v2691
        %v3925 = vpop.f32.mrb[0].mxu0
        %v3926 = vadd.f32 %v3765, %v3925
        %v3927 = vpop.f32.mrb[0].mxu0
        %v3928 = vpop.f32.mrb[0].mxu0
        %v3929 = vadd.f32 %v3768, %v3928
        %v3930 = vpop.f32.mrb[0].mxu0
        %3931 = vmatprep.mubr.bf16.mxu0 %v2701
        %3932 = vmatmul.mubr.bf16.gmra.mrb[0].mxu0 %v2700
        %v3933 = vpop.f32.mrb[0].mxu0
        %v3934 = vadd.f32 %v3773, %v3933
        %v3935 = vpop.f32.mrb[0].mxu0
        %v3936 = vpop.f32.mrb[0].mxu0
        %v3937 = vadd.f32 %v3776, %v3936
        %v3938 = vpop.f32.mrb[0].mxu0
        %3939 = vmatprep.mubr.bf16.mxu0 %v2710
        %3940 = vmatmul.mubr.bf16.gmra.mrb[0].mxu0 %v2709
        %v3941 = vpop.f32.mrb[0].mxu0
        %v3942 = vadd.f32 %v3781, %v3941
        %v3943 = vpop.f32.mrb[0].mxu0
        %v3944 = vpop.f32.mrb[0].mxu0
        %v3945 = vadd.f32 %v3784, %v3944
        %v3946 = vpop.f32.mrb[0].mxu0
        %3947 = vmatprep.mubr.bf16.mxu0 %v2719
        %3948 = vmatmul.mubr.bf16.gmra.mrb[0].mxu0 %v2718
        %v3949 = vpop.f32.mrb[0].mxu0
        %v3950 = vadd.f32 %v3789, %v3949
        %v3951 = vpop.f32.mrb[0].mxu0
        %v3952 = vpop.f32.mrb[0].mxu0
        %v3953 = vadd.f32 %v3792, %v3952
        %v3954 = vpop.f32.mrb[0].mxu0
        %3955 = vmatprep.mubr.bf16.mxu0 %v2728
        %3956 = vmatmul.mubr.bf16.gmra.mrb[0].mxu0 %v2727
        %v3957 = vpop.f32.mrb[0].mxu0
        %v3958 = vadd.f32 %v3797, %v3957
        %v3959 = vpop.f32.mrb[0].mxu0
        %v3960 = vpop.f32.mrb[0].mxu0
        %v3961 = vadd.f32 %v3800, %v3960
        %v3962 = vpop.f32.mrb[0].mxu0
        %3963 = vmatprep.mubr.bf16.mxu0 %v2737
        %3964 = vmatmul.mubr.bf16.gmra.mrb[0].mxu0 %v2736
        %v3965 = vpop.f32.mrb[0].mxu0
        %v3966 = vadd.f32 %v3805, %v3965
        %v3967 = vpop.f32.mrb[0].mxu0
        %v3968 = vpop.f32.mrb[0].mxu0
        %v3969 = vadd.f32 %v3808, %v3968
        %v3970 = vpop.f32.mrb[0].mxu0
        %3971 = vmatprep.mubr.bf16.mxu0 %v2746
        %3972 = vmatmul.mubr.bf16.gmra.mrb[0].mxu0 %v2745
        %v3973 = vpop.f32.mrb[0].mxu0
        %v3974 = vadd.f32 %v3813, %v3973
        %v3975 = vpop.f32.mrb[0].mxu0
        %v3976 = vpop.f32.mrb[0].mxu0
        %v3977 = vadd.f32 %v3816, %v3976
        %v3978 = vpop.f32.mrb[0].mxu0
        %3979 = vmatprep.mubr.bf16.mxu0 %v2755
        %3980 = vmatmul.mubr.bf16.gmra.mrb[0].mxu0 %v2754
        %v3981 = vpop.f32.mrb[0].mxu0
        %v3982 = vadd.f32 %v3821, %v3981
        %v3983 = vpop.f32.mrb[0].mxu0
        %v3984 = vpop.f32.mrb[0].mxu0
        %v3985 = vadd.f32 %v3824, %v3984
        %v3986 = vpop.f32.mrb[0].mxu0
        %3987 = vmatprep.mubr.bf16.mxu0 %v2764
        %3988 = vmatmul.mubr.bf16.gmra.mrb[0].mxu0 %v2763
        %v3989 = vpop.f32.mrb[0].mxu0
        %v3990 = vadd.f32 %v3829, %v3989
        %v3991 = vpop.f32.mrb[0].mxu0
        %v3992 = vpop.f32.mrb[0].mxu0
        %v3993 = vadd.f32 %v3832, %v3992
        %v3994 = vpop.f32.mrb[0].mxu0
        %3995 = vmatprep.mubr.bf16.mxu0 %v2773
        %3996 = vmatmul.mubr.bf16.gmra.mrb[0].mxu0 %v2772
        %v3997 = vpop.f32.mrb[0].mxu0
        %v3998 = vadd.f32 %v3837, %v3997
        %v3999 = vpop.f32.mrb[0].mxu0
        %v4000 = vpop.f32.mrb[0].mxu0
        %v4001 = vadd.f32 %v3840, %v4000
        %v4002 = vpop.f32.mrb[0].mxu0
        %4003 = vmatprep.mubr.bf16.mxu0 %v2782
        %4004 = vmatmul.mubr.bf16.gmra.mrb[0].mxu0 %v2781
        %v4005 = vpop.f32.mrb[0].mxu0
        %v4006 = vadd.f32 %v3845, %v4005
        %v4007 = vpop.f32.mrb[0].mxu0
        %v4008 = vpop.f32.mrb[0].mxu0
        %v4009 = vadd.f32 %v3848, %v4008
        %v4010 = vpop.f32.mrb[0].mxu0
        %4011 = vmatprep.mubr.bf16.mxu0 %v2791
        %4012 = vmatmul.mubr.bf16.gmra.mrb[0].mxu0 %v2790
        %v4013 = vpop.f32.mrb[0].mxu0
        %v4014 = vadd.f32 %v3853, %v4013
        %v4015 = vpop.f32.mrb[0].mxu0
        %v4016 = vpop.f32.mrb[0].mxu0
        %v4017 = vadd.f32 %v3856, %v4016
        %v4018 = vpop.f32.mrb[0].mxu0
        %4019 = vmatprep.mubr.bf16.mxu0 %v2800
        %4020 = vmatmul.mubr.bf16.gmra.mrb[0].mxu0 %v2799
        %v4021 = vpop.f32.mrb[0].mxu0
        %v4022 = vadd.f32 %v3861, %v4021
        %v4023 = vpop.f32.mrb[0].mxu0
        %v4024 = vpop.f32.mrb[0].mxu0
        %v4025 = vadd.f32 %v3864, %v4024
        %v4026 = vpop.f32.mrb[0].mxu0
        %4027 = vmatprep.mubr.bf16.mxu0 %v2809
        %4028 = vmatmul.mubr.bf16.gmra.mrb[0].mxu0 %v2808
        %v4029 = vpop.f32.mrb[0].mxu0
        %v4030 = vadd.f32 %v3869, %v4029
        %v4031 = vpop.f32.mrb[0].mxu0
        %v4032 = vpop.f32.mrb[0].mxu0
        %v4033 = vadd.f32 %v3872, %v4032
        %v4034 = vpop.f32.mrb[0].mxu0
        %4035 = vmatprep.mubr.bf16.mxu0 %v2818
        %4036 = vmatmul.mubr.bf16.gmra.mrb[0].mxu0 %v2817
        %v4037 = vpop.f32.mrb[0].mxu0
        %v4038 = vadd.f32 %v3877, %v4037
        %v4039 = vpop.f32.mrb[0].mxu0
        %v4040 = vpop.f32.mrb[0].mxu0
        %v4041 = vadd.f32 %v3880, %v4040
        %v4042 = vpop.f32.mrb[0].mxu0
        %4043 = vmatprep.mubr.bf16.mxu0 %v2827
        %4044 = vmatmul.mubr.bf16.gmra.mrb[0].mxu0 %v2826
        %v4045 = vpop.f32.mrb[0].mxu0
        %v4046 = vadd.f32 %v3885, %v4045
        %v4047 = vpop.f32.mrb[0].mxu0
        %v4048 = vpop.f32.mrb[0].mxu0
        %v4049 = vadd.f32 %v3888, %v4048
        %v4050 = vpop.f32.mrb[0].mxu0
        %4051 = vdwg.mxu0
        %4052 = vmatprep.subr.bf16.mxu0 0
        %4053 = vmatpush1.bf16.msra.mxu0 %v3328
        %4054 = vmatprep.subr.bf16.mxu0 0
        %4055 = vmatpush1.bf16.msra.mxu0 %v3329
        %4056 = vmatprep.subr.bf16.mxu0 0
        %4057 = vmatpush1.bf16.msra.mxu0 %v3330
        %4058 = vmatprep.subr.bf16.mxu0 0
        %4059 = vmatpush1.bf16.msra.mxu0 %v3331
        %4060 = vmatprep.subr.bf16.mxu0 0
        %4061 = vmatpush1.bf16.msra.mxu0 %v3332
        %4062 = vmatprep.subr.bf16.mxu0 0
        %4063 = vmatpush1.bf16.msra.mxu0 %v3333
        %4064 = vmatprep.subr.bf16.mxu0 0
        %4065 = vmatpush1.bf16.msra.mxu0 %v3334
        %4066 = vmatprep.subr.bf16.mxu0 0
        %4067 = vmatpush1.bf16.msra.mxu0 %v3335
        %4068 = vmatprep.subr.bf16.mxu0 0
        %4069 = vmatpush1.bf16.msra.mxu0 0
        %4070 = vmatprep.subr.bf16.mxu0 0
        %4071 = vmatpush1.bf16.msra.mxu0 0
        %4072 = vmatprep.subr.bf16.mxu0 0
        %4073 = vmatpush1.bf16.msra.mxu0 0
        %4074 = vmatprep.subr.bf16.mxu0 0
        %4075 = vmatpush1.bf16.msra.mxu0 0
        %4076 = vmatprep.subr.bf16.mxu0 0
        %4077 = vmatpush1.bf16.msra.mxu0 0
        %4078 = vmatprep.subr.bf16.mxu0 0
        %4079 = vmatpush1.bf16.msra.mxu0 0
        %4080 = vmatprep.subr.bf16.mxu0 0
        %4081 = vmatpush1.bf16.msra.mxu0 0
        %4082 = vmatprep.subr.bf16.mxu0 0
        %4083 = vmatpush1.bf16.msra.mxu0 0
        %4084 = vmatprep.mubr.bf16.mxu0 0
        %4085 = vmatmul.mubr.bf16.gmra.mrb[0].mxu0 %v2693
        %v4086 = vpop.f32.mrb[0].mxu0
        %v4087 = vadd.f32 %v3926, %v4086
        %v4088 = vpop.f32.mrb[0].mxu0
        %v4089 = vpop.f32.mrb[0].mxu0
        %v4090 = vadd.f32 %v3929, %v4089
        %v4091 = vpop.f32.mrb[0].mxu0
        %4092 = vmatprep.mubr.bf16.mxu0 0
        %4093 = vmatmul.mubr.bf16.gmra.mrb[0].mxu0 %v2702
        %v4094 = vpop.f32.mrb[0].mxu0
        %v4095 = vadd.f32 %v3934, %v4094
        %v4096 = vpop.f32.mrb[0].mxu0
        %v4097 = vpop.f32.mrb[0].mxu0
        %v4098 = vadd.f32 %v3937, %v4097
        %v4099 = vpop.f32.mrb[0].mxu0
        %4100 = vmatprep.mubr.bf16.mxu0 0
        %4101 = vmatmul.mubr.bf16.gmra.mrb[0].mxu0 %v2711
        %v4102 = vpop.f32.mrb[0].mxu0
        %v4103 = vadd.f32 %v3942, %v4102
        %v4104 = vpop.f32.mrb[0].mxu0
        %v4105 = vpop.f32.mrb[0].mxu0
        %v4106 = vadd.f32 %v3945, %v4105
        %v4107 = vpop.f32.mrb[0].mxu0
        %4108 = vmatprep.mubr.bf16.mxu0 0
        %4109 = vmatmul.mubr.bf16.gmra.mrb[0].mxu0 %v2720
        %v4110 = vpop.f32.mrb[0].mxu0
        %v4111 = vadd.f32 %v3950, %v4110
        %v4112 = vpop.f32.mrb[0].mxu0
        %v4113 = vpop.f32.mrb[0].mxu0
        %v4114 = vadd.f32 %v3953, %v4113
        %v4115 = vpop.f32.mrb[0].mxu0
        %4116 = vmatprep.mubr.bf16.mxu0 0
        %4117 = vmatmul.mubr.bf16.gmra.mrb[0].mxu0 %v2729
        %v4118 = vpop.f32.mrb[0].mxu0
        %v4119 = vadd.f32 %v3958, %v4118
        %v4120 = vpop.f32.mrb[0].mxu0
        %v4121 = vpop.f32.mrb[0].mxu0
        %v4122 = vadd.f32 %v3961, %v4121
        %v4123 = vpop.f32.mrb[0].mxu0
        %4124 = vmatprep.mubr.bf16.mxu0 0
        %4125 = vmatmul.mubr.bf16.gmra.mrb[0].mxu0 %v2738
        %v4126 = vpop.f32.mrb[0].mxu0
        %v4127 = vadd.f32 %v3966, %v4126
        %v4128 = vpop.f32.mrb[0].mxu0
        %v4129 = vpop.f32.mrb[0].mxu0
        %v4130 = vadd.f32 %v3969, %v4129
        %v4131 = vpop.f32.mrb[0].mxu0
        %4132 = vmatprep.mubr.bf16.mxu0 0
        %4133 = vmatmul.mubr.bf16.gmra.mrb[0].mxu0 %v2747
        %v4134 = vpop.f32.mrb[0].mxu0
        %v4135 = vadd.f32 %v3974, %v4134
        %v4136 = vpop.f32.mrb[0].mxu0
        %v4137 = vpop.f32.mrb[0].mxu0
        %v4138 = vadd.f32 %v3977, %v4137
        %v4139 = vpop.f32.mrb[0].mxu0
        %4140 = vmatprep.mubr.bf16.mxu0 0
        %4141 = vmatmul.mubr.bf16.gmra.mrb[0].mxu0 %v2756
        %v4142 = vpop.f32.mrb[0].mxu0
        %v4143 = vadd.f32 %v3982, %v4142
        %v4144 = vpop.f32.mrb[0].mxu0
        %v4145 = vpop.f32.mrb[0].mxu0
        %v4146 = vadd.f32 %v3985, %v4145
        %v4147 = vpop.f32.mrb[0].mxu0
        %4148 = vmatprep.mubr.bf16.mxu0 0
        %4149 = vmatmul.mubr.bf16.gmra.mrb[0].mxu0 %v2765
        %v4150 = vpop.f32.mrb[0].mxu0
        %v4151 = vadd.f32 %v3990, %v4150
        %v4152 = vpop.f32.mrb[0].mxu0
        %v4153 = vpop.f32.mrb[0].mxu0
        %v4154 = vadd.f32 %v3993, %v4153
        %v4155 = vpop.f32.mrb[0].mxu0
        %4156 = vmatprep.mubr.bf16.mxu0 0
        %4157 = vmatmul.mubr.bf16.gmra.mrb[0].mxu0 %v2774
        %v4158 = vpop.f32.mrb[0].mxu0
        %v4159 = vadd.f32 %v3998, %v4158
        %v4160 = vpop.f32.mrb[0].mxu0
        %v4161 = vpop.f32.mrb[0].mxu0
        %v4162 = vadd.f32 %v4001, %v4161
        %v4163 = vpop.f32.mrb[0].mxu0
        %4164 = vmatprep.mubr.bf16.mxu0 0
        %4165 = vmatmul.mubr.bf16.gmra.mrb[0].mxu0 %v2783
        %v4166 = vpop.f32.mrb[0].mxu0
        %v4167 = vadd.f32 %v4006, %v4166
        %v4168 = vpop.f32.mrb[0].mxu0
        %v4169 = vpop.f32.mrb[0].mxu0
        %v4170 = vadd.f32 %v4009, %v4169
        %v4171 = vpop.f32.mrb[0].mxu0
        %4172 = vmatprep.mubr.bf16.mxu0 0
        %4173 = vmatmul.mubr.bf16.gmra.mrb[0].mxu0 %v2792
        %v4174 = vpop.f32.mrb[0].mxu0
        %v4175 = vadd.f32 %v4014, %v4174
        %v4176 = vpop.f32.mrb[0].mxu0
        %v4177 = vpop.f32.mrb[0].mxu0
        %v4178 = vadd.f32 %v4017, %v4177
        %v4179 = vpop.f32.mrb[0].mxu0
        %4180 = vmatprep.mubr.bf16.mxu0 0
        %4181 = vmatmul.mubr.bf16.gmra.mrb[0].mxu0 %v2801
        %v4182 = vpop.f32.mrb[0].mxu0
        %v4183 = vadd.f32 %v4022, %v4182
        %v4184 = vpop.f32.mrb[0].mxu0
        %v4185 = vpop.f32.mrb[0].mxu0
        %v4186 = vadd.f32 %v4025, %v4185
        %v4187 = vpop.f32.mrb[0].mxu0
        %4188 = vmatprep.mubr.bf16.mxu0 0
        %4189 = vmatmul.mubr.bf16.gmra.mrb[0].mxu0 %v2810
        %v4190 = vpop.f32.mrb[0].mxu0
        %v4191 = vadd.f32 %v4030, %v4190
        %v4192 = vpop.f32.mrb[0].mxu0
        %v4193 = vpop.f32.mrb[0].mxu0
        %v4194 = vadd.f32 %v4033, %v4193
        %v4195 = vpop.f32.mrb[0].mxu0
        %4196 = vmatprep.mubr.bf16.mxu0 0
        %4197 = vmatmul.mubr.bf16.gmra.mrb[0].mxu0 %v2819
        %v4198 = vpop.f32.mrb[0].mxu0
        %v4199 = vadd.f32 %v4038, %v4198
        %v4200 = vpop.f32.mrb[0].mxu0
        %v4201 = vpop.f32.mrb[0].mxu0
        %v4202 = vadd.f32 %v4041, %v4201
        %v4203 = vpop.f32.mrb[0].mxu0
        %4204 = vmatprep.mubr.bf16.mxu0 0
        %4205 = vmatmul.mubr.bf16.gmra.mrb[0].mxu0 %v2828
        %v4206 = vpop.f32.mrb[0].mxu0
        %v4207 = vadd.f32 %v4046, %v4206
        %v4208 = vpop.f32.mrb[0].mxu0
        %v4209 = vpop.f32.mrb[0].mxu0
        %v4210 = vadd.f32 %v4049, %v4209
        %v4211 = vpop.f32.mrb[0].mxu0
        %4212 = vdwg.mxu0
        %4213 = vst [vmem:[%s159] sm:$0xff] %v4087
        %4214 = vst [vmem:[%s159 + $0x8] sm:$0xff] %v4090
        %4215 = vst [vmem:[%s159 + $0x10] sm:$0xff] %v4095
        %4216 = vst [vmem:[%s159 + $0x18] sm:$0xff] %v4098
        %4217 = vst [vmem:[%s159 + $0x20] sm:$0xff] %v4103
        %4218 = vst [vmem:[%s159 + $0x28] sm:$0xff] %v4106
        %4219 = vst [vmem:[%s159 + $0x30] sm:$0xff] %v4111
        %4220 = vst [vmem:[%s159 + $0x38] sm:$0xff] %v4114
        %4221 = vst [vmem:[%s159 + $0x40] sm:$0xff] %v4119
        %4222 = vst [vmem:[%s159 + $0x48] sm:$0xff] %v4122
        %4223 = vst [vmem:[%s159 + $0x50] sm:$0xff] %v4127
        %4224 = vst [vmem:[%s159 + $0x58] sm:$0xff] %v4130
        %4225 = vst [vmem:[%s159 + $0x60] sm:$0xff] %v4135
        %4226 = vst [vmem:[%s159 + $0x68] sm:$0xff] %v4138
        %4227 = vst [vmem:[%s159 + $0x70] sm:$0xff] %v4143
        %4228 = vst [vmem:[%s159 + $0x78] sm:$0xff] %v4146
        %4229 = vst [vmem:[%s159 + $0x80] sm:$0xff] %v4151
        %4230 = vst [vmem:[%s159 + $0x88] sm:$0xff] %v4154
        %4231 = vst [vmem:[%s159 + $0x90] sm:$0xff] %v4159
        %4232 = vst [vmem:[%s159 + $0x98] sm:$0xff] %v4162
        %4233 = vst [vmem:[%s159 + $0xa0] sm:$0xff] %v4167
        %4234 = vst [vmem:[%s159 + $0xa8] sm:$0xff] %v4170
        %4235 = vst [vmem:[%s159 + $0xb0] sm:$0xff] %v4175
        %4236 = vst [vmem:[%s159 + $0xb8] sm:$0xff] %v4178
        %4237 = vst [vmem:[%s159 + $0xc0] sm:$0xff] %v4183
        %4238 = vst [vmem:[%s159 + $0xc8] sm:$0xff] %v4186
        %4239 = vst [vmem:[%s159 + $0xd0] sm:$0xff] %v4191
        %4240 = vst [vmem:[%s159 + $0xd8] sm:$0xff] %v4194
        %4241 = vst [vmem:[%s159 + $0xe0] sm:$0xff] %v4199
        %4242 = vst [vmem:[%s159 + $0xe8] sm:$0xff] %v4202
        %4243 = vst [vmem:[%s159 + $0xf0] sm:$0xff] %v4207
        %4244 = vst [vmem:[%s159 + $0xf8] sm:$0xff] %v4210
        %s4245 = sand.u32 %s94, 1
        %s4246 = scalar_lea.sflag [#allocation4], %s4245
        %s4247 = sand.u32 %s94, 1
        %s4248 = smul.addr %s4247, 256
        %s4249 = scalar_lea.vmem [#allocation3], %s4248
        // Predicated region
        $region33: #{tpu_custom_call.1} parent=27 // pred_check
          %p4250 = pneg %p104
        $region34: #{tpu_custom_call.1} parent=27 // pred_check_branch
          %4252 = sbr.rel (%p4250) target = $region36
        $region35: #{tpu_custom_call.1} parent=27 // pred_region
          %s4253 = smul.u32 16, %s22
          %s4255 = ssub.s32 4096, 4096
          %4256 = vsyncadd %s4246, %s4255
          %s4257 = smul.addr %s4253, 2
          %s4258 = sadd.s32 %s23, %s4257
          %s4259 = smul.addr %s21, 32
          %s4260 = sadd.s32 %s4258, %s4259
          %s4261 = smul.addr %s4260, 128
          %s4262 = scalar_lea.hbm %s2, %s4261
          %s4263 = sshll.u32 %s4249, 4
          %s4264 = int_to_ptr.vmem [resolvable:$true] %s4263
          %4269 = dma.vmem_to_hbm [thread:$0]  %s4264, 4096, %s4262, %s4246, 128, 128, 8
        $region36: #{tpu_custom_call.1} parent=27 // pred_fallthru
          _
      $region28: #{tpu_custom_call.1} parent=5 // pred_fallthru
        _
      %p4270 = scmp.le.s32.totalorder 2, %s11
      // Predicated region
      $region37: #{tpu_custom_call.1} parent=5 // pred_check
        %p4271 = pneg %p4270
      $region38: #{tpu_custom_call.1} parent=5 // pred_check_branch
        %4273 = sbr.rel (%p4271) target = $region40
      $region39: #{tpu_custom_call.1} parent=5 // pred_region
        %s4274 = ssub.s32 %s11, 2
        // Predicated region
        $region41: #{tpu_custom_call.1} parent=39 // pred_check
          %p4275 = pneg %p110
        $region42: #{tpu_custom_call.1} parent=39 // pred_check_branch
          %4277 = sbr.rel (%p4275) target = $region44
        $region43: #{tpu_custom_call.1} parent=39 // pred_region
          %s4278 = sand.u32 %s95, 1
          %s4279 = scalar_lea.sflag [#allocation4], %s4278
          %s4280 = sand.u32 %s95, 1
          %s4281 = smul.addr %s4280, 256
          %s4282 = scalar_lea.vmem [#allocation3], %s4281
          %4283 = dma.done %s4279, 4096
        $region44: #{tpu_custom_call.1} parent=39 // pred_fallthru
          _
      $region40: #{tpu_custom_call.1} parent=5 // pred_fallthru
        _
    $region6: #{tpu_custom_call.1} parent=1 // loop_footer
      %s15 = sadd.s32 1, %s11
    $region7: #{tpu_custom_call.1} parent=1 // loop_footer_branch
      %10 = sbr.rel target = $region3
    $region8: #{tpu_custom_call.1} parent=1 // loop_exit
      _
    %4284 = vsyncpa [#allocation4], 1
    %s4285 = scalar_lea.sflag [#allocation4], 1
    %4286 = vsyncpa %s4285, 1

</llo_original>
